<compile_context>
chip_gen: v7x
topology: tpu7x:2x2x1
jax: 0.10.0
libtpu: 0.0.40
codegen_flags: <defaults>
</compile_context>

<pallas_src>
import functools

import jax
import jax.numpy as jnp
from jax.experimental import pallas as pl
from jax.experimental.pallas import tpu as pltpu

LN_EPS = 1e-5  # nn.LayerNorm default


def _dot_nt(a, b):
    """a @ b.T (contract last dims of both) with float32 MXU accumulation."""
    return jax.lax.dot_general(
        a, b, (((1,), (1,)), ((), ())), preferred_element_type=jnp.float32)


def _rel_shift_skew(bd, qlen):
    """Per-row circular left shift of bd (Q, R) by (qlen - 1 - i).

    Matches RelMultiHeadAttn._rel_shift exactly on every position with
    j - i <= klen - qlen (the region the causal attn_mask keeps); the
    circularly wrapped lanes only appear on masked positions.  Implemented
    with log2(qlen) static XLU rotations + vselects.
    """
    Q, R = bd.shape
    row = jax.lax.broadcasted_iota(jnp.int32, (Q, R), 0)
    left_shift = (qlen - 1) - row                      # per-row shift amount
    y = bd
    b = 1
    while b < qlen:
        rolled = pltpu.roll(y, R - b, axis=1)          # circular left shift by b
        y = jnp.where(jnp.bitwise_and(left_shift, b) != 0, rolled, y)
        b *= 2
    return y


def _rel_mha_kernel(w_ref, r_ref, mask_ref, wqkv_t_ref, wr_t_ref, wo_t_ref,
                    rw_bias_ref, rr_bias_ref, gamma_ref, beta_ref, o_ref,
                    *, n_head, d_head, scale):
    w = w_ref[0]                                       # (Q, D), this batch element
    Q, D = w.shape
    r = r_ref[...]                                     # (R, D)
    HD = n_head * d_head

    # --- projections (hoisted out of the per-head loop) ---
    w_heads = jnp.dot(w, wqkv_t_ref[...], preferred_element_type=jnp.float32)  # (Q, 3*HD)
    r_head_k = jnp.dot(r, wr_t_ref[...], preferred_element_type=jnp.float32)   # (R, HD)
    q_all = w_heads[:, :HD]
    k_all = w_heads[:, HD:2 * HD]
    v_all = w_heads[:, 2 * HD:]

    rw_q = q_all + rw_bias_ref[...]                    # q + u   (broadcast over rows)
    rr_q = q_all + rr_bias_ref[...]                    # q + v

    masked = mask_ref[...] != 0.0                      # (Q, K) bool, True => -inf
    neg_inf = jnp.float32(-jnp.inf)

    head_vecs = []
    for n in range(n_head):                            # static unroll over heads
        sl = slice(n * d_head, (n + 1) * d_head)
        ac = _dot_nt(rw_q[:, sl], k_all[:, sl])        # (Q, K) content term
        bd = _dot_nt(rr_q[:, sl], r_head_k[:, sl])     # (Q, R) position term
        bd = _rel_shift_skew(bd, Q)
        score = (ac + bd) * scale
        score = jnp.where(masked, neg_inf, score)
        m = jnp.max(score, axis=-1, keepdims=True)
        p = jnp.exp(score - m)
        prob = p / jnp.sum(p, axis=-1, keepdims=True)  # dropatt = identity (eval)
        head_vecs.append(
            jnp.dot(prob, v_all[:, sl], preferred_element_type=jnp.float32))
    attn_vec = jnp.concatenate(head_vecs, axis=1)      # (Q, HD)

    attn_out = jnp.dot(attn_vec, wo_t_ref[...],
                       preferred_element_type=jnp.float32)      # o_net, (Q, D)

    # residual + post-LayerNorm (drop = identity in eval mode)
    y = w + attn_out
    mean = jnp.mean(y, axis=-1, keepdims=True)
    var = jnp.mean((y - mean) ** 2, axis=-1, keepdims=True)
    o_ref[0] = ((y - mean) * jax.lax.rsqrt(var + LN_EPS)
                * gamma_ref[...] + beta_ref[...])


def rel_partial_learnable_mha(w, r, r_w_bias, r_r_bias, attn_mask,
                              wqkv, wr, wo, ln_gamma, ln_beta,
                              *, n_head, d_head):
    """RelPartialLearnableMultiHeadAttn.forward (eval, mems=None, pre_lnorm=False).

    w:         (qlen, bsz, d_model)
    r:         (rlen, d_model)      relative position embeddings, rlen == klen
    r_w_bias:  (n_head, d_head)     'u' bias
    r_r_bias:  (n_head, d_head)     'v' bias
    attn_mask: (qlen, klen) {0,1};  must mask at least j - i > klen - qlen
               (the standard causal mask) — equivalent to the module's 3-D
               mask broadcast over batch and head.
    wqkv: (3*n_head*d_head, d_model)  qkv_net.weight  (no bias)
    wr:   (n_head*d_head, d_model)    r_net.weight
    wo:   (d_model, n_head*d_head)    o_net.weight
    ln_gamma, ln_beta: (d_model,)     layer_norm affine
    """
    qlen, bsz, d_model = w.shape
    rlen = r.shape[0]
    klen = qlen                      # mems=None
    assert rlen == klen, "rlen must equal klen (mems=None path)"
    HD = n_head * d_head
    scale = 1.0 / (d_head ** 0.5)

    # batch-major, lane-dense blocks for the kernel
    w_bm = jnp.transpose(w, (1, 0, 2))                 # (bsz, qlen, d_model)

    flops = int(2 * bsz * qlen * d_model * 3 * HD          # qkv projection
                + 2 * bsz * rlen * d_model * HD             # r projection
                + 2 * bsz * n_head * qlen * klen * d_head * 3   # AC, BD, prob@V
                + 2 * bsz * qlen * HD * d_model)            # output projection
    transcendentals = int(bsz * n_head * qlen * klen + bsz * qlen)
    bytes_accessed = int(4 * (2 * bsz * qlen * d_model + rlen * d_model
                              + qlen * klen + 5 * d_model * HD))

    kernel = functools.partial(_rel_mha_kernel, n_head=n_head,
                               d_head=d_head, scale=scale)
    out = pl.pallas_call(
        kernel,
        out_shape=jax.ShapeDtypeStruct((bsz, qlen, d_model), jnp.float32),
        grid=(bsz,),
        in_specs=[
            pl.BlockSpec((1, qlen, d_model), lambda b: (b, 0, 0)),   # w
            pl.BlockSpec((rlen, d_model), lambda b: (0, 0)),         # r
            pl.BlockSpec((qlen, klen), lambda b: (0, 0)),            # attn_mask
            pl.BlockSpec((d_model, 3 * HD), lambda b: (0, 0)),       # Wqkv^T
            pl.BlockSpec((d_model, HD), lambda b: (0, 0)),           # Wr^T
            pl.BlockSpec((HD, d_model), lambda b: (0, 0)),           # Wo^T
            pl.BlockSpec((1, HD), lambda b: (0, 0)),                 # r_w_bias (u)
            pl.BlockSpec((1, HD), lambda b: (0, 0)),                 # r_r_bias (v)
            pl.BlockSpec((1, d_model), lambda b: (0, 0)),            # ln gamma
            pl.BlockSpec((1, d_model), lambda b: (0, 0)),            # ln beta
        ],
        out_specs=pl.BlockSpec((1, qlen, d_model), lambda b: (b, 0, 0)),
        compiler_params=pltpu.CompilerParams(
            dimension_semantics=("parallel",)),
        cost_estimate=pl.CostEstimate(flops=flops,
                                      transcendentals=transcendentals,
                                      bytes_accessed=bytes_accessed),
    )(w_bm, r, attn_mask.astype(jnp.float32),
      wqkv.T, wr.T, wo.T,
      r_w_bias.reshape(1, HD), r_r_bias.reshape(1, HD),
      ln_gamma.reshape(1, d_model), ln_beta.reshape(1, d_model))

    return jnp.transpose(out, (1, 0, 2))               # back to (qlen, bsz, d_model)


# ----------------------------- pure-JAX reference -----------------------------

def _rel_shift_exact(x):
    """Exact mirror of RelMultiHeadAttn._rel_shift for x: (qlen, rlen, bsz, n_head)."""
    q, r = x.shape[0], x.shape[1]
    zero_pad = jnp.zeros((q, 1) + x.shape[2:], x.dtype)
    x_padded = jnp.concatenate([zero_pad, x], axis=1)          # (q, r+1, ...)
    x_padded = x_padded.reshape((r + 1, q) + x.shape[2:])
    return x_padded[1:].reshape(x.shape)


def _reference(w, r, r_w_bias, r_r_bias, attn_mask, wqkv, wr, wo,
               ln_gamma, ln_beta, n_head, d_head):
    hi = jax.lax.Precision.HIGHEST
    qlen, bsz, _ = w.shape
    rlen = r.shape[0]
    scale = 1.0 / (d_head ** 0.5)
    w_heads = jnp.einsum('ibd,hd->ibh', w, wqkv, precision=hi)
    r_head_k = jnp.einsum('jd,hd->jh', r, wr, precision=hi)
    w_head_q, w_head_k, w_head_v = jnp.split(w_heads, 3, axis=-1)
    klen = w_head_k.shape[0]
    w_head_q = w_head_q.reshape(qlen, bsz, n_head, d_head)
    w_head_k = w_head_k.reshape(klen, bsz, n_head, d_head)
    w_head_v = w_head_v.reshape(klen, bsz, n_head, d_head)
    r_head_k = r_head_k.reshape(rlen, n_head, d_head)
    AC = jnp.einsum('ibnd,jbnd->ijbn', w_head_q + r_w_bias, w_head_k, precision=hi)
    BD = jnp.einsum('ibnd,jnd->ijbn', w_head_q + r_r_bias, r_head_k, precision=hi)
    BD = _rel_shift_exact(BD)
    attn_score = (AC + BD) * scale
    mask = (attn_mask != 0)[:, :, None, None]
    attn_score = jnp.where(mask, -jnp.inf, attn_score)
    attn_prob = jax.nn.softmax(attn_score, axis=1)
    attn_vec = jnp.einsum('ijbn,jbnd->ibnd', attn_prob, w_head_v, precision=hi)
    attn_vec = attn_vec.reshape(qlen, bsz, n_head * d_head)
    attn_out = jnp.einsum('ibh,dh->ibd', attn_vec, wo, precision=hi)
    y = w + attn_out
    mean = jnp.mean(y, axis=-1, keepdims=True)
    var = jnp.mean((y - mean) ** 2, axis=-1, keepdims=True)
    return (y - mean) / jnp.sqrt(var + LN_EPS) * ln_gamma + ln_beta


if __name__ == "__main__":
    qlen = 128                     # klen == rlen == qlen (mems=None)
    bsz = 2
    n_head = 2
    d_head = 64
    d_model = n_head * d_head      # 128 -> lane-dense everywhere

    key = jax.random.PRNGKey(0)
    ks = jax.random.split(key, 7)
    w = jax.random.normal(ks[0], (qlen, bsz, d_model), jnp.float32)
    r = jax.random.normal(ks[1], (qlen, d_model), jnp.float32)
    std = 0.05
    wqkv = std * jax.random.normal(ks[2], (3 * n_head * d_head, d_model), jnp.float32)
    wr = std * jax.random.normal(ks[3], (n_head * d_head, d_model), jnp.float32)
    wo = std * jax.random.normal(ks[4], (d_model, n_head * d_head), jnp.float32)
    r_w_bias = std * jax.random.normal(ks[5], (n_head, d_head), jnp.float32)
    r_r_bias = std * jax.random.normal(ks[6], (n_head, d_head), jnp.float32)
    ln_gamma = jnp.ones((d_model,), jnp.float32)
    ln_beta = jnp.zeros((d_model,), jnp.float32)
    # standard Transformer-XL causal mask: torch.triu(ones(qlen, klen), diagonal=1)
    attn_mask = jnp.triu(jnp.ones((qlen, qlen), jnp.float32), k=1)

    out = rel_partial_learnable_mha(
        w, r, r_w_bias, r_r_bias, attn_mask, wqkv, wr, wo, ln_gamma, ln_beta,
        n_head=n_head, d_head=d_head)
    out = jax.block_until_ready(out)

    ref = _reference(w, r, r_w_bias, r_r_bias, attn_mask, wqkv, wr, wo,
                     ln_gamma, ln_beta, n_head, d_head)
    assert out.shape == (qlen, bsz, d_model)
    max_err = float(jnp.max(jnp.abs(out - ref)))
    assert jnp.allclose(out, ref, atol=5e-3, rtol=5e-3), f"mismatch vs reference, max_err={max_err}"

    print("KERNEL_OK")
</pallas_src>

<mosaic_0001>
module attributes {stable_mosaic.version = 11 : i64} {
  func.func @_rel_mha_kernel(%arg0: i32, %arg1: memref<1x128x128xf32, #tpu.memory_space<vmem>>, %arg2: memref<128x128xf32, #tpu.memory_space<vmem>>, %arg3: memref<128x128xf32, #tpu.memory_space<vmem>>, %arg4: memref<128x384xf32, #tpu.memory_space<vmem>>, %arg5: memref<128x128xf32, #tpu.memory_space<vmem>>, %arg6: memref<128x128xf32, #tpu.memory_space<vmem>>, %arg7: memref<1x128xf32, #tpu.memory_space<vmem>>, %arg8: memref<1x128xf32, #tpu.memory_space<vmem>>, %arg9: memref<1x128xf32, #tpu.memory_space<vmem>>, %arg10: memref<1x128xf32, #tpu.memory_space<vmem>>, %arg11: memref<1x128x128xf32, #tpu.memory_space<vmem>>) attributes {dimension_semantics = [#tpu.dimension_semantics<parallel>], iteration_bounds = array<i64: 2>, scalar_prefetch = 0 : i64, scratch_operands = 0 : i64, tpu.core_type = #tpu.core_type<tc>, window_params = [{transform_indices = @transform_0, window_bounds = array<i64: 1, 128, 128>}, {pipeline_mode = #tpu.pipeline_mode<synchronous>, transform_indices = @transform_1, window_bounds = array<i64: 128, 128>}, {pipeline_mode = #tpu.pipeline_mode<synchronous>, transform_indices = @transform_2, window_bounds = array<i64: 128, 128>}, {pipeline_mode = #tpu.pipeline_mode<synchronous>, transform_indices = @transform_3, window_bounds = array<i64: 128, 384>}, {pipeline_mode = #tpu.pipeline_mode<synchronous>, transform_indices = @transform_4, window_bounds = array<i64: 128, 128>}, {pipeline_mode = #tpu.pipeline_mode<synchronous>, transform_indices = @transform_5, window_bounds = array<i64: 128, 128>}, {pipeline_mode = #tpu.pipeline_mode<synchronous>, transform_indices = @transform_6, window_bounds = array<i64: 1, 128>}, {pipeline_mode = #tpu.pipeline_mode<synchronous>, transform_indices = @transform_7, window_bounds = array<i64: 1, 128>}, {pipeline_mode = #tpu.pipeline_mode<synchronous>, transform_indices = @transform_8, window_bounds = array<i64: 1, 128>}, {pipeline_mode = #tpu.pipeline_mode<synchronous>, transform_indices = @transform_9, window_bounds = array<i64: 1, 128>}, {transform_indices = @transform_10, window_bounds = array<i64: 1, 128, 128>}]} {
    %c0 = arith.constant 0 : index
    %c0_0 = arith.constant 0 : index
    %c0_1 = arith.constant 0 : index
    %0 = vector.load %arg1[%c0, %c0_0, %c0_1] : memref<1x128x128xf32, #tpu.memory_space<vmem>>, vector<1x128x128xf32>
    %1 = vector.shape_cast %0 : vector<1x128x128xf32> to vector<128x128xf32>
    %c0_2 = arith.constant 0 : index
    %c0_3 = arith.constant 0 : index
    %2 = vector.load %arg2[%c0_2, %c0_3] : memref<128x128xf32, #tpu.memory_space<vmem>>, vector<128x128xf32>
    %c0_4 = arith.constant 0 : index
    %c0_5 = arith.constant 0 : index
    %3 = vector.load %arg4[%c0_4, %c0_5] : memref<128x384xf32, #tpu.memory_space<vmem>>, vector<128x384xf32>
    %cst = arith.constant dense<0.000000e+00> : vector<128x384xf32>
    %4 = tpu.matmul %1, %3, %cst {dimension_numbers = #tpu.dot_dimension_numbers<[1], [0], [0], [1], [0, 0, 1, 1], [], []>} : vector<128x128xf32>, vector<128x384xf32>, vector<128x384xf32> -> vector<128x384xf32>
    %c0_6 = arith.constant 0 : index
    %c0_7 = arith.constant 0 : index
    %5 = vector.load %arg5[%c0_6, %c0_7] : memref<128x128xf32, #tpu.memory_space<vmem>>, vector<128x128xf32>
    %cst_8 = arith.constant dense<0.000000e+00> : vector<128x128xf32>
    %6 = tpu.matmul %2, %5, %cst_8 {dimension_numbers = #tpu.dot_dimension_numbers<[1], [0], [0], [1], [0, 0, 1, 1], [], []>} : vector<128x128xf32>, vector<128x128xf32>, vector<128x128xf32> -> vector<128x128xf32>
    %7 = vector.extract_strided_slice %4 {offsets = [0, 0], sizes = [128, 128], strides = [1, 1]} : vector<128x384xf32> to vector<128x128xf32>
    %8 = vector.extract_strided_slice %4 {offsets = [0, 128], sizes = [128, 128], strides = [1, 1]} : vector<128x384xf32> to vector<128x128xf32>
    %9 = vector.extract_strided_slice %4 {offsets = [0, 256], sizes = [128, 128], strides = [1, 1]} : vector<128x384xf32> to vector<128x128xf32>
    %c0_9 = arith.constant 0 : index
    %c0_10 = arith.constant 0 : index
    %10 = vector.load %arg7[%c0_9, %c0_10] : memref<1x128xf32, #tpu.memory_space<vmem>>, vector<1x128xf32>
    %11 = vector.broadcast %10 : vector<1x128xf32> to vector<128x128xf32>
    %12 = arith.addf %7, %11 : vector<128x128xf32>
    %c0_11 = arith.constant 0 : index
    %c0_12 = arith.constant 0 : index
    %13 = vector.load %arg8[%c0_11, %c0_12] : memref<1x128xf32, #tpu.memory_space<vmem>>, vector<1x128xf32>
    %14 = vector.broadcast %13 : vector<1x128xf32> to vector<128x128xf32>
    %15 = arith.addf %7, %14 : vector<128x128xf32>
    %c0_13 = arith.constant 0 : index
    %c0_14 = arith.constant 0 : index
    %16 = vector.load %arg3[%c0_13, %c0_14] : memref<128x128xf32, #tpu.memory_space<vmem>>, vector<128x128xf32>
    %cst_15 = arith.constant 0.000000e+00 : f32
    %17 = vector.broadcast %cst_15 : f32 to vector<128x128xf32>
    %18 = arith.cmpf one, %16, %17 : vector<128x128xf32>
    %19 = vector.extract_strided_slice %12 {offsets = [0, 0], sizes = [128, 64], strides = [1, 1]} : vector<128x128xf32> to vector<128x64xf32>
    %20 = vector.extract_strided_slice %8 {offsets = [0, 0], sizes = [128, 64], strides = [1, 1]} : vector<128x128xf32> to vector<128x64xf32>
    %cst_16 = arith.constant dense<0.000000e+00> : vector<128x128xf32>
    %21 = tpu.matmul %19, %20, %cst_16 {dimension_numbers = #tpu.dot_dimension_numbers<[1], [1], [0], [0], [0, 0, 1, 0], [], []>} : vector<128x64xf32>, vector<128x64xf32>, vector<128x128xf32> -> vector<128x128xf32>
    %22 = vector.extract_strided_slice %15 {offsets = [0, 0], sizes = [128, 64], strides = [1, 1]} : vector<128x128xf32> to vector<128x64xf32>
    %23 = vector.extract_strided_slice %6 {offsets = [0, 0], sizes = [128, 64], strides = [1, 1]} : vector<128x128xf32> to vector<128x64xf32>
    %cst_17 = arith.constant dense<0.000000e+00> : vector<128x128xf32>
    %24 = tpu.matmul %22, %23, %cst_17 {dimension_numbers = #tpu.dot_dimension_numbers<[1], [1], [0], [0], [0, 0, 1, 0], [], []>} : vector<128x64xf32>, vector<128x64xf32>, vector<128x128xf32> -> vector<128x128xf32>
    %25 = tpu.iota {dimensions = array<i32: 0>} : vector<128x128xi32>
    %c127_i32 = arith.constant 127 : i32
    %26 = vector.broadcast %c127_i32 : i32 to vector<128x128xi32>
    %27 = arith.subi %26, %25 : vector<128x128xi32>
    %c127_i32_18 = arith.constant 127 : i32
    %28 = tpu.dynamic_rotate %24 by %c127_i32_18 dim 1 : vector<128x128xf32>, i32 -> vector<128x128xf32>
    %c1_i32 = arith.constant 1 : i32
    %29 = vector.broadcast %c1_i32 : i32 to vector<128x128xi32>
    %30 = arith.andi %27, %29 : vector<128x128xi32>
    %c0_i32 = arith.constant 0 : i32
    %31 = vector.broadcast %c0_i32 : i32 to vector<128x128xi32>
    %32 = arith.cmpi ne, %30, %31 : vector<128x128xi32>
    %33 = arith.select %32, %28, %24 : vector<128x128xi1>, vector<128x128xf32>
    %c126_i32 = arith.constant 126 : i32
    %34 = tpu.dynamic_rotate %33 by %c126_i32 dim 1 : vector<128x128xf32>, i32 -> vector<128x128xf32>
    %c2_i32 = arith.constant 2 : i32
    %35 = vector.broadcast %c2_i32 : i32 to vector<128x128xi32>
    %36 = arith.andi %27, %35 : vector<128x128xi32>
    %c0_i32_19 = arith.constant 0 : i32
    %37 = vector.broadcast %c0_i32_19 : i32 to vector<128x128xi32>
    %38 = arith.cmpi ne, %36, %37 : vector<128x128xi32>
    %39 = arith.select %38, %34, %33 : vector<128x128xi1>, vector<128x128xf32>
    %c124_i32 = arith.constant 124 : i32
    %40 = tpu.dynamic_rotate %39 by %c124_i32 dim 1 : vector<128x128xf32>, i32 -> vector<128x128xf32>
    %c4_i32 = arith.constant 4 : i32
    %41 = vector.broadcast %c4_i32 : i32 to vector<128x128xi32>
    %42 = arith.andi %27, %41 : vector<128x128xi32>
    %c0_i32_20 = arith.constant 0 : i32
    %43 = vector.broadcast %c0_i32_20 : i32 to vector<128x128xi32>
    %44 = arith.cmpi ne, %42, %43 : vector<128x128xi32>
    %45 = arith.select %44, %40, %39 : vector<128x128xi1>, vector<128x128xf32>
    %c120_i32 = arith.constant 120 : i32
    %46 = tpu.dynamic_rotate %45 by %c120_i32 dim 1 : vector<128x128xf32>, i32 -> vector<128x128xf32>
    %c8_i32 = arith.constant 8 : i32
    %47 = vector.broadcast %c8_i32 : i32 to vector<128x128xi32>
    %48 = arith.andi %27, %47 : vector<128x128xi32>
    %c0_i32_21 = arith.constant 0 : i32
    %49 = vector.broadcast %c0_i32_21 : i32 to vector<128x128xi32>
    %50 = arith.cmpi ne, %48, %49 : vector<128x128xi32>
    %51 = arith.select %50, %46, %45 : vector<128x128xi1>, vector<128x128xf32>
    %c112_i32 = arith.constant 112 : i32
    %52 = tpu.dynamic_rotate %51 by %c112_i32 dim 1 : vector<128x128xf32>, i32 -> vector<128x128xf32>
    %c16_i32 = arith.constant 16 : i32
    %53 = vector.broadcast %c16_i32 : i32 to vector<128x128xi32>
    %54 = arith.andi %27, %53 : vector<128x128xi32>
    %c0_i32_22 = arith.constant 0 : i32
    %55 = vector.broadcast %c0_i32_22 : i32 to vector<128x128xi32>
    %56 = arith.cmpi ne, %54, %55 : vector<128x128xi32>
    %57 = arith.select %56, %52, %51 : vector<128x128xi1>, vector<128x128xf32>
    %c96_i32 = arith.constant 96 : i32
    %58 = tpu.dynamic_rotate %57 by %c96_i32 dim 1 : vector<128x128xf32>, i32 -> vector<128x128xf32>
    %c32_i32 = arith.constant 32 : i32
    %59 = vector.broadcast %c32_i32 : i32 to vector<128x128xi32>
    %60 = arith.andi %27, %59 : vector<128x128xi32>
    %c0_i32_23 = arith.constant 0 : i32
    %61 = vector.broadcast %c0_i32_23 : i32 to vector<128x128xi32>
    %62 = arith.cmpi ne, %60, %61 : vector<128x128xi32>
    %63 = arith.select %62, %58, %57 : vector<128x128xi1>, vector<128x128xf32>
    %c64_i32 = arith.constant 64 : i32
    %64 = tpu.dynamic_rotate %63 by %c64_i32 dim 1 : vector<128x128xf32>, i32 -> vector<128x128xf32>
    %c64_i32_24 = arith.constant 64 : i32
    %65 = vector.broadcast %c64_i32_24 : i32 to vector<128x128xi32>
    %66 = arith.andi %27, %65 : vector<128x128xi32>
    %c0_i32_25 = arith.constant 0 : i32
    %67 = vector.broadcast %c0_i32_25 : i32 to vector<128x128xi32>
    %68 = arith.cmpi ne, %66, %67 : vector<128x128xi32>
    %69 = arith.select %68, %64, %63 : vector<128x128xi1>, vector<128x128xf32>
    %70 = arith.addf %21, %69 : vector<128x128xf32>
    %cst_26 = arith.constant 1.250000e-01 : f32
    %71 = vector.broadcast %cst_26 : f32 to vector<128x128xf32>
    %72 = arith.mulf %70, %71 : vector<128x128xf32>
    %cst_27 = arith.constant 0xFF800000 : f32
    %73 = vector.broadcast %cst_27 : f32 to vector<128x128xf32>
    %74 = arith.select %18, %73, %72 : vector<128x128xi1>, vector<128x128xf32>
    %cst_28 = arith.constant dense<0xFF800000> : vector<128xf32>
    %75 = vector.multi_reduction <maximumf>, %74, %cst_28 [1] : vector<128x128xf32> to vector<128xf32>
    %76 = vector.shape_cast %75 : vector<128xf32> to vector<128x1xf32>
    %77 = vector.broadcast %76 : vector<128x1xf32> to vector<128x128xf32>
    %78 = arith.subf %74, %77 : vector<128x128xf32>
    %79 = math.exp %78 : vector<128x128xf32>
    %cst_29 = arith.constant dense<0.000000e+00> : vector<128xf32>
    %80 = vector.multi_reduction <add>, %79, %cst_29 [1] : vector<128x128xf32> to vector<128xf32>
    %81 = vector.shape_cast %80 : vector<128xf32> to vector<128x1xf32>
    %82 = vector.broadcast %81 : vector<128x1xf32> to vector<128x128xf32>
    %83 = arith.divf %79, %82 : vector<128x128xf32>
    %84 = vector.extract_strided_slice %9 {offsets = [0, 0], sizes = [128, 64], strides = [1, 1]} : vector<128x128xf32> to vector<128x64xf32>
    %cst_30 = arith.constant dense<0.000000e+00> : vector<128x64xf32>
    %85 = tpu.matmul %83, %84, %cst_30 {dimension_numbers = #tpu.dot_dimension_numbers<[1], [0], [0], [1], [0, 0, 1, 1], [], []>} : vector<128x128xf32>, vector<128x64xf32>, vector<128x64xf32> -> vector<128x64xf32>
    %86 = vector.extract_strided_slice %12 {offsets = [0, 64], sizes = [128, 64], strides = [1, 1]} : vector<128x128xf32> to vector<128x64xf32>
    %87 = vector.extract_strided_slice %8 {offsets = [0, 64], sizes = [128, 64], strides = [1, 1]} : vector<128x128xf32> to vector<128x64xf32>
    %cst_31 = arith.constant dense<0.000000e+00> : vector<128x128xf32>
    %88 = tpu.matmul %86, %87, %cst_31 {dimension_numbers = #tpu.dot_dimension_numbers<[1], [1], [0], [0], [0, 0, 1, 0], [], []>} : vector<128x64xf32>, vector<128x64xf32>, vector<128x128xf32> -> vector<128x128xf32>
    %89 = vector.extract_strided_slice %15 {offsets = [0, 64], sizes = [128, 64], strides = [1, 1]} : vector<128x128xf32> to vector<128x64xf32>
    %90 = vector.extract_strided_slice %6 {offsets = [0, 64], sizes = [128, 64], strides = [1, 1]} : vector<128x128xf32> to vector<128x64xf32>
    %cst_32 = arith.constant dense<0.000000e+00> : vector<128x128xf32>
    %91 = tpu.matmul %89, %90, %cst_32 {dimension_numbers = #tpu.dot_dimension_numbers<[1], [1], [0], [0], [0, 0, 1, 0], [], []>} : vector<128x64xf32>, vector<128x64xf32>, vector<128x128xf32> -> vector<128x128xf32>
    %92 = tpu.iota {dimensions = array<i32: 0>} : vector<128x128xi32>
    %c127_i32_33 = arith.constant 127 : i32
    %93 = vector.broadcast %c127_i32_33 : i32 to vector<128x128xi32>
    %94 = arith.subi %93, %92 : vector<128x128xi32>
    %c127_i32_34 = arith.constant 127 : i32
    %95 = tpu.dynamic_rotate %91 by %c127_i32_34 dim 1 : vector<128x128xf32>, i32 -> vector<128x128xf32>
    %c1_i32_35 = arith.constant 1 : i32
    %96 = vector.broadcast %c1_i32_35 : i32 to vector<128x128xi32>
    %97 = arith.andi %94, %96 : vector<128x128xi32>
    %c0_i32_36 = arith.constant 0 : i32
    %98 = vector.broadcast %c0_i32_36 : i32 to vector<128x128xi32>
    %99 = arith.cmpi ne, %97, %98 : vector<128x128xi32>
    %100 = arith.select %99, %95, %91 : vector<128x128xi1>, vector<128x128xf32>
    %c126_i32_37 = arith.constant 126 : i32
    %101 = tpu.dynamic_rotate %100 by %c126_i32_37 dim 1 : vector<128x128xf32>, i32 -> vector<128x128xf32>
    %c2_i32_38 = arith.constant 2 : i32
    %102 = vector.broadcast %c2_i32_38 : i32 to vector<128x128xi32>
    %103 = arith.andi %94, %102 : vector<128x128xi32>
    %c0_i32_39 = arith.constant 0 : i32
    %104 = vector.broadcast %c0_i32_39 : i32 to vector<128x128xi32>
    %105 = arith.cmpi ne, %103, %104 : vector<128x128xi32>
    %106 = arith.select %105, %101, %100 : vector<128x128xi1>, vector<128x128xf32>
    %c124_i32_40 = arith.constant 124 : i32
    %107 = tpu.dynamic_rotate %106 by %c124_i32_40 dim 1 : vector<128x128xf32>, i32 -> vector<128x128xf32>
    %c4_i32_41 = arith.constant 4 : i32
    %108 = vector.broadcast %c4_i32_41 : i32 to vector<128x128xi32>
    %109 = arith.andi %94, %108 : vector<128x128xi32>
    %c0_i32_42 = arith.constant 0 : i32
    %110 = vector.broadcast %c0_i32_42 : i32 to vector<128x128xi32>
    %111 = arith.cmpi ne, %109, %110 : vector<128x128xi32>
    %112 = arith.select %111, %107, %106 : vector<128x128xi1>, vector<128x128xf32>
    %c120_i32_43 = arith.constant 120 : i32
    %113 = tpu.dynamic_rotate %112 by %c120_i32_43 dim 1 : vector<128x128xf32>, i32 -> vector<128x128xf32>
    %c8_i32_44 = arith.constant 8 : i32
    %114 = vector.broadcast %c8_i32_44 : i32 to vector<128x128xi32>
    %115 = arith.andi %94, %114 : vector<128x128xi32>
    %c0_i32_45 = arith.constant 0 : i32
    %116 = vector.broadcast %c0_i32_45 : i32 to vector<128x128xi32>
    %117 = arith.cmpi ne, %115, %116 : vector<128x128xi32>
    %118 = arith.select %117, %113, %112 : vector<128x128xi1>, vector<128x128xf32>
    %c112_i32_46 = arith.constant 112 : i32
    %119 = tpu.dynamic_rotate %118 by %c112_i32_46 dim 1 : vector<128x128xf32>, i32 -> vector<128x128xf32>
    %c16_i32_47 = arith.constant 16 : i32
    %120 = vector.broadcast %c16_i32_47 : i32 to vector<128x128xi32>
    %121 = arith.andi %94, %120 : vector<128x128xi32>
    %c0_i32_48 = arith.constant 0 : i32
    %122 = vector.broadcast %c0_i32_48 : i32 to vector<128x128xi32>
    %123 = arith.cmpi ne, %121, %122 : vector<128x128xi32>
    %124 = arith.select %123, %119, %118 : vector<128x128xi1>, vector<128x128xf32>
    %c96_i32_49 = arith.constant 96 : i32
    %125 = tpu.dynamic_rotate %124 by %c96_i32_49 dim 1 : vector<128x128xf32>, i32 -> vector<128x128xf32>
    %c32_i32_50 = arith.constant 32 : i32
    %126 = vector.broadcast %c32_i32_50 : i32 to vector<128x128xi32>
    %127 = arith.andi %94, %126 : vector<128x128xi32>
    %c0_i32_51 = arith.constant 0 : i32
    %128 = vector.broadcast %c0_i32_51 : i32 to vector<128x128xi32>
    %129 = arith.cmpi ne, %127, %128 : vector<128x128xi32>
    %130 = arith.select %129, %125, %124 : vector<128x128xi1>, vector<128x128xf32>
    %c64_i32_52 = arith.constant 64 : i32
    %131 = tpu.dynamic_rotate %130 by %c64_i32_52 dim 1 : vector<128x128xf32>, i32 -> vector<128x128xf32>
    %c64_i32_53 = arith.constant 64 : i32
    %132 = vector.broadcast %c64_i32_53 : i32 to vector<128x128xi32>
    %133 = arith.andi %94, %132 : vector<128x128xi32>
    %c0_i32_54 = arith.constant 0 : i32
    %134 = vector.broadcast %c0_i32_54 : i32 to vector<128x128xi32>
    %135 = arith.cmpi ne, %133, %134 : vector<128x128xi32>
    %136 = arith.select %135, %131, %130 : vector<128x128xi1>, vector<128x128xf32>
    %137 = arith.addf %88, %136 : vector<128x128xf32>
    %cst_55 = arith.constant 1.250000e-01 : f32
    %138 = vector.broadcast %cst_55 : f32 to vector<128x128xf32>
    %139 = arith.mulf %137, %138 : vector<128x128xf32>
    %cst_56 = arith.constant 0xFF800000 : f32
    %140 = vector.broadcast %cst_56 : f32 to vector<128x128xf32>
    %141 = arith.select %18, %140, %139 : vector<128x128xi1>, vector<128x128xf32>
    %cst_57 = arith.constant dense<0xFF800000> : vector<128xf32>
    %142 = vector.multi_reduction <maximumf>, %141, %cst_57 [1] : vector<128x128xf32> to vector<128xf32>
    %143 = vector.shape_cast %142 : vector<128xf32> to vector<128x1xf32>
    %144 = vector.broadcast %143 : vector<128x1xf32> to vector<128x128xf32>
    %145 = arith.subf %141, %144 : vector<128x128xf32>
    %146 = math.exp %145 : vector<128x128xf32>
    %cst_58 = arith.constant dense<0.000000e+00> : vector<128xf32>
    %147 = vector.multi_reduction <add>, %146, %cst_58 [1] : vector<128x128xf32> to vector<128xf32>
    %148 = vector.shape_cast %147 : vector<128xf32> to vector<128x1xf32>
    %149 = vector.broadcast %148 : vector<128x1xf32> to vector<128x128xf32>
    %150 = arith.divf %146, %149 : vector<128x128xf32>
    %151 = vector.extract_strided_slice %9 {offsets = [0, 64], sizes = [128, 64], strides = [1, 1]} : vector<128x128xf32> to vector<128x64xf32>
    %cst_59 = arith.constant dense<0.000000e+00> : vector<128x64xf32>
    %152 = tpu.matmul %150, %151, %cst_59 {dimension_numbers = #tpu.dot_dimension_numbers<[1], [0], [0], [1], [0, 0, 1, 1], [], []>} : vector<128x128xf32>, vector<128x64xf32>, vector<128x64xf32> -> vector<128x64xf32>
    %153 = tpu.concatenate %85, %152 in 1 : vector<128x64xf32>, vector<128x64xf32> -> vector<128x128xf32>
    %c0_60 = arith.constant 0 : index
    %c0_61 = arith.constant 0 : index
    %154 = vector.load %arg6[%c0_60, %c0_61] : memref<128x128xf32, #tpu.memory_space<vmem>>, vector<128x128xf32>
    %cst_62 = arith.constant dense<0.000000e+00> : vector<128x128xf32>
    %155 = tpu.matmul %153, %154, %cst_62 {dimension_numbers = #tpu.dot_dimension_numbers<[1], [0], [0], [1], [0, 0, 1, 1], [], []>} : vector<128x128xf32>, vector<128x128xf32>, vector<128x128xf32> -> vector<128x128xf32>
    %156 = arith.addf %1, %155 : vector<128x128xf32>
    %cst_63 = arith.constant dense<0.000000e+00> : vector<128xf32>
    %157 = vector.multi_reduction <add>, %156, %cst_63 [1] : vector<128x128xf32> to vector<128xf32>
    %158 = vector.shape_cast %157 : vector<128xf32> to vector<128x1xf32>
    %cst_64 = arith.constant 1.280000e+02 : f32
    %159 = vector.broadcast %cst_64 : f32 to vector<128x1xf32>
    %160 = arith.divf %158, %159 : vector<128x1xf32>
    %161 = vector.broadcast %160 : vector<128x1xf32> to vector<128x128xf32>
    %162 = arith.subf %156, %161 : vector<128x128xf32>
    %163 = arith.mulf %162, %162 : vector<128x128xf32>
    %cst_65 = arith.constant dense<0.000000e+00> : vector<128xf32>
    %164 = vector.multi_reduction <add>, %163, %cst_65 [1] : vector<128x128xf32> to vector<128xf32>
    %165 = vector.shape_cast %164 : vector<128xf32> to vector<128x1xf32>
    %cst_66 = arith.constant 1.280000e+02 : f32
    %166 = vector.broadcast %cst_66 : f32 to vector<128x1xf32>
    %167 = arith.divf %165, %166 : vector<128x1xf32>
    %168 = vector.broadcast %160 : vector<128x1xf32> to vector<128x128xf32>
    %169 = arith.subf %156, %168 : vector<128x128xf32>
    %cst_67 = arith.constant 9.99999974E-6 : f32
    %170 = vector.broadcast %cst_67 : f32 to vector<128x1xf32>
    %171 = arith.addf %167, %170 : vector<128x1xf32>
    %172 = math.rsqrt %171 : vector<128x1xf32>
    %173 = vector.broadcast %172 : vector<128x1xf32> to vector<128x128xf32>
    %174 = arith.mulf %169, %173 : vector<128x128xf32>
    %c0_68 = arith.constant 0 : index
    %c0_69 = arith.constant 0 : index
    %175 = vector.load %arg9[%c0_68, %c0_69] : memref<1x128xf32, #tpu.memory_space<vmem>>, vector<1x128xf32>
    %176 = vector.broadcast %175 : vector<1x128xf32> to vector<128x128xf32>
    %177 = arith.mulf %174, %176 : vector<128x128xf32>
    %c0_70 = arith.constant 0 : index
    %c0_71 = arith.constant 0 : index
    %178 = vector.load %arg10[%c0_70, %c0_71] : memref<1x128xf32, #tpu.memory_space<vmem>>, vector<1x128xf32>
    %179 = vector.broadcast %178 : vector<1x128xf32> to vector<128x128xf32>
    %180 = arith.addf %177, %179 : vector<128x128xf32>
    %c0_72 = arith.constant 0 : index
    %c0_73 = arith.constant 0 : index
    %c0_74 = arith.constant 0 : index
    %181 = vector.load %arg11[%c0_72, %c0_73, %c0_74] : memref<1x128x128xf32, #tpu.memory_space<vmem>>, vector<1x128x128xf32>
    %182 = vector.shape_cast %181 : vector<1x128x128xf32> to vector<128x128xf32>
    %183 = vector.shape_cast %180 : vector<128x128xf32> to vector<1x128x128xf32>
    tpu.vector_store %arg11[%c0_72, %c0_73, %c0_74], %183 {strides = array<i32>} : memref<1x128x128xf32, #tpu.memory_space<vmem>>, vector<1x128x128xf32>,
    return
  }
  func.func @transform_0(%arg0: i32) -> (i32, i32, i32) {
    %c0_i32 = arith.constant 0 : i32
    %c0_i32_0 = arith.constant 0 : i32
    %c0_i32_1 = arith.constant 0 : i32
    return %arg0, %c0_i32, %c0_i32_0 : i32, i32, i32
  }
  func.func @transform_1(%arg0: i32) -> (i32, i32) {
    %c0_i32 = arith.constant 0 : i32
    %c0_i32_0 = arith.constant 0 : i32
    %c0_i32_1 = arith.constant 0 : i32
    return %c0_i32, %c0_i32_0 : i32, i32
  }
  func.func @transform_2(%arg0: i32) -> (i32, i32) {
    %c0_i32 = arith.constant 0 : i32
    %c0_i32_0 = arith.constant 0 : i32
    %c0_i32_1 = arith.constant 0 : i32
    return %c0_i32, %c0_i32_0 : i32, i32
  }
  func.func @transform_3(%arg0: i32) -> (i32, i32) {
    %c0_i32 = arith.constant 0 : i32
    %c0_i32_0 = arith.constant 0 : i32
    %c0_i32_1 = arith.constant 0 : i32
    return %c0_i32, %c0_i32_0 : i32, i32
  }
  func.func @transform_4(%arg0: i32) -> (i32, i32) {
    %c0_i32 = arith.constant 0 : i32
    %c0_i32_0 = arith.constant 0 : i32
    %c0_i32_1 = arith.constant 0 : i32
    return %c0_i32, %c0_i32_0 : i32, i32
  }
  func.func @transform_5(%arg0: i32) -> (i32, i32) {
    %c0_i32 = arith.constant 0 : i32
    %c0_i32_0 = arith.constant 0 : i32
    %c0_i32_1 = arith.constant 0 : i32
    return %c0_i32, %c0_i32_0 : i32, i32
  }
  func.func @transform_6(%arg0: i32) -> (i32, i32) {
    %c0_i32 = arith.constant 0 : i32
    %c0_i32_0 = arith.constant 0 : i32
    %c0_i32_1 = arith.constant 0 : i32
    return %c0_i32, %c0_i32_0 : i32, i32
  }
  func.func @transform_7(%arg0: i32) -> (i32, i32) {
    %c0_i32 = arith.constant 0 : i32
    %c0_i32_0 = arith.constant 0 : i32
    %c0_i32_1 = arith.constant 0 : i32
    return %c0_i32, %c0_i32_0 : i32, i32
  }
  func.func @transform_8(%arg0: i32) -> (i32, i32) {
    %c0_i32 = arith.constant 0 : i32
    %c0_i32_0 = arith.constant 0 : i32
    %c0_i32_1 = arith.constant 0 : i32
    return %c0_i32, %c0_i32_0 : i32, i32
  }
  func.func @transform_9(%arg0: i32) -> (i32, i32) {
    %c0_i32 = arith.constant 0 : i32
    %c0_i32_0 = arith.constant 0 : i32
    %c0_i32_1 = arith.constant 0 : i32
    return %c0_i32, %c0_i32_0 : i32, i32
  }
  func.func @transform_10(%arg0: i32) -> (i32, i32, i32) {
    %c0_i32 = arith.constant 0 : i32
    %c0_i32_0 = arith.constant 0 : i32
    %c0_i32_1 = arith.constant 0 : i32
    return %arg0, %c0_i32, %c0_i32_0 : i32, i32, i32
  }
}

</mosaic_0001>

<llo_original>
// kernel: tpu_custom_call.1
$region0: #{tpu_custom_call.1}
  #allocation0 [shape = 'u32[]', space=smem, size = 0x4, offset = 0x4, fixed_abs, tag = 'smem constant byte address 0x4 - core index']
  #allocation1 [shape = 'u32[144,128]{1,0:T(1,128)}', space=vmem, size = 0x12000, scoped, tag = 'internal scratch']
  %s0 = inlined_call_operand.hbm [shape: f32[2,128,128], index: 0, kind: input, shape index: {}]
  %s1 = inlined_call_operand.hbm [shape: f32[128,128], index: 1, kind: input, shape index: {}]
  %s2 = inlined_call_operand.hbm [shape: f32[128,128], index: 2, kind: input, shape index: {}]
  %s3 = inlined_call_operand.hbm [shape: f32[128,384], index: 3, kind: input, shape index: {}]
  %s4 = inlined_call_operand.hbm [shape: f32[128,128], index: 4, kind: input, shape index: {}]
  %s5 = inlined_call_operand.hbm [shape: f32[128,128], index: 5, kind: input, shape index: {}]
  %s6 = inlined_call_operand.vmem [shape: f32[1,128], index: 6, kind: input, shape index: {}]
  %s7 = inlined_call_operand.vmem [shape: f32[1,128], index: 7, kind: input, shape index: {}]
  %s8 = inlined_call_operand.vmem [shape: f32[1,128], index: 8, kind: input, shape index: {}]
  %s9 = inlined_call_operand.vmem [shape: f32[1,128], index: 9, kind: input, shape index: {}]
  %s10 = inlined_call_operand.hbm [shape: f32[2,128,128], index: 10, kind: output, shape index: {}]
  %s11 = sld [smem:[#allocation0]]
  $region97: #{tpu_custom_call.1} parent=0
    _
  %s13 = ssub.s32 1, %s11
  %s14 = scalar_select 0, %s13, %s11
  $region1: #{tpu_custom_call.1} parent=0
    #allocation2 [shape = 'u8[131072]{0}', space=vmem, size = 0x20000, scoped, tag = 'input window, operand 0']
    #allocation3 [shape = 's32[2]{0}', space=sflag, size = 0x8, scoped, tag = 'scoped memory for tpu_custom_call.1']
    #allocation4 [shape = 's32[2]{0}', space=sflag, size = 0x8, scoped, tag = 'scoped memory for tpu_custom_call.1']
    #allocation5 [shape = 'u8[65536]{0}', space=vmem, size = 0x10000, scoped, tag = 'input window, operand 1, single buffered']
    #allocation6 [shape = 's32[1]{0}', space=sflag, size = 0x4, scoped, tag = 'scoped memory for tpu_custom_call.1']
    #allocation7 [shape = 'u8[65536]{0}', space=vmem, size = 0x10000, scoped, tag = 'input window, operand 2, single buffered']
    #allocation8 [shape = 'u8[196608]{0}', space=vmem, size = 0x30000, scoped, tag = 'input window, operand 3, single buffered']
    #allocation9 [shape = 's32[1]{0}', space=sflag, size = 0x4, scoped, tag = 'scoped memory for tpu_custom_call.1']
    #allocation10 [shape = 'u8[65536]{0}', space=vmem, size = 0x10000, scoped, tag = 'input window, operand 4, single buffered']
    #allocation11 [shape = 'u8[65536]{0}', space=vmem, size = 0x10000, scoped, tag = 'input window, operand 5, single buffered']
    #allocation12 [shape = 's32[1]{0}', space=sflag, size = 0x4, scoped, tag = 'scoped memory for tpu_custom_call.1']
    #allocation13 [shape = 'u8[131072]{0}', space=vmem, size = 0x20000, scoped, tag = 'output window, operand 0']
    %15 = vsyncpa [#allocation3], 0
    %s16 = scalar_lea.sflag [#allocation3], 1
    %17 = vsyncpa %s16, 0
    %18 = vsyncpa [#allocation6], 0
    %19 = vsyncpa [#allocation9], 0
    %20 = vsyncpa [#allocation12], 0
    %21 = vsyncpa [#allocation4], 0
    %s22 = scalar_lea.sflag [#allocation4], 1
    %23 = vsyncpa %s22, 0
    loop: start=0, step=1, limit=4
    $region2: #{tpu_custom_call.1} parent=1 // loop_pre_header
      _
    $region3: #{tpu_custom_call.1} parent=1 // loop_header
      %s25 = sphi 0, %s29
      %p26 = scmp.ge.s32.totalorder %s25, 4
      %s35 = sphi 0, %s37
      %s38 = sphi 0, %s35
      %s39 = sphi 0, %s38
      %s55 = sphi 0, %s39
      %s59 = sphi 0, %s59
      %s61 = sphi 0, %s59
      %s62 = sphi 0, %s61
      %s76 = sphi 0, %s62
      %s80 = sphi 0, %s80
      %s82 = sphi 0, %s80
      %s83 = sphi 0, %s82
      %s97 = sphi 0, %s83
      %s101 = sphi 0, %s101
      %s103 = sphi 0, %s101
      %s104 = sphi 0, %s103
      %s118 = sphi 0, %s104
      %s122 = sphi 0, %s122
      %s124 = sphi 0, %s122
      %s125 = sphi 0, %s124
      %s139 = sphi 0, %s125
      %s143 = sphi 0, %s143
      %s145 = sphi 0, %s143
      %s146 = sphi 0, %s145
      %s160 = sphi 0, %s146
      %s164 = sphi 0, %s164
      %s166 = sphi 0, %s164
      %s167 = sphi 0, %s166
      %s181 = sphi 0, %s167
      %s185 = sphi 0, %s185
      %s187 = sphi 0, %s185
      %s188 = sphi 0, %s187
      %s202 = sphi 0, %s188
      %s206 = sphi 0, %s206
      %s208 = sphi 0, %s206
      %s209 = sphi 0, %s208
      %s223 = sphi 0, %s209
      %s227 = sphi 0, %s227
      %s229 = sphi 0, %s227
      %s230 = sphi 0, %s229
      %s244 = sphi 0, %s230
      %s250 = sphi 0, %s252
      %s253 = sphi 0, %s250
      %s254 = sphi 0, %s253
      %s270 = sphi 0, %s254
    $region4: #{tpu_custom_call.1} parent=1 // loop_header_branch
      %28 = sbr.rel (%p26) target = $region8
    $region5: #{tpu_custom_call.1} parent=1 // loop_body
      %s30 = ssub.s32 %s25, 1
      %s31 = ssub.s32 %s25, 2
      %s32 = sadd.s32 %s25, 1
      %s33 = ssub.s32 %s25, %s32
      %p34 = scmp.eq.s32.totalorder %s33, 0
      %s36 = sadd.s32 %s35, 1
      %s37 = scalar_select %p34, %s35, %s36
      %p40 = pneg %p34
      %p41 = scmp.eq.s32.totalorder %s25, 1
      %p42 = por %p40, %p41
      %p43 = scmp.ne.s32.totalorder %s35, %s38
      %p44 = scmp.eq.s32.totalorder %s25, 0
      %p45 = por %p43, %p44
      %p46 = scmp.ne.s32.totalorder %s35, %s38
      %p47 = scmp.eq.s32.totalorder %s30, 1
      %p48 = por %p46, %p47
      %p49 = scmp.ne.s32.totalorder %s38, %s39
      %p50 = scmp.eq.s32.totalorder %s30, 0
      %p51 = por %p49, %p50
      %p52 = scmp.ne.s32.totalorder %s38, %s39
      %p53 = scmp.eq.s32.totalorder %s31, 1
      %p54 = por %p52, %p53
      %p56 = scmp.ne.s32.totalorder %s39, %s55
      %p57 = scmp.eq.s32.totalorder %s31, 0
      %p58 = por %p56, %p57
      %s60 = sadd.s32 %s59, 1
      %p63 = scmp.eq.s32.totalorder %s25, 1
      %p64 = scmp.ne.s32.totalorder %s59, %s61
      %p65 = scmp.eq.s32.totalorder %s25, 0
      %p66 = por %p64, %p65
      %p67 = scmp.ne.s32.totalorder %s59, %s61
      %p68 = scmp.eq.s32.totalorder %s30, 1
      %p69 = por %p67, %p68
      %p70 = scmp.ne.s32.totalorder %s61, %s62
      %p71 = scmp.eq.s32.totalorder %s30, 0
      %p72 = por %p70, %p71
      %p73 = scmp.ne.s32.totalorder %s61, %s62
      %p74 = scmp.eq.s32.totalorder %s31, 1
      %p75 = por %p73, %p74
      %p77 = scmp.ne.s32.totalorder %s62, %s76
      %p78 = scmp.eq.s32.totalorder %s31, 0
      %p79 = por %p77, %p78
      %s81 = sadd.s32 %s80, 1
      %p84 = scmp.eq.s32.totalorder %s25, 1
      %p85 = scmp.ne.s32.totalorder %s80, %s82
      %p86 = scmp.eq.s32.totalorder %s25, 0
      %p87 = por %p85, %p86
      %p88 = scmp.ne.s32.totalorder %s80, %s82
      %p89 = scmp.eq.s32.totalorder %s30, 1
      %p90 = por %p88, %p89
      %p91 = scmp.ne.s32.totalorder %s82, %s83
      %p92 = scmp.eq.s32.totalorder %s30, 0
      %p93 = por %p91, %p92
      %p94 = scmp.ne.s32.totalorder %s82, %s83
      %p95 = scmp.eq.s32.totalorder %s31, 1
      %p96 = por %p94, %p95
      %p98 = scmp.ne.s32.totalorder %s83, %s97
      %p99 = scmp.eq.s32.totalorder %s31, 0
      %p100 = por %p98, %p99
      %s102 = sadd.s32 %s101, 1
      %p105 = scmp.eq.s32.totalorder %s25, 1
      %p106 = scmp.ne.s32.totalorder %s101, %s103
      %p107 = scmp.eq.s32.totalorder %s25, 0
      %p108 = por %p106, %p107
      %p109 = scmp.ne.s32.totalorder %s101, %s103
      %p110 = scmp.eq.s32.totalorder %s30, 1
      %p111 = por %p109, %p110
      %p112 = scmp.ne.s32.totalorder %s103, %s104
      %p113 = scmp.eq.s32.totalorder %s30, 0
      %p114 = por %p112, %p113
      %p115 = scmp.ne.s32.totalorder %s103, %s104
      %p116 = scmp.eq.s32.totalorder %s31, 1
      %p117 = por %p115, %p116
      %p119 = scmp.ne.s32.totalorder %s104, %s118
      %p120 = scmp.eq.s32.totalorder %s31, 0
      %p121 = por %p119, %p120
      %s123 = sadd.s32 %s122, 1
      %p126 = scmp.eq.s32.totalorder %s25, 1
      %p127 = scmp.ne.s32.totalorder %s122, %s124
      %p128 = scmp.eq.s32.totalorder %s25, 0
      %p129 = por %p127, %p128
      %p130 = scmp.ne.s32.totalorder %s122, %s124
      %p131 = scmp.eq.s32.totalorder %s30, 1
      %p132 = por %p130, %p131
      %p133 = scmp.ne.s32.totalorder %s124, %s125
      %p134 = scmp.eq.s32.totalorder %s30, 0
      %p135 = por %p133, %p134
      %p136 = scmp.ne.s32.totalorder %s124, %s125
      %p137 = scmp.eq.s32.totalorder %s31, 1
      %p138 = por %p136, %p137
      %p140 = scmp.ne.s32.totalorder %s125, %s139
      %p141 = scmp.eq.s32.totalorder %s31, 0
      %p142 = por %p140, %p141
      %s144 = sadd.s32 %s143, 1
      %p147 = scmp.eq.s32.totalorder %s25, 1
      %p148 = scmp.ne.s32.totalorder %s143, %s145
      %p149 = scmp.eq.s32.totalorder %s25, 0
      %p150 = por %p148, %p149
      %p151 = scmp.ne.s32.totalorder %s143, %s145
      %p152 = scmp.eq.s32.totalorder %s30, 1
      %p153 = por %p151, %p152
      %p154 = scmp.ne.s32.totalorder %s145, %s146
      %p155 = scmp.eq.s32.totalorder %s30, 0
      %p156 = por %p154, %p155
      %p157 = scmp.ne.s32.totalorder %s145, %s146
      %p158 = scmp.eq.s32.totalorder %s31, 1
      %p159 = por %p157, %p158
      %p161 = scmp.ne.s32.totalorder %s146, %s160
      %p162 = scmp.eq.s32.totalorder %s31, 0
      %p163 = por %p161, %p162
      %s165 = sadd.s32 %s164, 1
      %p168 = scmp.eq.s32.totalorder %s25, 1
      %p169 = scmp.ne.s32.totalorder %s164, %s166
      %p170 = scmp.eq.s32.totalorder %s25, 0
      %p171 = por %p169, %p170
      %p172 = scmp.ne.s32.totalorder %s164, %s166
      %p173 = scmp.eq.s32.totalorder %s30, 1
      %p174 = por %p172, %p173
      %p175 = scmp.ne.s32.totalorder %s166, %s167
      %p176 = scmp.eq.s32.totalorder %s30, 0
      %p177 = por %p175, %p176
      %p178 = scmp.ne.s32.totalorder %s166, %s167
      %p179 = scmp.eq.s32.totalorder %s31, 1
      %p180 = por %p178, %p179
      %p182 = scmp.ne.s32.totalorder %s167, %s181
      %p183 = scmp.eq.s32.totalorder %s31, 0
      %p184 = por %p182, %p183
      %s186 = sadd.s32 %s185, 1
      %p189 = scmp.eq.s32.totalorder %s25, 1
      %p190 = scmp.ne.s32.totalorder %s185, %s187
      %p191 = scmp.eq.s32.totalorder %s25, 0
      %p192 = por %p190, %p191
      %p193 = scmp.ne.s32.totalorder %s185, %s187
      %p194 = scmp.eq.s32.totalorder %s30, 1
      %p195 = por %p193, %p194
      %p196 = scmp.ne.s32.totalorder %s187, %s188
      %p197 = scmp.eq.s32.totalorder %s30, 0
      %p198 = por %p196, %p197
      %p199 = scmp.ne.s32.totalorder %s187, %s188
      %p200 = scmp.eq.s32.totalorder %s31, 1
      %p201 = por %p199, %p200
      %p203 = scmp.ne.s32.totalorder %s188, %s202
      %p204 = scmp.eq.s32.totalorder %s31, 0
      %p205 = por %p203, %p204
      %s207 = sadd.s32 %s206, 1
      %p210 = scmp.eq.s32.totalorder %s25, 1
      %p211 = scmp.ne.s32.totalorder %s206, %s208
      %p212 = scmp.eq.s32.totalorder %s25, 0
      %p213 = por %p211, %p212
      %p214 = scmp.ne.s32.totalorder %s206, %s208
      %p215 = scmp.eq.s32.totalorder %s30, 1
      %p216 = por %p214, %p215
      %p217 = scmp.ne.s32.totalorder %s208, %s209
      %p218 = scmp.eq.s32.totalorder %s30, 0
      %p219 = por %p217, %p218
      %p220 = scmp.ne.s32.totalorder %s208, %s209
      %p221 = scmp.eq.s32.totalorder %s31, 1
      %p222 = por %p220, %p221
      %p224 = scmp.ne.s32.totalorder %s209, %s223
      %p225 = scmp.eq.s32.totalorder %s31, 0
      %p226 = por %p224, %p225
      %s228 = sadd.s32 %s227, 1
      %p231 = scmp.eq.s32.totalorder %s25, 1
      %p232 = scmp.ne.s32.totalorder %s227, %s229
      %p233 = scmp.eq.s32.totalorder %s25, 0
      %p234 = por %p232, %p233
      %p235 = scmp.ne.s32.totalorder %s227, %s229
      %p236 = scmp.eq.s32.totalorder %s30, 1
      %p237 = por %p235, %p236
      %p238 = scmp.ne.s32.totalorder %s229, %s230
      %p239 = scmp.eq.s32.totalorder %s30, 0
      %p240 = por %p238, %p239
      %p241 = scmp.ne.s32.totalorder %s229, %s230
      %p242 = scmp.eq.s32.totalorder %s31, 1
      %p243 = por %p241, %p242
      %p245 = scmp.ne.s32.totalorder %s230, %s244
      %p246 = scmp.eq.s32.totalorder %s31, 0
      %p247 = por %p245, %p246
      %s248 = ssub.s32 %s25, %s32
      %p249 = scmp.eq.s32.totalorder %s248, 0
      %s251 = sadd.s32 %s250, 1
      %s252 = scalar_select %p249, %s250, %s251
      %p255 = pneg %p249
      %p256 = scmp.eq.s32.totalorder %s25, 1
      %p257 = por %p255, %p256
      %p258 = scmp.ne.s32.totalorder %s250, %s253
      %p259 = scmp.eq.s32.totalorder %s25, 0
      %p260 = por %p258, %p259
      %p261 = scmp.ne.s32.totalorder %s250, %s253
      %p262 = scmp.eq.s32.totalorder %s30, 1
      %p263 = por %p261, %p262
      %p264 = scmp.ne.s32.totalorder %s253, %s254
      %p265 = scmp.eq.s32.totalorder %s30, 0
      %p266 = por %p264, %p265
      %p267 = scmp.ne.s32.totalorder %s253, %s254
      %p268 = scmp.eq.s32.totalorder %s31, 1
      %p269 = por %p267, %p268
      %p271 = scmp.ne.s32.totalorder %s254, %s270
      %p272 = scmp.eq.s32.totalorder %s31, 0
      %p273 = por %p271, %p272
      %p274 = scmp.le.s32.totalorder 1, %s25
      %p275 = scmp.lt.s32.totalorder %s25, 3
      %p276 = pnand %p274, %p275
      %p277 = pneg %p276
      // Predicated region
      $region9: #{tpu_custom_call.1} parent=5 // pred_check
        _
      $region10: #{tpu_custom_call.1} parent=5 // pred_check_branch
        %279 = sbr.rel (%p276) target = $region12
      $region11: #{tpu_custom_call.1} parent=5 // pred_region
        %s280 = ssub.s32 %s25, 1
        // Predicated region
        $region13: #{tpu_custom_call.1} parent=11 // pred_check
          %p281 = pneg %p72
        $region14: #{tpu_custom_call.1} parent=11 // pred_check_branch
          %283 = sbr.rel (%p281) target = $region16
        $region15: #{tpu_custom_call.1} parent=11 // pred_region
          %s285 = ssub.s32 2048, 2048
          %286 = vsyncadd [#allocation6], %s285
          %s287 = sshll.u32 [#allocation5], 4
          %s288 = int_to_ptr.vmem [resolvable:$true] %s287
          %293 = dma.hbm_to_vmem [thread:$0]  %s1, 2048, %s288, [#allocation6], 128, 128, 8
        $region16: #{tpu_custom_call.1} parent=11 // pred_fallthru
          _
        // Predicated region
        $region17: #{tpu_custom_call.1} parent=11 // pred_check
          %p294 = pneg %p93
        $region18: #{tpu_custom_call.1} parent=11 // pred_check_branch
          %296 = sbr.rel (%p294) target = $region20
        $region19: #{tpu_custom_call.1} parent=11 // pred_region
          %s298 = ssub.s32 2048, 2048
          %299 = vsyncadd [#allocation6], %s298
          %s300 = sshll.u32 [#allocation7], 4
          %s301 = int_to_ptr.vmem [resolvable:$true] %s300
          %306 = dma.hbm_to_vmem [thread:$0]  %s2, 2048, %s301, [#allocation6], 128, 128, 8
        $region20: #{tpu_custom_call.1} parent=11 // pred_fallthru
          _
        // Predicated region
        $region21: #{tpu_custom_call.1} parent=11 // pred_check
          %p307 = pneg %p114
        $region22: #{tpu_custom_call.1} parent=11 // pred_check_branch
          %309 = sbr.rel (%p307) target = $region24
        $region23: #{tpu_custom_call.1} parent=11 // pred_region
          %s311 = ssub.s32 6144, 6144
          %312 = vsyncadd [#allocation9], %s311
          %s313 = sshll.u32 [#allocation8], 4
          %s314 = int_to_ptr.vmem [resolvable:$true] %s313
          %319 = dma.hbm_to_vmem [thread:$0]  %s3, 6144, %s314, [#allocation9], 384, 384, 24
        $region24: #{tpu_custom_call.1} parent=11 // pred_fallthru
          _
        // Predicated region
        $region25: #{tpu_custom_call.1} parent=11 // pred_check
          %p320 = pneg %p135
        $region26: #{tpu_custom_call.1} parent=11 // pred_check_branch
          %322 = sbr.rel (%p320) target = $region28
        $region27: #{tpu_custom_call.1} parent=11 // pred_region
          %s324 = ssub.s32 2048, 2048
          %325 = vsyncadd [#allocation9], %s324
          %s326 = sshll.u32 [#allocation10], 4
          %s327 = int_to_ptr.vmem [resolvable:$true] %s326
          %332 = dma.hbm_to_vmem [thread:$0]  %s4, 2048, %s327, [#allocation9], 128, 128, 8
        $region28: #{tpu_custom_call.1} parent=11 // pred_fallthru
          _
        // Predicated region
        $region29: #{tpu_custom_call.1} parent=11 // pred_check
          %p333 = pneg %p156
        $region30: #{tpu_custom_call.1} parent=11 // pred_check_branch
          %335 = sbr.rel (%p333) target = $region32
        $region31: #{tpu_custom_call.1} parent=11 // pred_region
          %s337 = ssub.s32 2048, 2048
          %338 = vsyncadd [#allocation12], %s337
          %s339 = sshll.u32 [#allocation11], 4
          %s340 = int_to_ptr.vmem [resolvable:$true] %s339
          %345 = dma.hbm_to_vmem [thread:$0]  %s5, 2048, %s340, [#allocation12], 128, 128, 8
        $region32: #{tpu_custom_call.1} parent=11 // pred_fallthru
          _
        // Predicated region
        $region33: #{tpu_custom_call.1} parent=11 // pred_check
          %p346 = pneg %p177
        $region34: #{tpu_custom_call.1} parent=11 // pred_check_branch
          %348 = sbr.rel (%p346) target = $region36
        $region35: #{tpu_custom_call.1} parent=11 // pred_region
          _
        $region36: #{tpu_custom_call.1} parent=11 // pred_fallthru
          _
        // Predicated region
        $region37: #{tpu_custom_call.1} parent=11 // pred_check
          %p349 = pneg %p198
        $region38: #{tpu_custom_call.1} parent=11 // pred_check_branch
          %351 = sbr.rel (%p349) target = $region40
        $region39: #{tpu_custom_call.1} parent=11 // pred_region
          _
        $region40: #{tpu_custom_call.1} parent=11 // pred_fallthru
          _
        // Predicated region
        $region41: #{tpu_custom_call.1} parent=11 // pred_check
          %p352 = pneg %p219
        $region42: #{tpu_custom_call.1} parent=11 // pred_check_branch
          %354 = sbr.rel (%p352) target = $region44
        $region43: #{tpu_custom_call.1} parent=11 // pred_region
          _
        $region44: #{tpu_custom_call.1} parent=11 // pred_fallthru
          _
        // Predicated region
        $region45: #{tpu_custom_call.1} parent=11 // pred_check
          %p355 = pneg %p240
        $region46: #{tpu_custom_call.1} parent=11 // pred_check_branch
          %357 = sbr.rel (%p355) target = $region48
        $region47: #{tpu_custom_call.1} parent=11 // pred_region
          _
        $region48: #{tpu_custom_call.1} parent=11 // pred_fallthru
          _
      $region12: #{tpu_custom_call.1} parent=5 // pred_fallthru
        _
      %p358 = scmp.lt.s32.totalorder %s25, 2
      // Predicated region
      $region49: #{tpu_custom_call.1} parent=5 // pred_check
        %p359 = pneg %p358
      $region50: #{tpu_custom_call.1} parent=5 // pred_check_branch
        %361 = sbr.rel (%p359) target = $region52
      $region51: #{tpu_custom_call.1} parent=5 // pred_region
        // Predicated region
        $region53: #{tpu_custom_call.1} parent=51 // pred_check
          %p362 = pneg %p45
        $region54: #{tpu_custom_call.1} parent=51 // pred_check_branch
          %364 = sbr.rel (%p362) target = $region56
        $region55: #{tpu_custom_call.1} parent=51 // pred_region
          %s365 = sand.u32 %s35, 1
          %s366 = scalar_lea.sflag [#allocation3], %s365
          %s367 = sand.u32 %s35, 1
          %s368 = smul.addr %s367, 128
          %s369 = scalar_lea.vmem [#allocation2], %s368
          %s371 = ssub.s32 2048, 2048
          %372 = vsyncadd %s366, %s371
          %s373 = smul.addr %s25, 16
          %s374 = smul.addr %s373, 128
          %s375 = scalar_lea.hbm %s0, %s374
          %s376 = sshll.u32 %s369, 4
          %s377 = int_to_ptr.vmem [resolvable:$true] %s376
          %382 = dma.hbm_to_vmem [thread:$0]  %s375, 2048, %s377, %s366, 128, 128, 8
        $region56: #{tpu_custom_call.1} parent=51 // pred_fallthru
          _
      $region52: #{tpu_custom_call.1} parent=5 // pred_fallthru
        _
      %p383 = scmp.le.s32.totalorder 1, %s25
      %p384 = scmp.lt.s32.totalorder %s25, 3
      %p385 = pnand %p383, %p384
      %p386 = pneg %p385
      // Predicated region
      $region57: #{tpu_custom_call.1} parent=5 // pred_check
        _
      $region58: #{tpu_custom_call.1} parent=5 // pred_check_branch
        %388 = sbr.rel (%p385) target = $region60
      $region59: #{tpu_custom_call.1} parent=5 // pred_region
        %s389 = ssub.s32 %s25, 1
        %s390 = sand.u32 %s38, 1
        %s391 = scalar_lea.sflag [#allocation3], %s390
        %s392 = sand.u32 %s38, 1
        %s393 = smul.addr %s392, 128
        %s394 = scalar_lea.vmem [#allocation2], %s393
        // Predicated region
        $region61: #{tpu_custom_call.1} parent=59 // pred_check
          %p395 = pneg %p51
        $region62: #{tpu_custom_call.1} parent=59 // pred_check_branch
          %397 = sbr.rel (%p395) target = $region64
        $region63: #{tpu_custom_call.1} parent=59 // pred_region
          %398 = dma.done %s391, 2048
        $region64: #{tpu_custom_call.1} parent=59 // pred_fallthru
          _
        // Predicated region
        $region65: #{tpu_custom_call.1} parent=59 // pred_check
          %p399 = pneg %p72
        $region66: #{tpu_custom_call.1} parent=59 // pred_check_branch
          %401 = sbr.rel (%p399) target = $region68
        $region67: #{tpu_custom_call.1} parent=59 // pred_region
          %402 = dma.done [#allocation6], 2048
        $region68: #{tpu_custom_call.1} parent=59 // pred_fallthru
          _
        // Predicated region
        $region69: #{tpu_custom_call.1} parent=59 // pred_check
          %p403 = pneg %p93
        $region70: #{tpu_custom_call.1} parent=59 // pred_check_branch
          %405 = sbr.rel (%p403) target = $region72
        $region71: #{tpu_custom_call.1} parent=59 // pred_region
          %406 = dma.done [#allocation6], 2048
        $region72: #{tpu_custom_call.1} parent=59 // pred_fallthru
          _
        // Predicated region
        $region73: #{tpu_custom_call.1} parent=59 // pred_check
          %p407 = pneg %p114
        $region74: #{tpu_custom_call.1} parent=59 // pred_check_branch
          %409 = sbr.rel (%p407) target = $region76
        $region75: #{tpu_custom_call.1} parent=59 // pred_region
          %410 = dma.done [#allocation9], 6144
        $region76: #{tpu_custom_call.1} parent=59 // pred_fallthru
          _
        // Predicated region
        $region77: #{tpu_custom_call.1} parent=59 // pred_check
          %p411 = pneg %p135
        $region78: #{tpu_custom_call.1} parent=59 // pred_check_branch
          %413 = sbr.rel (%p411) target = $region80
        $region79: #{tpu_custom_call.1} parent=59 // pred_region
          %414 = dma.done [#allocation9], 2048
        $region80: #{tpu_custom_call.1} parent=59 // pred_fallthru
          _
        // Predicated region
        $region81: #{tpu_custom_call.1} parent=59 // pred_check
          %p415 = pneg %p156
        $region82: #{tpu_custom_call.1} parent=59 // pred_check_branch
          %417 = sbr.rel (%p415) target = $region84
        $region83: #{tpu_custom_call.1} parent=59 // pred_region
          %418 = dma.done [#allocation12], 2048
        $region84: #{tpu_custom_call.1} parent=59 // pred_fallthru
          _
        %s419 = sand.u32 %s38, 1
        %s420 = scalar_lea.sflag [#allocation3], %s419
        %s421 = sand.u32 %s38, 1
        %s422 = smul.addr %s421, 128
        %s423 = scalar_lea.vmem [#allocation2], %s422
        %p424 = pneg %p51
        %p425 = pneg %p48
        %p426 = pneg %p72
        %p427 = pneg %p69
        %p428 = pneg %p93
        %p429 = pneg %p90
        %p430 = pneg %p114
        %p431 = pneg %p111
        %p432 = pneg %p135
        %p433 = pneg %p132
        %p434 = pneg %p156
        %p435 = pneg %p153
        %p436 = pneg %p177
        %p437 = pneg %p174
        %p438 = pneg %p198
        %p439 = pneg %p195
        %p440 = pneg %p219
        %p441 = pneg %p216
        %p442 = pneg %p240
        %p443 = pneg %p237
        %p444 = pneg %p266
        %p445 = pneg %p263
        %s446 = sand.u32 %s253, 1
        %s447 = scalar_lea.sflag [#allocation4], %s446
        %s448 = sand.u32 %s253, 1
        %s449 = smul.addr %s448, 128
        %s450 = scalar_lea.vmem [#allocation13], %s449
        %v451 = vld [vmem:[%s394] sm:$0xff]
        %v452 = vld [vmem:[%s394 + $0x8] sm:$0xff]
        %v453 = vld [vmem:[%s394 + $0x10] sm:$0xff]
        %v454 = vld [vmem:[%s394 + $0x18] sm:$0xff]
        %v455 = vld [vmem:[%s394 + $0x20] sm:$0xff]
        %v456 = vld [vmem:[%s394 + $0x28] sm:$0xff]
        %v457 = vld [vmem:[%s394 + $0x30] sm:$0xff]
        %v458 = vld [vmem:[%s394 + $0x38] sm:$0xff]
        %v459 = vld [vmem:[%s394 + $0x40] sm:$0xff]
        %v460 = vld [vmem:[%s394 + $0x48] sm:$0xff]
        %v461 = vld [vmem:[%s394 + $0x50] sm:$0xff]
        %v462 = vld [vmem:[%s394 + $0x58] sm:$0xff]
        %v463 = vld [vmem:[%s394 + $0x60] sm:$0xff]
        %v464 = vld [vmem:[%s394 + $0x68] sm:$0xff]
        %v465 = vld [vmem:[%s394 + $0x70] sm:$0xff]
        %v466 = vld [vmem:[%s394 + $0x78] sm:$0xff]
        %v467 = vld [vmem:[#allocation5] sm:$0xff]
        %v468 = vld [vmem:[#allocation5 + $0x8] sm:$0xff]
        %v469 = vld [vmem:[#allocation5 + $0x10] sm:$0xff]
        %v470 = vld [vmem:[#allocation5 + $0x18] sm:$0xff]
        %v471 = vld [vmem:[#allocation5 + $0x20] sm:$0xff]
        %v472 = vld [vmem:[#allocation5 + $0x28] sm:$0xff]
        %v473 = vld [vmem:[#allocation5 + $0x30] sm:$0xff]
        %v474 = vld [vmem:[#allocation5 + $0x38] sm:$0xff]
        %v475 = vld [vmem:[#allocation5 + $0x40] sm:$0xff]
        %v476 = vld [vmem:[#allocation5 + $0x48] sm:$0xff]
        %v477 = vld [vmem:[#allocation5 + $0x50] sm:$0xff]
        %v478 = vld [vmem:[#allocation5 + $0x58] sm:$0xff]
        %v479 = vld [vmem:[#allocation5 + $0x60] sm:$0xff]
        %v480 = vld [vmem:[#allocation5 + $0x68] sm:$0xff]
        %v481 = vld [vmem:[#allocation5 + $0x70] sm:$0xff]
        %v482 = vld [vmem:[#allocation5 + $0x78] sm:$0xff]
        %v483 = vld [vmem:[#allocation8] sm:$0xff]
        %v484 = vld [vmem:[#allocation8 + $0x8] sm:$0xff]
        %v485 = vld [vmem:[#allocation8 + $0x10] sm:$0xff]
        %v486 = vld [vmem:[#allocation8 + $0x18] sm:$0xff]
        %v487 = vld [vmem:[#allocation8 + $0x20] sm:$0xff]
        %v488 = vld [vmem:[#allocation8 + $0x28] sm:$0xff]
        %v489 = vld [vmem:[#allocation8 + $0x30] sm:$0xff]
        %v490 = vld [vmem:[#allocation8 + $0x38] sm:$0xff]
        %v491 = vld [vmem:[#allocation8 + $0x40] sm:$0xff]
        %v492 = vld [vmem:[#allocation8 + $0x48] sm:$0xff]
        %v493 = vld [vmem:[#allocation8 + $0x50] sm:$0xff]
        %v494 = vld [vmem:[#allocation8 + $0x58] sm:$0xff]
        %v495 = vld [vmem:[#allocation8 + $0x60] sm:$0xff]
        %v496 = vld [vmem:[#allocation8 + $0x68] sm:$0xff]
        %v497 = vld [vmem:[#allocation8 + $0x70] sm:$0xff]
        %v498 = vld [vmem:[#allocation8 + $0x78] sm:$0xff]
        %v499 = vld [vmem:[#allocation8 + $0x80] sm:$0xff]
        %v500 = vld [vmem:[#allocation8 + $0x88] sm:$0xff]
        %v501 = vld [vmem:[#allocation8 + $0x90] sm:$0xff]
        %v502 = vld [vmem:[#allocation8 + $0x98] sm:$0xff]
        %v503 = vld [vmem:[#allocation8 + $0xa0] sm:$0xff]
        %v504 = vld [vmem:[#allocation8 + $0xa8] sm:$0xff]
        %v505 = vld [vmem:[#allocation8 + $0xb0] sm:$0xff]
        %v506 = vld [vmem:[#allocation8 + $0xb8] sm:$0xff]
        %v507 = vld [vmem:[#allocation8 + $0xc0] sm:$0xff]
        %v508 = vld [vmem:[#allocation8 + $0xc8] sm:$0xff]
        %v509 = vld [vmem:[#allocation8 + $0xd0] sm:$0xff]
        %v510 = vld [vmem:[#allocation8 + $0xd8] sm:$0xff]
        %v511 = vld [vmem:[#allocation8 + $0xe0] sm:$0xff]
        %v512 = vld [vmem:[#allocation8 + $0xe8] sm:$0xff]
        %v513 = vld [vmem:[#allocation8 + $0xf0] sm:$0xff]
        %v514 = vld [vmem:[#allocation8 + $0xf8] sm:$0xff]
        %v515 = vld [vmem:[#allocation8 + $0x100] sm:$0xff]
        %v516 = vld [vmem:[#allocation8 + $0x108] sm:$0xff]
        %v517 = vld [vmem:[#allocation8 + $0x110] sm:$0xff]
        %v518 = vld [vmem:[#allocation8 + $0x118] sm:$0xff]
        %v519 = vld [vmem:[#allocation8 + $0x120] sm:$0xff]
        %v520 = vld [vmem:[#allocation8 + $0x128] sm:$0xff]
        %v521 = vld [vmem:[#allocation8 + $0x130] sm:$0xff]
        %v522 = vld [vmem:[#allocation8 + $0x138] sm:$0xff]
        %v523 = vld [vmem:[#allocation8 + $0x140] sm:$0xff]
        %v524 = vld [vmem:[#allocation8 + $0x148] sm:$0xff]
        %v525 = vld [vmem:[#allocation8 + $0x150] sm:$0xff]
        %v526 = vld [vmem:[#allocation8 + $0x158] sm:$0xff]
        %v527 = vld [vmem:[#allocation8 + $0x160] sm:$0xff]
        %v528 = vld [vmem:[#allocation8 + $0x168] sm:$0xff]
        %v529 = vld [vmem:[#allocation8 + $0x170] sm:$0xff]
        %v530 = vld [vmem:[#allocation8 + $0x178] sm:$0xff]
        %531 = vmatprep.subr.mxu0 %v484
        %532 = vmatpush1.msra.mxu0 %v483
        %533 = vmatprep.subr.mxu0 %v487
        %534 = vmatpush1.msra.mxu0 %v486
        %535 = vmatprep.subr.mxu0 %v490
        %536 = vmatpush1.msra.mxu0 %v489
        %537 = vmatprep.subr.mxu0 %v493
        %538 = vmatpush1.msra.mxu0 %v492
        %539 = vmatprep.subr.mxu0 %v496
        %540 = vmatpush1.msra.mxu0 %v495
        %541 = vmatprep.subr.mxu0 %v499
        %542 = vmatpush1.msra.mxu0 %v498
        %543 = vmatprep.subr.mxu0 %v502
        %544 = vmatpush1.msra.mxu0 %v501
        %545 = vmatprep.subr.mxu0 %v505
        %546 = vmatpush1.msra.mxu0 %v504
        %547 = vmatprep.subr.mxu0 %v508
        %548 = vmatpush1.msra.mxu0 %v507
        %549 = vmatprep.subr.mxu0 %v511
        %550 = vmatpush1.msra.mxu0 %v510
        %551 = vmatprep.subr.mxu0 %v514
        %552 = vmatpush1.msra.mxu0 %v513
        %553 = vmatprep.subr.mxu0 %v517
        %554 = vmatpush1.msra.mxu0 %v516
        %555 = vmatprep.subr.mxu0 %v520
        %556 = vmatpush1.msra.mxu0 %v519
        %557 = vmatprep.subr.mxu0 %v523
        %558 = vmatpush1.msra.mxu0 %v522
        %559 = vmatprep.subr.mxu0 %v526
        %560 = vmatpush1.msra.mxu0 %v525
        %561 = vmatprep.subr.mxu0 %v529
        %562 = vmatpush1.msra.mxu0 %v528
        %563 = vmatprep.subr.mxu0 0.0
        %564 = vmatpush1.msra.mxu0 0.0
        %565 = vmatprep.subr.mxu0 0.0
        %566 = vmatpush1.msra.mxu0 0.0
        %567 = vmatprep.subr.mxu0 0.0
        %568 = vmatpush1.msra.mxu0 0.0
        %569 = vmatprep.subr.mxu0 0.0
        %570 = vmatpush1.msra.mxu0 0.0
        %571 = vmatprep.subr.mxu0 0.0
        %572 = vmatpush1.msra.mxu0 0.0
        %573 = vmatprep.subr.mxu0 0.0
        %574 = vmatpush1.msra.mxu0 0.0
        %575 = vmatprep.subr.mxu0 0.0
        %576 = vmatpush1.msra.mxu0 0.0
        %577 = vmatprep.subr.mxu0 0.0
        %578 = vmatpush1.msra.mxu0 0.0
        %579 = vmatprep.subr.mxu0 0.0
        %580 = vmatpush1.msra.mxu0 0.0
        %581 = vmatprep.subr.mxu0 0.0
        %582 = vmatpush1.msra.mxu0 0.0
        %583 = vmatprep.subr.mxu0 0.0
        %584 = vmatpush1.msra.mxu0 0.0
        %585 = vmatprep.subr.mxu0 0.0
        %586 = vmatpush1.msra.mxu0 0.0
        %587 = vmatprep.subr.mxu0 0.0
        %588 = vmatpush1.msra.mxu0 0.0
        %589 = vmatprep.subr.mxu0 0.0
        %590 = vmatpush1.msra.mxu0 0.0
        %591 = vmatprep.subr.mxu0 0.0
        %592 = vmatpush1.msra.mxu0 0.0
        %593 = vmatprep.subr.mxu0 0.0
        %594 = vmatpush1.msra.mxu0 0.0
        %595 = vmatprep.mubr.f32.mxu0 0.0
        %596 = vmatmul.mubr.f32.gmra.mrb[0].mxu0 %v451
        %v597 = vpop.f32.mrb[0].mxu0
        %v598 = vadd.f32 0.0, %v597
        %v599 = vpop.f32.mrb[0].mxu0
        %v600 = vadd.f32 0.0, %v599
        %601 = vmatprep.mubr.f32.mxu0 0.0
        %602 = vmatmul.mubr.f32.gmra.mrb[0].mxu0 %v452
        %v603 = vpop.f32.mrb[0].mxu0
        %v604 = vadd.f32 0.0, %v603
        %v605 = vpop.f32.mrb[0].mxu0
        %v606 = vadd.f32 0.0, %v605
        %607 = vmatprep.mubr.f32.mxu0 0.0
        %608 = vmatmul.mubr.f32.gmra.mrb[0].mxu0 %v453
        %v609 = vpop.f32.mrb[0].mxu0
        %v610 = vadd.f32 0.0, %v609
        %v611 = vpop.f32.mrb[0].mxu0
        %v612 = vadd.f32 0.0, %v611
        %613 = vmatprep.mubr.f32.mxu0 0.0
        %614 = vmatmul.mubr.f32.gmra.mrb[0].mxu0 %v454
        %v615 = vpop.f32.mrb[0].mxu0
        %v616 = vadd.f32 0.0, %v615
        %v617 = vpop.f32.mrb[0].mxu0
        %v618 = vadd.f32 0.0, %v617
        %619 = vmatprep.mubr.f32.mxu0 0.0
        %620 = vmatmul.mubr.f32.gmra.mrb[0].mxu0 %v455
        %v621 = vpop.f32.mrb[0].mxu0
        %v622 = vadd.f32 0.0, %v621
        %v623 = vpop.f32.mrb[0].mxu0
        %v624 = vadd.f32 0.0, %v623
        %625 = vmatprep.mubr.f32.mxu0 0.0
        %626 = vmatmul.mubr.f32.gmra.mrb[0].mxu0 %v456
        %v627 = vpop.f32.mrb[0].mxu0
        %v628 = vadd.f32 0.0, %v627
        %v629 = vpop.f32.mrb[0].mxu0
        %v630 = vadd.f32 0.0, %v629
        %631 = vmatprep.mubr.f32.mxu0 0.0
        %632 = vmatmul.mubr.f32.gmra.mrb[0].mxu0 %v457
        %v633 = vpop.f32.mrb[0].mxu0
        %v634 = vadd.f32 0.0, %v633
        %v635 = vpop.f32.mrb[0].mxu0
        %v636 = vadd.f32 0.0, %v635
        %637 = vmatprep.mubr.f32.mxu0 0.0
        %638 = vmatmul.mubr.f32.gmra.mrb[0].mxu0 %v458
        %v639 = vpop.f32.mrb[0].mxu0
        %v640 = vadd.f32 0.0, %v639
        %v641 = vpop.f32.mrb[0].mxu0
        %v642 = vadd.f32 0.0, %v641
        %643 = vmatprep.mubr.f32.mxu0 0.0
        %644 = vmatmul.mubr.f32.gmra.mrb[0].mxu0 %v459
        %v645 = vpop.f32.mrb[0].mxu0
        %v646 = vadd.f32 0.0, %v645
        %v647 = vpop.f32.mrb[0].mxu0
        %v648 = vadd.f32 0.0, %v647
        %649 = vmatprep.mubr.f32.mxu0 0.0
        %650 = vmatmul.mubr.f32.gmra.mrb[0].mxu0 %v460
        %v651 = vpop.f32.mrb[0].mxu0
        %v652 = vadd.f32 0.0, %v651
        %v653 = vpop.f32.mrb[0].mxu0
        %v654 = vadd.f32 0.0, %v653
        %655 = vmatprep.mubr.f32.mxu0 0.0
        %656 = vmatmul.mubr.f32.gmra.mrb[0].mxu0 %v461
        %v657 = vpop.f32.mrb[0].mxu0
        %v658 = vadd.f32 0.0, %v657
        %v659 = vpop.f32.mrb[0].mxu0
        %v660 = vadd.f32 0.0, %v659
        %661 = vmatprep.mubr.f32.mxu0 0.0
        %662 = vmatmul.mubr.f32.gmra.mrb[0].mxu0 %v462
        %v663 = vpop.f32.mrb[0].mxu0
        %v664 = vadd.f32 0.0, %v663
        %v665 = vpop.f32.mrb[0].mxu0
        %v666 = vadd.f32 0.0, %v665
        %667 = vmatprep.mubr.f32.mxu0 0.0
        %668 = vmatmul.mubr.f32.gmra.mrb[0].mxu0 %v463
        %v669 = vpop.f32.mrb[0].mxu0
        %v670 = vadd.f32 0.0, %v669
        %v671 = vpop.f32.mrb[0].mxu0
        %v672 = vadd.f32 0.0, %v671
        %673 = vmatprep.mubr.f32.mxu0 0.0
        %674 = vmatmul.mubr.f32.gmra.mrb[0].mxu0 %v464
        %v675 = vpop.f32.mrb[0].mxu0
        %v676 = vadd.f32 0.0, %v675
        %v677 = vpop.f32.mrb[0].mxu0
        %v678 = vadd.f32 0.0, %v677
        %679 = vmatprep.mubr.f32.mxu0 0.0
        %680 = vmatmul.mubr.f32.gmra.mrb[0].mxu0 %v465
        %v681 = vpop.f32.mrb[0].mxu0
        %v682 = vadd.f32 0.0, %v681
        %v683 = vpop.f32.mrb[0].mxu0
        %v684 = vadd.f32 0.0, %v683
        %685 = vmatprep.mubr.f32.mxu0 0.0
        %686 = vmatmul.mubr.f32.gmra.mrb[0].mxu0 %v466
        %v687 = vpop.f32.mrb[0].mxu0
        %v688 = vadd.f32 0.0, %v687
        %v689 = vpop.f32.mrb[0].mxu0
        %v690 = vadd.f32 0.0, %v689
        %691 = vdwg.mxu0
        %692 = vmatprep.subr.mxu0 0.0
        %693 = vmatpush1.msra.mxu0 %v485
        %694 = vmatprep.subr.mxu0 0.0
        %695 = vmatpush1.msra.mxu0 %v488
        %696 = vmatprep.subr.mxu0 0.0
        %697 = vmatpush1.msra.mxu0 %v491
        %698 = vmatprep.subr.mxu0 0.0
        %699 = vmatpush1.msra.mxu0 %v494
        %700 = vmatprep.subr.mxu0 0.0
        %701 = vmatpush1.msra.mxu0 %v497
        %702 = vmatprep.subr.mxu0 0.0
        %703 = vmatpush1.msra.mxu0 %v500
        %704 = vmatprep.subr.mxu0 0.0
        %705 = vmatpush1.msra.mxu0 %v503
        %706 = vmatprep.subr.mxu0 0.0
        %707 = vmatpush1.msra.mxu0 %v506
        %708 = vmatprep.subr.mxu0 0.0
        %709 = vmatpush1.msra.mxu0 %v509
        %710 = vmatprep.subr.mxu0 0.0
        %711 = vmatpush1.msra.mxu0 %v512
        %712 = vmatprep.subr.mxu0 0.0
        %713 = vmatpush1.msra.mxu0 %v515
        %714 = vmatprep.subr.mxu0 0.0
        %715 = vmatpush1.msra.mxu0 %v518
        %716 = vmatprep.subr.mxu0 0.0
        %717 = vmatpush1.msra.mxu0 %v521
        %718 = vmatprep.subr.mxu0 0.0
        %719 = vmatpush1.msra.mxu0 %v524
        %720 = vmatprep.subr.mxu0 0.0
        %721 = vmatpush1.msra.mxu0 %v527
        %722 = vmatprep.subr.mxu0 0.0
        %723 = vmatpush1.msra.mxu0 %v530
        %724 = vmatprep.subr.mxu0 0.0
        %725 = vmatpush1.msra.mxu0 0.0
        %726 = vmatprep.subr.mxu0 0.0
        %727 = vmatpush1.msra.mxu0 0.0
        %728 = vmatprep.subr.mxu0 0.0
        %729 = vmatpush1.msra.mxu0 0.0
        %730 = vmatprep.subr.mxu0 0.0
        %731 = vmatpush1.msra.mxu0 0.0
        %732 = vmatprep.subr.mxu0 0.0
        %733 = vmatpush1.msra.mxu0 0.0
        %734 = vmatprep.subr.mxu0 0.0
        %735 = vmatpush1.msra.mxu0 0.0
        %736 = vmatprep.subr.mxu0 0.0
        %737 = vmatpush1.msra.mxu0 0.0
        %738 = vmatprep.subr.mxu0 0.0
        %739 = vmatpush1.msra.mxu0 0.0
        %740 = vmatprep.subr.mxu0 0.0
        %741 = vmatpush1.msra.mxu0 0.0
        %742 = vmatprep.subr.mxu0 0.0
        %743 = vmatpush1.msra.mxu0 0.0
        %744 = vmatprep.subr.mxu0 0.0
        %745 = vmatpush1.msra.mxu0 0.0
        %746 = vmatprep.subr.mxu0 0.0
        %747 = vmatpush1.msra.mxu0 0.0
        %748 = vmatprep.subr.mxu0 0.0
        %749 = vmatpush1.msra.mxu0 0.0
        %750 = vmatprep.subr.mxu0 0.0
        %751 = vmatpush1.msra.mxu0 0.0
        %752 = vmatprep.subr.mxu0 0.0
        %753 = vmatpush1.msra.mxu0 0.0
        %754 = vmatprep.subr.mxu0 0.0
        %755 = vmatpush1.msra.mxu0 0.0
        %756 = vmatprep.mubr.f32.mxu0 0.0
        %757 = vmatmul.mubr.f32.gmra.mrb[0].mxu0 %v451
        %v758 = vpop.f32.mrb[0].mxu0
        %v759 = vadd.f32 0.0, %v758
        %v760 = vpop.f32.mrb[0].mxu0
        %761 = vmatprep.mubr.f32.mxu0 0.0
        %762 = vmatmul.mubr.f32.gmra.mrb[0].mxu0 %v452
        %v763 = vpop.f32.mrb[0].mxu0
        %v764 = vadd.f32 0.0, %v763
        %v765 = vpop.f32.mrb[0].mxu0
        %766 = vmatprep.mubr.f32.mxu0 0.0
        %767 = vmatmul.mubr.f32.gmra.mrb[0].mxu0 %v453
        %v768 = vpop.f32.mrb[0].mxu0
        %v769 = vadd.f32 0.0, %v768
        %v770 = vpop.f32.mrb[0].mxu0
        %771 = vmatprep.mubr.f32.mxu0 0.0
        %772 = vmatmul.mubr.f32.gmra.mrb[0].mxu0 %v454
        %v773 = vpop.f32.mrb[0].mxu0
        %v774 = vadd.f32 0.0, %v773
        %v775 = vpop.f32.mrb[0].mxu0
        %776 = vmatprep.mubr.f32.mxu0 0.0
        %777 = vmatmul.mubr.f32.gmra.mrb[0].mxu0 %v455
        %v778 = vpop.f32.mrb[0].mxu0
        %v779 = vadd.f32 0.0, %v778
        %v780 = vpop.f32.mrb[0].mxu0
        %781 = vmatprep.mubr.f32.mxu0 0.0
        %782 = vmatmul.mubr.f32.gmra.mrb[0].mxu0 %v456
        %v783 = vpop.f32.mrb[0].mxu0
        %v784 = vadd.f32 0.0, %v783
        %v785 = vpop.f32.mrb[0].mxu0
        %786 = vmatprep.mubr.f32.mxu0 0.0
        %787 = vmatmul.mubr.f32.gmra.mrb[0].mxu0 %v457
        %v788 = vpop.f32.mrb[0].mxu0
        %v789 = vadd.f32 0.0, %v788
        %v790 = vpop.f32.mrb[0].mxu0
        %791 = vmatprep.mubr.f32.mxu0 0.0
        %792 = vmatmul.mubr.f32.gmra.mrb[0].mxu0 %v458
        %v793 = vpop.f32.mrb[0].mxu0
        %v794 = vadd.f32 0.0, %v793
        %v795 = vpop.f32.mrb[0].mxu0
        %796 = vmatprep.mubr.f32.mxu0 0.0
        %797 = vmatmul.mubr.f32.gmra.mrb[0].mxu0 %v459
        %v798 = vpop.f32.mrb[0].mxu0
        %v799 = vadd.f32 0.0, %v798
        %v800 = vpop.f32.mrb[0].mxu0
        %801 = vmatprep.mubr.f32.mxu0 0.0
        %802 = vmatmul.mubr.f32.gmra.mrb[0].mxu0 %v460
        %v803 = vpop.f32.mrb[0].mxu0
        %v804 = vadd.f32 0.0, %v803
        %v805 = vpop.f32.mrb[0].mxu0
        %806 = vmatprep.mubr.f32.mxu0 0.0
        %807 = vmatmul.mubr.f32.gmra.mrb[0].mxu0 %v461
        %v808 = vpop.f32.mrb[0].mxu0
        %v809 = vadd.f32 0.0, %v808
        %v810 = vpop.f32.mrb[0].mxu0
        %811 = vmatprep.mubr.f32.mxu0 0.0
        %812 = vmatmul.mubr.f32.gmra.mrb[0].mxu0 %v462
        %v813 = vpop.f32.mrb[0].mxu0
        %v814 = vadd.f32 0.0, %v813
        %v815 = vpop.f32.mrb[0].mxu0
        %816 = vmatprep.mubr.f32.mxu0 0.0
        %817 = vmatmul.mubr.f32.gmra.mrb[0].mxu0 %v463
        %v818 = vpop.f32.mrb[0].mxu0
        %v819 = vadd.f32 0.0, %v818
        %v820 = vpop.f32.mrb[0].mxu0
        %821 = vmatprep.mubr.f32.mxu0 0.0
        %822 = vmatmul.mubr.f32.gmra.mrb[0].mxu0 %v464
        %v823 = vpop.f32.mrb[0].mxu0
        %v824 = vadd.f32 0.0, %v823
        %v825 = vpop.f32.mrb[0].mxu0
        %826 = vmatprep.mubr.f32.mxu0 0.0
        %827 = vmatmul.mubr.f32.gmra.mrb[0].mxu0 %v465
        %v828 = vpop.f32.mrb[0].mxu0
        %v829 = vadd.f32 0.0, %v828
        %v830 = vpop.f32.mrb[0].mxu0
        %831 = vmatprep.mubr.f32.mxu0 0.0
        %832 = vmatmul.mubr.f32.gmra.mrb[0].mxu0 %v466
        %v833 = vpop.f32.mrb[0].mxu0
        %v834 = vadd.f32 0.0, %v833
        %v835 = vpop.f32.mrb[0].mxu0
        %836 = vdwg.mxu0
        %v837 = vld [vmem:[#allocation10] sm:$0xff]
        %v838 = vld [vmem:[#allocation10 + $0x8] sm:$0xff]
        %v839 = vld [vmem:[#allocation10 + $0x10] sm:$0xff]
        %v840 = vld [vmem:[#allocation10 + $0x18] sm:$0xff]
        %v841 = vld [vmem:[#allocation10 + $0x20] sm:$0xff]
        %v842 = vld [vmem:[#allocation10 + $0x28] sm:$0xff]
        %v843 = vld [vmem:[#allocation10 + $0x30] sm:$0xff]
        %v844 = vld [vmem:[#allocation10 + $0x38] sm:$0xff]
        %v845 = vld [vmem:[#allocation10 + $0x40] sm:$0xff]
        %v846 = vld [vmem:[#allocation10 + $0x48] sm:$0xff]
        %v847 = vld [vmem:[#allocation10 + $0x50] sm:$0xff]
        %v848 = vld [vmem:[#allocation10 + $0x58] sm:$0xff]
        %v849 = vld [vmem:[#allocation10 + $0x60] sm:$0xff]
        %v850 = vld [vmem:[#allocation10 + $0x68] sm:$0xff]
        %v851 = vld [vmem:[#allocation10 + $0x70] sm:$0xff]
        %v852 = vld [vmem:[#allocation10 + $0x78] sm:$0xff]
        %853 = vmatprep.subr.mxu0 0.0
        %854 = vmatpush1.msra.mxu0 %v837
        %855 = vmatprep.subr.mxu0 0.0
        %856 = vmatpush1.msra.mxu0 %v838
        %857 = vmatprep.subr.mxu0 0.0
        %858 = vmatpush1.msra.mxu0 %v839
        %859 = vmatprep.subr.mxu0 0.0
        %860 = vmatpush1.msra.mxu0 %v840
        %861 = vmatprep.subr.mxu0 0.0
        %862 = vmatpush1.msra.mxu0 %v841
        %863 = vmatprep.subr.mxu0 0.0
        %864 = vmatpush1.msra.mxu0 %v842
        %865 = vmatprep.subr.mxu0 0.0
        %866 = vmatpush1.msra.mxu0 %v843
        %867 = vmatprep.subr.mxu0 0.0
        %868 = vmatpush1.msra.mxu0 %v844
        %869 = vmatprep.subr.mxu0 0.0
        %870 = vmatpush1.msra.mxu0 %v845
        %871 = vmatprep.subr.mxu0 0.0
        %872 = vmatpush1.msra.mxu0 %v846
        %873 = vmatprep.subr.mxu0 0.0
        %874 = vmatpush1.msra.mxu0 %v847
        %875 = vmatprep.subr.mxu0 0.0
        %876 = vmatpush1.msra.mxu0 %v848
        %877 = vmatprep.subr.mxu0 0.0
        %878 = vmatpush1.msra.mxu0 %v849
        %879 = vmatprep.subr.mxu0 0.0
        %880 = vmatpush1.msra.mxu0 %v850
        %881 = vmatprep.subr.mxu0 0.0
        %882 = vmatpush1.msra.mxu0 %v851
        %883 = vmatprep.subr.mxu0 0.0
        %884 = vmatpush1.msra.mxu0 %v852
        %885 = vmatprep.subr.mxu0 0.0
        %886 = vmatpush1.msra.mxu0 0.0
        %887 = vmatprep.subr.mxu0 0.0
        %888 = vmatpush1.msra.mxu0 0.0
        %889 = vmatprep.subr.mxu0 0.0
        %890 = vmatpush1.msra.mxu0 0.0
        %891 = vmatprep.subr.mxu0 0.0
        %892 = vmatpush1.msra.mxu0 0.0
        %893 = vmatprep.subr.mxu0 0.0
        %894 = vmatpush1.msra.mxu0 0.0
        %895 = vmatprep.subr.mxu0 0.0
        %896 = vmatpush1.msra.mxu0 0.0
        %897 = vmatprep.subr.mxu0 0.0
        %898 = vmatpush1.msra.mxu0 0.0
        %899 = vmatprep.subr.mxu0 0.0
        %900 = vmatpush1.msra.mxu0 0.0
        %901 = vmatprep.subr.mxu0 0.0
        %902 = vmatpush1.msra.mxu0 0.0
        %903 = vmatprep.subr.mxu0 0.0
        %904 = vmatpush1.msra.mxu0 0.0
        %905 = vmatprep.subr.mxu0 0.0
        %906 = vmatpush1.msra.mxu0 0.0
        %907 = vmatprep.subr.mxu0 0.0
        %908 = vmatpush1.msra.mxu0 0.0
        %909 = vmatprep.subr.mxu0 0.0
        %910 = vmatpush1.msra.mxu0 0.0
        %911 = vmatprep.subr.mxu0 0.0
        %912 = vmatpush1.msra.mxu0 0.0
        %913 = vmatprep.subr.mxu0 0.0
        %914 = vmatpush1.msra.mxu0 0.0
        %915 = vmatprep.subr.mxu0 0.0
        %916 = vmatpush1.msra.mxu0 0.0
        %917 = vmatprep.mubr.f32.mxu0 0.0
        %918 = vmatmul.mubr.f32.gmra.mrb[0].mxu0 %v467
        %v919 = vpop.f32.mrb[0].mxu0
        %v920 = vadd.f32 0.0, %v919
        %v921 = vpop.f32.mrb[0].mxu0
        %922 = vmatprep.mubr.f32.mxu0 0.0
        %923 = vmatmul.mubr.f32.gmra.mrb[0].mxu0 %v468
        %v924 = vpop.f32.mrb[0].mxu0
        %v925 = vadd.f32 0.0, %v924
        %v926 = vpop.f32.mrb[0].mxu0
        %927 = vmatprep.mubr.f32.mxu0 0.0
        %928 = vmatmul.mubr.f32.gmra.mrb[0].mxu0 %v469
        %v929 = vpop.f32.mrb[0].mxu0
        %v930 = vadd.f32 0.0, %v929
        %v931 = vpop.f32.mrb[0].mxu0
        %932 = vmatprep.mubr.f32.mxu0 0.0
        %933 = vmatmul.mubr.f32.gmra.mrb[0].mxu0 %v470
        %v934 = vpop.f32.mrb[0].mxu0
        %v935 = vadd.f32 0.0, %v934
        %v936 = vpop.f32.mrb[0].mxu0
        %937 = vmatprep.mubr.f32.mxu0 0.0
        %938 = vmatmul.mubr.f32.gmra.mrb[0].mxu0 %v471
        %v939 = vpop.f32.mrb[0].mxu0
        %v940 = vadd.f32 0.0, %v939
        %v941 = vpop.f32.mrb[0].mxu0
        %942 = vmatprep.mubr.f32.mxu0 0.0
        %943 = vmatmul.mubr.f32.gmra.mrb[0].mxu0 %v472
        %v944 = vpop.f32.mrb[0].mxu0
        %v945 = vadd.f32 0.0, %v944
        %v946 = vpop.f32.mrb[0].mxu0
        %947 = vmatprep.mubr.f32.mxu0 0.0
        %948 = vmatmul.mubr.f32.gmra.mrb[0].mxu0 %v473
        %v949 = vpop.f32.mrb[0].mxu0
        %v950 = vadd.f32 0.0, %v949
        %v951 = vpop.f32.mrb[0].mxu0
        %952 = vmatprep.mubr.f32.mxu0 0.0
        %953 = vmatmul.mubr.f32.gmra.mrb[0].mxu0 %v474
        %v954 = vpop.f32.mrb[0].mxu0
        %v955 = vadd.f32 0.0, %v954
        %v956 = vpop.f32.mrb[0].mxu0
        %957 = vmatprep.mubr.f32.mxu0 0.0
        %958 = vmatmul.mubr.f32.gmra.mrb[0].mxu0 %v475
        %v959 = vpop.f32.mrb[0].mxu0
        %v960 = vadd.f32 0.0, %v959
        %v961 = vpop.f32.mrb[0].mxu0
        %962 = vmatprep.mubr.f32.mxu0 0.0
        %963 = vmatmul.mubr.f32.gmra.mrb[0].mxu0 %v476
        %v964 = vpop.f32.mrb[0].mxu0
        %v965 = vadd.f32 0.0, %v964
        %v966 = vpop.f32.mrb[0].mxu0
        %967 = vmatprep.mubr.f32.mxu0 0.0
        %968 = vmatmul.mubr.f32.gmra.mrb[0].mxu0 %v477
        %v969 = vpop.f32.mrb[0].mxu0
        %v970 = vadd.f32 0.0, %v969
        %v971 = vpop.f32.mrb[0].mxu0
        %972 = vmatprep.mubr.f32.mxu0 0.0
        %973 = vmatmul.mubr.f32.gmra.mrb[0].mxu0 %v478
        %v974 = vpop.f32.mrb[0].mxu0
        %v975 = vadd.f32 0.0, %v974
        %v976 = vpop.f32.mrb[0].mxu0
        %977 = vmatprep.mubr.f32.mxu0 0.0
        %978 = vmatmul.mubr.f32.gmra.mrb[0].mxu0 %v479
        %v979 = vpop.f32.mrb[0].mxu0
        %v980 = vadd.f32 0.0, %v979
        %v981 = vpop.f32.mrb[0].mxu0
        %982 = vmatprep.mubr.f32.mxu0 0.0
        %983 = vmatmul.mubr.f32.gmra.mrb[0].mxu0 %v480
        %v984 = vpop.f32.mrb[0].mxu0
        %v985 = vadd.f32 0.0, %v984
        %v986 = vpop.f32.mrb[0].mxu0
        %987 = vmatprep.mubr.f32.mxu0 0.0
        %988 = vmatmul.mubr.f32.gmra.mrb[0].mxu0 %v481
        %v989 = vpop.f32.mrb[0].mxu0
        %v990 = vadd.f32 0.0, %v989
        %v991 = vpop.f32.mrb[0].mxu0
        %992 = vmatprep.mubr.f32.mxu0 0.0
        %993 = vmatmul.mubr.f32.gmra.mrb[0].mxu0 %v482
        %v994 = vpop.f32.mrb[0].mxu0
        %v995 = vadd.f32 0.0, %v994
        %v996 = vpop.f32.mrb[0].mxu0
        %997 = vdwg.mxu0
        %v998 = vld [vmem:[%s6] sm:$0x1]
        %v1000 = vlaneseq
        %v1001 = vshrl.u32 %v1000, 7
        %v1002 = vsub.s32 0, %v1001
        %v1003 = vrot.slane %v998, %v1002
        %v1005 = vadd.f32 %v598, %v1003
        %v1006 = vadd.f32 %v604, %v1003
        %v1007 = vadd.f32 %v610, %v1003
        %v1008 = vadd.f32 %v616, %v1003
        %v1009 = vadd.f32 %v622, %v1003
        %v1010 = vadd.f32 %v628, %v1003
        %v1011 = vadd.f32 %v634, %v1003
        %v1012 = vadd.f32 %v640, %v1003
        %v1013 = vadd.f32 %v646, %v1003
        %v1014 = vadd.f32 %v652, %v1003
        %v1015 = vadd.f32 %v658, %v1003
        %v1016 = vadd.f32 %v664, %v1003
        %v1017 = vadd.f32 %v670, %v1003
        %v1018 = vadd.f32 %v676, %v1003
        %v1019 = vadd.f32 %v682, %v1003
        %v1020 = vadd.f32 %v688, %v1003
        %v1021 = vld [vmem:[%s7] sm:$0x1]
        %v1023 = vlaneseq
        %v1024 = vshrl.u32 %v1023, 7
        %v1025 = vsub.s32 0, %v1024
        %v1026 = vrot.slane %v1021, %v1025
        %v1028 = vadd.f32 %v598, %v1026
        %v1029 = vadd.f32 %v604, %v1026
        %v1030 = vadd.f32 %v610, %v1026
        %v1031 = vadd.f32 %v616, %v1026
        %v1032 = vadd.f32 %v622, %v1026
        %v1033 = vadd.f32 %v628, %v1026
        %v1034 = vadd.f32 %v634, %v1026
        %v1035 = vadd.f32 %v640, %v1026
        %v1036 = vadd.f32 %v646, %v1026
        %v1037 = vadd.f32 %v652, %v1026
        %v1038 = vadd.f32 %v658, %v1026
        %v1039 = vadd.f32 %v664, %v1026
        %v1040 = vadd.f32 %v670, %v1026
        %v1041 = vadd.f32 %v676, %v1026
        %v1042 = vadd.f32 %v682, %v1026
        %v1043 = vadd.f32 %v688, %v1026
        %v1044 = vld [vmem:[#allocation7] sm:$0xff]
        %v1045 = vld [vmem:[#allocation7 + $0x8] sm:$0xff]
        %v1046 = vld [vmem:[#allocation7 + $0x10] sm:$0xff]
        %v1047 = vld [vmem:[#allocation7 + $0x18] sm:$0xff]
        %v1048 = vld [vmem:[#allocation7 + $0x20] sm:$0xff]
        %v1049 = vld [vmem:[#allocation7 + $0x28] sm:$0xff]
        %v1050 = vld [vmem:[#allocation7 + $0x30] sm:$0xff]
        %v1051 = vld [vmem:[#allocation7 + $0x38] sm:$0xff]
        %v1052 = vld [vmem:[#allocation7 + $0x40] sm:$0xff]
        %v1053 = vld [vmem:[#allocation7 + $0x48] sm:$0xff]
        %v1054 = vld [vmem:[#allocation7 + $0x50] sm:$0xff]
        %v1055 = vld [vmem:[#allocation7 + $0x58] sm:$0xff]
        %v1056 = vld [vmem:[#allocation7 + $0x60] sm:$0xff]
        %v1057 = vld [vmem:[#allocation7 + $0x68] sm:$0xff]
        %v1058 = vld [vmem:[#allocation7 + $0x70] sm:$0xff]
        %v1059 = vld [vmem:[#allocation7 + $0x78] sm:$0xff]
        %vm1060 = vcmp.ne.f32.partialorder %v1044, 0.0
        %vm1061 = vcmp.ne.f32.partialorder %v1045, 0.0
        %vm1062 = vcmp.ne.f32.partialorder %v1046, 0.0
        %vm1063 = vcmp.ne.f32.partialorder %v1047, 0.0
        %vm1064 = vcmp.ne.f32.partialorder %v1048, 0.0
        %vm1065 = vcmp.ne.f32.partialorder %v1049, 0.0
        %vm1066 = vcmp.ne.f32.partialorder %v1050, 0.0
        %vm1067 = vcmp.ne.f32.partialorder %v1051, 0.0
        %vm1068 = vcmp.ne.f32.partialorder %v1052, 0.0
        %vm1069 = vcmp.ne.f32.partialorder %v1053, 0.0
        %vm1070 = vcmp.ne.f32.partialorder %v1054, 0.0
        %vm1071 = vcmp.ne.f32.partialorder %v1055, 0.0
        %vm1072 = vcmp.ne.f32.partialorder %v1056, 0.0
        %vm1073 = vcmp.ne.f32.partialorder %v1057, 0.0
        %vm1074 = vcmp.ne.f32.partialorder %v1058, 0.0
        %vm1075 = vcmp.ne.f32.partialorder %v1059, 0.0
        %vm1076 = vcmask 523264
        %v1078 = vsel %vm1076, %v1028, 0
        %v1081 = vsel %vm1076, %v1029, 0
        %v1084 = vsel %vm1076, %v1030, 0
        %v1087 = vsel %vm1076, %v1031, 0
        %v1090 = vsel %vm1076, %v1032, 0
        %v1093 = vsel %vm1076, %v1033, 0
        %v1096 = vsel %vm1076, %v1034, 0
        %v1099 = vsel %vm1076, %v1035, 0
        %v1102 = vsel %vm1076, %v1036, 0
        %v1105 = vsel %vm1076, %v1037, 0
        %v1108 = vsel %vm1076, %v1038, 0
        %v1111 = vsel %vm1076, %v1039, 0
        %v1114 = vsel %vm1076, %v1040, 0
        %v1117 = vsel %vm1076, %v1041, 0
        %v1120 = vsel %vm1076, %v1042, 0
        %v1123 = vsel %vm1076, %v1043, 0
        %v1126 = vsel %vm1076, %v920, 0
        %v1129 = vsel %vm1076, %v925, 0
        %v1132 = vsel %vm1076, %v930, 0
        %v1135 = vsel %vm1076, %v935, 0
        %v1138 = vsel %vm1076, %v940, 0
        %v1141 = vsel %vm1076, %v945, 0
        %v1144 = vsel %vm1076, %v950, 0
        %v1147 = vsel %vm1076, %v955, 0
        %v1150 = vsel %vm1076, %v960, 0
        %v1153 = vsel %vm1076, %v965, 0
        %v1156 = vsel %vm1076, %v970, 0
        %v1159 = vsel %vm1076, %v975, 0
        %v1162 = vsel %vm1076, %v980, 0
        %v1165 = vsel %vm1076, %v985, 0
        %v1168 = vsel %vm1076, %v990, 0
        %v1171 = vsel %vm1076, %v995, 0
        %1173 = vmatprep.subr.mxu0 0.0
        %1174 = vmatpush1.xpose.msra.mxu0 %v1126
        %1175 = vmatprep.subr.mxu0 0.0
        %1176 = vmatpush1.xpose.msra.mxu0 %v1129
        %1177 = vmatprep.subr.mxu0 0.0
        %1178 = vmatpush1.xpose.msra.mxu0 %v1132
        %1179 = vmatprep.subr.mxu0 0.0
        %1180 = vmatpush1.xpose.msra.mxu0 %v1135
        %1181 = vmatprep.subr.mxu0 0.0
        %1182 = vmatpush1.xpose.msra.mxu0 %v1138
        %1183 = vmatprep.subr.mxu0 0.0
        %1184 = vmatpush1.xpose.msra.mxu0 %v1141
        %1185 = vmatprep.subr.mxu0 0.0
        %1186 = vmatpush1.xpose.msra.mxu0 %v1144
        %1187 = vmatprep.subr.mxu0 0.0
        %1188 = vmatpush1.xpose.msra.mxu0 %v1147
        %1189 = vmatprep.subr.mxu0 0.0
        %1190 = vmatpush1.xpose.msra.mxu0 %v1150
        %1191 = vmatprep.subr.mxu0 0.0
        %1192 = vmatpush1.xpose.msra.mxu0 %v1153
        %1193 = vmatprep.subr.mxu0 0.0
        %1194 = vmatpush1.xpose.msra.mxu0 %v1156
        %1195 = vmatprep.subr.mxu0 0.0
        %1196 = vmatpush1.xpose.msra.mxu0 %v1159
        %1197 = vmatprep.subr.mxu0 0.0
        %1198 = vmatpush1.xpose.msra.mxu0 %v1162
        %1199 = vmatprep.subr.mxu0 0.0
        %1200 = vmatpush1.xpose.msra.mxu0 %v1165
        %1201 = vmatprep.subr.mxu0 0.0
        %1202 = vmatpush1.xpose.msra.mxu0 %v1168
        %1203 = vmatprep.subr.mxu0 0.0
        %1204 = vmatpush1.xpose.msra.mxu0 %v1171
        %1205 = vmatprep.subr.mxu0 0.0
        %1206 = vmatpush1.xpose.msra.mxu0 0.0
        %1207 = vmatprep.subr.mxu0 0.0
        %1208 = vmatpush1.xpose.msra.mxu0 0.0
        %1209 = vmatprep.subr.mxu0 0.0
        %1210 = vmatpush1.xpose.msra.mxu0 0.0
        %1211 = vmatprep.subr.mxu0 0.0
        %1212 = vmatpush1.xpose.msra.mxu0 0.0
        %1213 = vmatprep.subr.mxu0 0.0
        %1214 = vmatpush1.xpose.msra.mxu0 0.0
        %1215 = vmatprep.subr.mxu0 0.0
        %1216 = vmatpush1.xpose.msra.mxu0 0.0
        %1217 = vmatprep.subr.mxu0 0.0
        %1218 = vmatpush1.xpose.msra.mxu0 0.0
        %1219 = vmatprep.subr.mxu0 0.0
        %1220 = vmatpush1.xpose.msra.mxu0 0.0
        %1221 = vmatprep.subr.mxu0 0.0
        %1222 = vmatpush1.xpose.msra.mxu0 0.0
        %1223 = vmatprep.subr.mxu0 0.0
        %1224 = vmatpush1.xpose.msra.mxu0 0.0
        %1225 = vmatprep.subr.mxu0 0.0
        %1226 = vmatpush1.xpose.msra.mxu0 0.0
        %1227 = vmatprep.subr.mxu0 0.0
        %1228 = vmatpush1.xpose.msra.mxu0 0.0
        %1229 = vmatprep.subr.mxu0 0.0
        %1230 = vmatpush1.xpose.msra.mxu0 0.0
        %1231 = vmatprep.subr.mxu0 0.0
        %1232 = vmatpush1.xpose.msra.mxu0 0.0
        %1233 = vmatprep.subr.mxu0 0.0
        %1234 = vmatpush1.xpose.msra.mxu0 0.0
        %1235 = vmatprep.subr.mxu0 0.0
        %1236 = vmatpush1.xpose.msra.mxu0 0.0
        %1237 = vmatprep.mubr.f32.mxu0 0.0
        %1238 = vmatmul.mubr.f32.gmra.mrb[0].mxu0 %v1078
        %v1239 = vpop.f32.mrb[0].mxu0
        %v1240 = vadd.f32 0.0, %v1239
        %v1241 = vpop.f32.mrb[0].mxu0
        %1242 = vmatprep.mubr.f32.mxu0 0.0
        %1243 = vmatmul.mubr.f32.gmra.mrb[0].mxu0 %v1081
        %v1244 = vpop.f32.mrb[0].mxu0
        %v1245 = vadd.f32 0.0, %v1244
        %v1246 = vpop.f32.mrb[0].mxu0
        %1247 = vmatprep.mubr.f32.mxu0 0.0
        %1248 = vmatmul.mubr.f32.gmra.mrb[0].mxu0 %v1084
        %v1249 = vpop.f32.mrb[0].mxu0
        %v1250 = vadd.f32 0.0, %v1249
        %v1251 = vpop.f32.mrb[0].mxu0
        %1252 = vmatprep.mubr.f32.mxu0 0.0
        %1253 = vmatmul.mubr.f32.gmra.mrb[0].mxu0 %v1087
        %v1254 = vpop.f32.mrb[0].mxu0
        %v1255 = vadd.f32 0.0, %v1254
        %v1256 = vpop.f32.mrb[0].mxu0
        %1257 = vmatprep.mubr.f32.mxu0 0.0
        %1258 = vmatmul.mubr.f32.gmra.mrb[0].mxu0 %v1090
        %v1259 = vpop.f32.mrb[0].mxu0
        %v1260 = vadd.f32 0.0, %v1259
        %v1261 = vpop.f32.mrb[0].mxu0
        %1262 = vmatprep.mubr.f32.mxu0 0.0
        %1263 = vmatmul.mubr.f32.gmra.mrb[0].mxu0 %v1093
        %v1264 = vpop.f32.mrb[0].mxu0
        %v1265 = vadd.f32 0.0, %v1264
        %v1266 = vpop.f32.mrb[0].mxu0
        %1267 = vmatprep.mubr.f32.mxu0 0.0
        %1268 = vmatmul.mubr.f32.gmra.mrb[0].mxu0 %v1096
        %v1269 = vpop.f32.mrb[0].mxu0
        %v1270 = vadd.f32 0.0, %v1269
        %v1271 = vpop.f32.mrb[0].mxu0
        %1272 = vmatprep.mubr.f32.mxu0 0.0
        %1273 = vmatmul.mubr.f32.gmra.mrb[0].mxu0 %v1099
        %v1274 = vpop.f32.mrb[0].mxu0
        %v1275 = vadd.f32 0.0, %v1274
        %v1276 = vpop.f32.mrb[0].mxu0
        %1277 = vmatprep.mubr.f32.mxu0 0.0
        %1278 = vmatmul.mubr.f32.gmra.mrb[0].mxu0 %v1102
        %v1279 = vpop.f32.mrb[0].mxu0
        %v1280 = vadd.f32 0.0, %v1279
        %v1281 = vpop.f32.mrb[0].mxu0
        %1282 = vmatprep.mubr.f32.mxu0 0.0
        %1283 = vmatmul.mubr.f32.gmra.mrb[0].mxu0 %v1105
        %v1284 = vpop.f32.mrb[0].mxu0
        %v1285 = vadd.f32 0.0, %v1284
        %v1286 = vpop.f32.mrb[0].mxu0
        %1287 = vmatprep.mubr.f32.mxu0 0.0
        %1288 = vmatmul.mubr.f32.gmra.mrb[0].mxu0 %v1108
        %v1289 = vpop.f32.mrb[0].mxu0
        %v1290 = vadd.f32 0.0, %v1289
        %v1291 = vpop.f32.mrb[0].mxu0
        %1292 = vmatprep.mubr.f32.mxu0 0.0
        %1293 = vmatmul.mubr.f32.gmra.mrb[0].mxu0 %v1111
        %v1294 = vpop.f32.mrb[0].mxu0
        %v1295 = vadd.f32 0.0, %v1294
        %v1296 = vpop.f32.mrb[0].mxu0
        %1297 = vmatprep.mubr.f32.mxu0 0.0
        %1298 = vmatmul.mubr.f32.gmra.mrb[0].mxu0 %v1114
        %v1299 = vpop.f32.mrb[0].mxu0
        %v1300 = vadd.f32 0.0, %v1299
        %v1301 = vpop.f32.mrb[0].mxu0
        %1302 = vmatprep.mubr.f32.mxu0 0.0
        %1303 = vmatmul.mubr.f32.gmra.mrb[0].mxu0 %v1117
        %v1304 = vpop.f32.mrb[0].mxu0
        %v1305 = vadd.f32 0.0, %v1304
        %v1306 = vpop.f32.mrb[0].mxu0
        %1307 = vmatprep.mubr.f32.mxu0 0.0
        %1308 = vmatmul.mubr.f32.gmra.mrb[0].mxu0 %v1120
        %v1309 = vpop.f32.mrb[0].mxu0
        %v1310 = vadd.f32 0.0, %v1309
        %v1311 = vpop.f32.mrb[0].mxu0
        %1312 = vmatprep.mubr.f32.mxu0 0.0
        %1313 = vmatmul.mubr.f32.gmra.mrb[0].mxu0 %v1123
        %v1314 = vpop.f32.mrb[0].mxu0
        %v1315 = vadd.f32 0.0, %v1314
        %v1316 = vpop.f32.mrb[0].mxu0
        %1317 = vdwg.mxu0
        %v1318 = vlaneseq
        %v1319 = vshrl.u32 %v1318, 7
        %v1320 = vadd.s32 %v1319, 8
        %v1321 = vadd.s32 %v1319, 16
        %v1322 = vadd.s32 %v1319, 24
        %v1323 = vadd.s32 %v1319, 32
        %v1324 = vadd.s32 %v1319, 40
        %v1325 = vadd.s32 %v1319, 48
        %v1326 = vadd.s32 %v1319, 56
        %v1327 = vadd.s32 %v1319, 64
        %v1328 = vadd.s32 %v1319, 72
        %v1329 = vadd.s32 %v1319, 80
        %v1330 = vadd.s32 %v1319, 88
        %v1331 = vadd.s32 %v1319, 96
        %v1332 = vadd.s32 %v1319, 104
        %v1333 = vadd.s32 %v1319, 112
        %v1334 = vadd.s32 %v1319, 120
        %v1335 = vsub.s32 127, %v1319
        %v1336 = vsub.s32 127, %v1320
        %v1337 = vsub.s32 127, %v1321
        %v1338 = vsub.s32 127, %v1322
        %v1339 = vsub.s32 127, %v1323
        %v1340 = vsub.s32 127, %v1324
        %v1341 = vsub.s32 127, %v1325
        %v1342 = vsub.s32 127, %v1326
        %v1343 = vsub.s32 127, %v1327
        %v1344 = vsub.s32 127, %v1328
        %v1345 = vsub.s32 127, %v1329
        %v1346 = vsub.s32 127, %v1330
        %v1347 = vsub.s32 127, %v1331
        %v1348 = vsub.s32 127, %v1332
        %v1349 = vsub.s32 127, %v1333
        %v1350 = vsub.s32 127, %v1334
        %1351 = vrot.lane.b32.xlu0 %v1240, 127
        %v1352 = vpop.permute.xlu0 %1351
        %1353 = vrot.lane.b32.xlu0 %v1245, 127
        %v1354 = vpop.permute.xlu0 %1353
        %1355 = vrot.lane.b32.xlu0 %v1250, 127
        %v1356 = vpop.permute.xlu0 %1355
        %1357 = vrot.lane.b32.xlu0 %v1255, 127
        %v1358 = vpop.permute.xlu0 %1357
        %1359 = vrot.lane.b32.xlu0 %v1260, 127
        %v1360 = vpop.permute.xlu0 %1359
        %1361 = vrot.lane.b32.xlu0 %v1265, 127
        %v1362 = vpop.permute.xlu0 %1361
        %1363 = vrot.lane.b32.xlu0 %v1270, 127
        %v1364 = vpop.permute.xlu0 %1363
        %1365 = vrot.lane.b32.xlu0 %v1275, 127
        %v1366 = vpop.permute.xlu0 %1365
        %1367 = vrot.lane.b32.xlu0 %v1280, 127
        %v1368 = vpop.permute.xlu0 %1367
        %1369 = vrot.lane.b32.xlu0 %v1285, 127
        %v1370 = vpop.permute.xlu0 %1369
        %1371 = vrot.lane.b32.xlu0 %v1290, 127
        %v1372 = vpop.permute.xlu0 %1371
        %1373 = vrot.lane.b32.xlu0 %v1295, 127
        %v1374 = vpop.permute.xlu0 %1373
        %1375 = vrot.lane.b32.xlu0 %v1300, 127
        %v1376 = vpop.permute.xlu0 %1375
        %1377 = vrot.lane.b32.xlu0 %v1305, 127
        %v1378 = vpop.permute.xlu0 %1377
        %1379 = vrot.lane.b32.xlu0 %v1310, 127
        %v1380 = vpop.permute.xlu0 %1379
        %1381 = vrot.lane.b32.xlu0 %v1315, 127
        %v1382 = vpop.permute.xlu0 %1381
        %v1383 = vand.u32 %v1335, 1
        %v1384 = vand.u32 %v1336, 1
        %v1385 = vand.u32 %v1337, 1
        %v1386 = vand.u32 %v1338, 1
        %v1387 = vand.u32 %v1339, 1
        %v1388 = vand.u32 %v1340, 1
        %v1389 = vand.u32 %v1341, 1
        %v1390 = vand.u32 %v1342, 1
        %v1391 = vand.u32 %v1343, 1
        %v1392 = vand.u32 %v1344, 1
        %v1393 = vand.u32 %v1345, 1
        %v1394 = vand.u32 %v1346, 1
        %v1395 = vand.u32 %v1347, 1
        %v1396 = vand.u32 %v1348, 1
        %v1397 = vand.u32 %v1349, 1
        %v1398 = vand.u32 %v1350, 1
        %vm1399 = vcmp.ne.s32.totalorder %v1383, 0
        %vm1400 = vcmp.ne.s32.totalorder %v1384, 0
        %vm1401 = vcmp.ne.s32.totalorder %v1385, 0
        %vm1402 = vcmp.ne.s32.totalorder %v1386, 0
        %vm1403 = vcmp.ne.s32.totalorder %v1387, 0
        %vm1404 = vcmp.ne.s32.totalorder %v1388, 0
        %vm1405 = vcmp.ne.s32.totalorder %v1389, 0
        %vm1406 = vcmp.ne.s32.totalorder %v1390, 0
        %vm1407 = vcmp.ne.s32.totalorder %v1391, 0
        %vm1408 = vcmp.ne.s32.totalorder %v1392, 0
        %vm1409 = vcmp.ne.s32.totalorder %v1393, 0
        %vm1410 = vcmp.ne.s32.totalorder %v1394, 0
        %vm1411 = vcmp.ne.s32.totalorder %v1395, 0
        %vm1412 = vcmp.ne.s32.totalorder %v1396, 0
        %vm1413 = vcmp.ne.s32.totalorder %v1397, 0
        %vm1414 = vcmp.ne.s32.totalorder %v1398, 0
        %v1415 = vsel %vm1399, %v1352, %v1240
        %v1416 = vsel %vm1400, %v1354, %v1245
        %v1417 = vsel %vm1401, %v1356, %v1250
        %v1418 = vsel %vm1402, %v1358, %v1255
        %v1419 = vsel %vm1403, %v1360, %v1260
        %v1420 = vsel %vm1404, %v1362, %v1265
        %v1421 = vsel %vm1405, %v1364, %v1270
        %v1422 = vsel %vm1406, %v1366, %v1275
        %v1423 = vsel %vm1407, %v1368, %v1280
        %v1424 = vsel %vm1408, %v1370, %v1285
        %v1425 = vsel %vm1409, %v1372, %v1290
        %v1426 = vsel %vm1410, %v1374, %v1295
        %v1427 = vsel %vm1411, %v1376, %v1300
        %v1428 = vsel %vm1412, %v1378, %v1305
        %v1429 = vsel %vm1413, %v1380, %v1310
        %v1430 = vsel %vm1414, %v1382, %v1315
        %1431 = vrot.lane.b32.xlu0 %v1415, 126
        %v1432 = vpop.permute.xlu0 %1431
        %1433 = vrot.lane.b32.xlu0 %v1416, 126
        %v1434 = vpop.permute.xlu0 %1433
        %1435 = vrot.lane.b32.xlu0 %v1417, 126
        %v1436 = vpop.permute.xlu0 %1435
        %1437 = vrot.lane.b32.xlu0 %v1418, 126
        %v1438 = vpop.permute.xlu0 %1437
        %1439 = vrot.lane.b32.xlu0 %v1419, 126
        %v1440 = vpop.permute.xlu0 %1439
        %1441 = vrot.lane.b32.xlu0 %v1420, 126
        %v1442 = vpop.permute.xlu0 %1441
        %1443 = vrot.lane.b32.xlu0 %v1421, 126
        %v1444 = vpop.permute.xlu0 %1443
        %1445 = vrot.lane.b32.xlu0 %v1422, 126
        %v1446 = vpop.permute.xlu0 %1445
        %1447 = vrot.lane.b32.xlu0 %v1423, 126
        %v1448 = vpop.permute.xlu0 %1447
        %1449 = vrot.lane.b32.xlu0 %v1424, 126
        %v1450 = vpop.permute.xlu0 %1449
        %1451 = vrot.lane.b32.xlu0 %v1425, 126
        %v1452 = vpop.permute.xlu0 %1451
        %1453 = vrot.lane.b32.xlu0 %v1426, 126
        %v1454 = vpop.permute.xlu0 %1453
        %1455 = vrot.lane.b32.xlu0 %v1427, 126
        %v1456 = vpop.permute.xlu0 %1455
        %1457 = vrot.lane.b32.xlu0 %v1428, 126
        %v1458 = vpop.permute.xlu0 %1457
        %1459 = vrot.lane.b32.xlu0 %v1429, 126
        %v1460 = vpop.permute.xlu0 %1459
        %1461 = vrot.lane.b32.xlu0 %v1430, 126
        %v1462 = vpop.permute.xlu0 %1461
        %v1463 = vand.u32 %v1335, 2
        %v1464 = vand.u32 %v1336, 2
        %v1465 = vand.u32 %v1337, 2
        %v1466 = vand.u32 %v1338, 2
        %v1467 = vand.u32 %v1339, 2
        %v1468 = vand.u32 %v1340, 2
        %v1469 = vand.u32 %v1341, 2
        %v1470 = vand.u32 %v1342, 2
        %v1471 = vand.u32 %v1343, 2
        %v1472 = vand.u32 %v1344, 2
        %v1473 = vand.u32 %v1345, 2
        %v1474 = vand.u32 %v1346, 2
        %v1475 = vand.u32 %v1347, 2
        %v1476 = vand.u32 %v1348, 2
        %v1477 = vand.u32 %v1349, 2
        %v1478 = vand.u32 %v1350, 2
        %vm1479 = vcmp.ne.s32.totalorder %v1463, 0
        %vm1480 = vcmp.ne.s32.totalorder %v1464, 0
        %vm1481 = vcmp.ne.s32.totalorder %v1465, 0
        %vm1482 = vcmp.ne.s32.totalorder %v1466, 0
        %vm1483 = vcmp.ne.s32.totalorder %v1467, 0
        %vm1484 = vcmp.ne.s32.totalorder %v1468, 0
        %vm1485 = vcmp.ne.s32.totalorder %v1469, 0
        %vm1486 = vcmp.ne.s32.totalorder %v1470, 0
        %vm1487 = vcmp.ne.s32.totalorder %v1471, 0
        %vm1488 = vcmp.ne.s32.totalorder %v1472, 0
        %vm1489 = vcmp.ne.s32.totalorder %v1473, 0
        %vm1490 = vcmp.ne.s32.totalorder %v1474, 0
        %vm1491 = vcmp.ne.s32.totalorder %v1475, 0
        %vm1492 = vcmp.ne.s32.totalorder %v1476, 0
        %vm1493 = vcmp.ne.s32.totalorder %v1477, 0
        %vm1494 = vcmp.ne.s32.totalorder %v1478, 0
        %v1495 = vsel %vm1479, %v1432, %v1415
        %v1496 = vsel %vm1480, %v1434, %v1416
        %v1497 = vsel %vm1481, %v1436, %v1417
        %v1498 = vsel %vm1482, %v1438, %v1418
        %v1499 = vsel %vm1483, %v1440, %v1419
        %v1500 = vsel %vm1484, %v1442, %v1420
        %v1501 = vsel %vm1485, %v1444, %v1421
        %v1502 = vsel %vm1486, %v1446, %v1422
        %v1503 = vsel %vm1487, %v1448, %v1423
        %v1504 = vsel %vm1488, %v1450, %v1424
        %v1505 = vsel %vm1489, %v1452, %v1425
        %v1506 = vsel %vm1490, %v1454, %v1426
        %v1507 = vsel %vm1491, %v1456, %v1427
        %v1508 = vsel %vm1492, %v1458, %v1428
        %v1509 = vsel %vm1493, %v1460, %v1429
        %v1510 = vsel %vm1494, %v1462, %v1430
        %1511 = vrot.lane.b32.xlu0 %v1495, 124
        %v1512 = vpop.permute.xlu0 %1511
        %1513 = vrot.lane.b32.xlu0 %v1496, 124
        %v1514 = vpop.permute.xlu0 %1513
        %1515 = vrot.lane.b32.xlu0 %v1497, 124
        %v1516 = vpop.permute.xlu0 %1515
        %1517 = vrot.lane.b32.xlu0 %v1498, 124
        %v1518 = vpop.permute.xlu0 %1517
        %1519 = vrot.lane.b32.xlu0 %v1499, 124
        %v1520 = vpop.permute.xlu0 %1519
        %1521 = vrot.lane.b32.xlu0 %v1500, 124
        %v1522 = vpop.permute.xlu0 %1521
        %1523 = vrot.lane.b32.xlu0 %v1501, 124
        %v1524 = vpop.permute.xlu0 %1523
        %1525 = vrot.lane.b32.xlu0 %v1502, 124
        %v1526 = vpop.permute.xlu0 %1525
        %1527 = vrot.lane.b32.xlu0 %v1503, 124
        %v1528 = vpop.permute.xlu0 %1527
        %1529 = vrot.lane.b32.xlu0 %v1504, 124
        %v1530 = vpop.permute.xlu0 %1529
        %1531 = vrot.lane.b32.xlu0 %v1505, 124
        %v1532 = vpop.permute.xlu0 %1531
        %1533 = vrot.lane.b32.xlu0 %v1506, 124
        %v1534 = vpop.permute.xlu0 %1533
        %1535 = vrot.lane.b32.xlu0 %v1507, 124
        %v1536 = vpop.permute.xlu0 %1535
        %1537 = vrot.lane.b32.xlu0 %v1508, 124
        %v1538 = vpop.permute.xlu0 %1537
        %1539 = vrot.lane.b32.xlu0 %v1509, 124
        %v1540 = vpop.permute.xlu0 %1539
        %1541 = vrot.lane.b32.xlu0 %v1510, 124
        %v1542 = vpop.permute.xlu0 %1541
        %v1543 = vand.u32 %v1335, 4
        %v1544 = vand.u32 %v1336, 4
        %v1545 = vand.u32 %v1337, 4
        %v1546 = vand.u32 %v1338, 4
        %v1547 = vand.u32 %v1339, 4
        %v1548 = vand.u32 %v1340, 4
        %v1549 = vand.u32 %v1341, 4
        %v1550 = vand.u32 %v1342, 4
        %v1551 = vand.u32 %v1343, 4
        %v1552 = vand.u32 %v1344, 4
        %v1553 = vand.u32 %v1345, 4
        %v1554 = vand.u32 %v1346, 4
        %v1555 = vand.u32 %v1347, 4
        %v1556 = vand.u32 %v1348, 4
        %v1557 = vand.u32 %v1349, 4
        %v1558 = vand.u32 %v1350, 4
        %vm1559 = vcmp.ne.s32.totalorder %v1543, 0
        %vm1560 = vcmp.ne.s32.totalorder %v1544, 0
        %vm1561 = vcmp.ne.s32.totalorder %v1545, 0
        %vm1562 = vcmp.ne.s32.totalorder %v1546, 0
        %vm1563 = vcmp.ne.s32.totalorder %v1547, 0
        %vm1564 = vcmp.ne.s32.totalorder %v1548, 0
        %vm1565 = vcmp.ne.s32.totalorder %v1549, 0
        %vm1566 = vcmp.ne.s32.totalorder %v1550, 0
        %vm1567 = vcmp.ne.s32.totalorder %v1551, 0
        %vm1568 = vcmp.ne.s32.totalorder %v1552, 0
        %vm1569 = vcmp.ne.s32.totalorder %v1553, 0
        %vm1570 = vcmp.ne.s32.totalorder %v1554, 0
        %vm1571 = vcmp.ne.s32.totalorder %v1555, 0
        %vm1572 = vcmp.ne.s32.totalorder %v1556, 0
        %vm1573 = vcmp.ne.s32.totalorder %v1557, 0
        %vm1574 = vcmp.ne.s32.totalorder %v1558, 0
        %v1575 = vsel %vm1559, %v1512, %v1495
        %v1576 = vsel %vm1560, %v1514, %v1496
        %v1577 = vsel %vm1561, %v1516, %v1497
        %v1578 = vsel %vm1562, %v1518, %v1498
        %v1579 = vsel %vm1563, %v1520, %v1499
        %v1580 = vsel %vm1564, %v1522, %v1500
        %v1581 = vsel %vm1565, %v1524, %v1501
        %v1582 = vsel %vm1566, %v1526, %v1502
        %v1583 = vsel %vm1567, %v1528, %v1503
        %v1584 = vsel %vm1568, %v1530, %v1504
        %v1585 = vsel %vm1569, %v1532, %v1505
        %v1586 = vsel %vm1570, %v1534, %v1506
        %v1587 = vsel %vm1571, %v1536, %v1507
        %v1588 = vsel %vm1572, %v1538, %v1508
        %v1589 = vsel %vm1573, %v1540, %v1509
        %v1590 = vsel %vm1574, %v1542, %v1510
        %1591 = vrot.lane.b32.xlu0 %v1575, 120
        %v1592 = vpop.permute.xlu0 %1591
        %1593 = vrot.lane.b32.xlu0 %v1576, 120
        %v1594 = vpop.permute.xlu0 %1593
        %1595 = vrot.lane.b32.xlu0 %v1577, 120
        %v1596 = vpop.permute.xlu0 %1595
        %1597 = vrot.lane.b32.xlu0 %v1578, 120
        %v1598 = vpop.permute.xlu0 %1597
        %1599 = vrot.lane.b32.xlu0 %v1579, 120
        %v1600 = vpop.permute.xlu0 %1599
        %1601 = vrot.lane.b32.xlu0 %v1580, 120
        %v1602 = vpop.permute.xlu0 %1601
        %1603 = vrot.lane.b32.xlu0 %v1581, 120
        %v1604 = vpop.permute.xlu0 %1603
        %1605 = vrot.lane.b32.xlu0 %v1582, 120
        %v1606 = vpop.permute.xlu0 %1605
        %1607 = vrot.lane.b32.xlu0 %v1583, 120
        %v1608 = vpop.permute.xlu0 %1607
        %1609 = vrot.lane.b32.xlu0 %v1584, 120
        %v1610 = vpop.permute.xlu0 %1609
        %1611 = vrot.lane.b32.xlu0 %v1585, 120
        %v1612 = vpop.permute.xlu0 %1611
        %1613 = vrot.lane.b32.xlu0 %v1586, 120
        %v1614 = vpop.permute.xlu0 %1613
        %1615 = vrot.lane.b32.xlu0 %v1587, 120
        %v1616 = vpop.permute.xlu0 %1615
        %1617 = vrot.lane.b32.xlu0 %v1588, 120
        %v1618 = vpop.permute.xlu0 %1617
        %1619 = vrot.lane.b32.xlu0 %v1589, 120
        %v1620 = vpop.permute.xlu0 %1619
        %1621 = vrot.lane.b32.xlu0 %v1590, 120
        %v1622 = vpop.permute.xlu0 %1621
        %v1623 = vand.u32 %v1335, 8
        %v1624 = vand.u32 %v1336, 8
        %v1625 = vand.u32 %v1337, 8
        %v1626 = vand.u32 %v1338, 8
        %v1627 = vand.u32 %v1339, 8
        %v1628 = vand.u32 %v1340, 8
        %v1629 = vand.u32 %v1341, 8
        %v1630 = vand.u32 %v1342, 8
        %v1631 = vand.u32 %v1343, 8
        %v1632 = vand.u32 %v1344, 8
        %v1633 = vand.u32 %v1345, 8
        %v1634 = vand.u32 %v1346, 8
        %v1635 = vand.u32 %v1347, 8
        %v1636 = vand.u32 %v1348, 8
        %v1637 = vand.u32 %v1349, 8
        %v1638 = vand.u32 %v1350, 8
        %vm1639 = vcmp.ne.s32.totalorder %v1623, 0
        %vm1640 = vcmp.ne.s32.totalorder %v1624, 0
        %vm1641 = vcmp.ne.s32.totalorder %v1625, 0
        %vm1642 = vcmp.ne.s32.totalorder %v1626, 0
        %vm1643 = vcmp.ne.s32.totalorder %v1627, 0
        %vm1644 = vcmp.ne.s32.totalorder %v1628, 0
        %vm1645 = vcmp.ne.s32.totalorder %v1629, 0
        %vm1646 = vcmp.ne.s32.totalorder %v1630, 0
        %vm1647 = vcmp.ne.s32.totalorder %v1631, 0
        %vm1648 = vcmp.ne.s32.totalorder %v1632, 0
        %vm1649 = vcmp.ne.s32.totalorder %v1633, 0
        %vm1650 = vcmp.ne.s32.totalorder %v1634, 0
        %vm1651 = vcmp.ne.s32.totalorder %v1635, 0
        %vm1652 = vcmp.ne.s32.totalorder %v1636, 0
        %vm1653 = vcmp.ne.s32.totalorder %v1637, 0
        %vm1654 = vcmp.ne.s32.totalorder %v1638, 0
        %v1655 = vsel %vm1639, %v1592, %v1575
        %v1656 = vsel %vm1640, %v1594, %v1576
        %v1657 = vsel %vm1641, %v1596, %v1577
        %v1658 = vsel %vm1642, %v1598, %v1578
        %v1659 = vsel %vm1643, %v1600, %v1579
        %v1660 = vsel %vm1644, %v1602, %v1580
        %v1661 = vsel %vm1645, %v1604, %v1581
        %v1662 = vsel %vm1646, %v1606, %v1582
        %v1663 = vsel %vm1647, %v1608, %v1583
        %v1664 = vsel %vm1648, %v1610, %v1584
        %v1665 = vsel %vm1649, %v1612, %v1585
        %v1666 = vsel %vm1650, %v1614, %v1586
        %v1667 = vsel %vm1651, %v1616, %v1587
        %v1668 = vsel %vm1652, %v1618, %v1588
        %v1669 = vsel %vm1653, %v1620, %v1589
        %v1670 = vsel %vm1654, %v1622, %v1590
        %1671 = vrot.lane.b32.xlu0 %v1655, 112
        %v1672 = vpop.permute.xlu0 %1671
        %1673 = vrot.lane.b32.xlu0 %v1656, 112
        %v1674 = vpop.permute.xlu0 %1673
        %1675 = vrot.lane.b32.xlu0 %v1657, 112
        %v1676 = vpop.permute.xlu0 %1675
        %1677 = vrot.lane.b32.xlu0 %v1658, 112
        %v1678 = vpop.permute.xlu0 %1677
        %1679 = vrot.lane.b32.xlu0 %v1659, 112
        %v1680 = vpop.permute.xlu0 %1679
        %1681 = vrot.lane.b32.xlu0 %v1660, 112
        %v1682 = vpop.permute.xlu0 %1681
        %1683 = vrot.lane.b32.xlu0 %v1661, 112
        %v1684 = vpop.permute.xlu0 %1683
        %1685 = vrot.lane.b32.xlu0 %v1662, 112
        %v1686 = vpop.permute.xlu0 %1685
        %1687 = vrot.lane.b32.xlu0 %v1663, 112
        %v1688 = vpop.permute.xlu0 %1687
        %1689 = vrot.lane.b32.xlu0 %v1664, 112
        %v1690 = vpop.permute.xlu0 %1689
        %1691 = vrot.lane.b32.xlu0 %v1665, 112
        %v1692 = vpop.permute.xlu0 %1691
        %1693 = vrot.lane.b32.xlu0 %v1666, 112
        %v1694 = vpop.permute.xlu0 %1693
        %1695 = vrot.lane.b32.xlu0 %v1667, 112
        %v1696 = vpop.permute.xlu0 %1695
        %1697 = vrot.lane.b32.xlu0 %v1668, 112
        %v1698 = vpop.permute.xlu0 %1697
        %1699 = vrot.lane.b32.xlu0 %v1669, 112
        %v1700 = vpop.permute.xlu0 %1699
        %1701 = vrot.lane.b32.xlu0 %v1670, 112
        %v1702 = vpop.permute.xlu0 %1701
        %v1703 = vand.u32 %v1335, 16
        %v1704 = vand.u32 %v1336, 16
        %v1705 = vand.u32 %v1337, 16
        %v1706 = vand.u32 %v1338, 16
        %v1707 = vand.u32 %v1339, 16
        %v1708 = vand.u32 %v1340, 16
        %v1709 = vand.u32 %v1341, 16
        %v1710 = vand.u32 %v1342, 16
        %v1711 = vand.u32 %v1343, 16
        %v1712 = vand.u32 %v1344, 16
        %v1713 = vand.u32 %v1345, 16
        %v1714 = vand.u32 %v1346, 16
        %v1715 = vand.u32 %v1347, 16
        %v1716 = vand.u32 %v1348, 16
        %v1717 = vand.u32 %v1349, 16
        %v1718 = vand.u32 %v1350, 16
        %vm1719 = vcmp.ne.s32.totalorder %v1703, 0
        %vm1720 = vcmp.ne.s32.totalorder %v1704, 0
        %vm1721 = vcmp.ne.s32.totalorder %v1705, 0
        %vm1722 = vcmp.ne.s32.totalorder %v1706, 0
        %vm1723 = vcmp.ne.s32.totalorder %v1707, 0
        %vm1724 = vcmp.ne.s32.totalorder %v1708, 0
        %vm1725 = vcmp.ne.s32.totalorder %v1709, 0
        %vm1726 = vcmp.ne.s32.totalorder %v1710, 0
        %vm1727 = vcmp.ne.s32.totalorder %v1711, 0
        %vm1728 = vcmp.ne.s32.totalorder %v1712, 0
        %vm1729 = vcmp.ne.s32.totalorder %v1713, 0
        %vm1730 = vcmp.ne.s32.totalorder %v1714, 0
        %vm1731 = vcmp.ne.s32.totalorder %v1715, 0
        %vm1732 = vcmp.ne.s32.totalorder %v1716, 0
        %vm1733 = vcmp.ne.s32.totalorder %v1717, 0
        %vm1734 = vcmp.ne.s32.totalorder %v1718, 0
        %v1735 = vsel %vm1719, %v1672, %v1655
        %v1736 = vsel %vm1720, %v1674, %v1656
        %v1737 = vsel %vm1721, %v1676, %v1657
        %v1738 = vsel %vm1722, %v1678, %v1658
        %v1739 = vsel %vm1723, %v1680, %v1659
        %v1740 = vsel %vm1724, %v1682, %v1660
        %v1741 = vsel %vm1725, %v1684, %v1661
        %v1742 = vsel %vm1726, %v1686, %v1662
        %v1743 = vsel %vm1727, %v1688, %v1663
        %v1744 = vsel %vm1728, %v1690, %v1664
        %v1745 = vsel %vm1729, %v1692, %v1665
        %v1746 = vsel %vm1730, %v1694, %v1666
        %v1747 = vsel %vm1731, %v1696, %v1667
        %v1748 = vsel %vm1732, %v1698, %v1668
        %v1749 = vsel %vm1733, %v1700, %v1669
        %v1750 = vsel %vm1734, %v1702, %v1670
        %1751 = vrot.lane.b32.xlu0 %v1735, 96
        %v1752 = vpop.permute.xlu0 %1751
        %1753 = vrot.lane.b32.xlu0 %v1736, 96
        %v1754 = vpop.permute.xlu0 %1753
        %1755 = vrot.lane.b32.xlu0 %v1737, 96
        %v1756 = vpop.permute.xlu0 %1755
        %1757 = vrot.lane.b32.xlu0 %v1738, 96
        %v1758 = vpop.permute.xlu0 %1757
        %1759 = vrot.lane.b32.xlu0 %v1739, 96
        %v1760 = vpop.permute.xlu0 %1759
        %1761 = vrot.lane.b32.xlu0 %v1740, 96
        %v1762 = vpop.permute.xlu0 %1761
        %1763 = vrot.lane.b32.xlu0 %v1741, 96
        %v1764 = vpop.permute.xlu0 %1763
        %1765 = vrot.lane.b32.xlu0 %v1742, 96
        %v1766 = vpop.permute.xlu0 %1765
        %1767 = vrot.lane.b32.xlu0 %v1743, 96
        %v1768 = vpop.permute.xlu0 %1767
        %1769 = vrot.lane.b32.xlu0 %v1744, 96
        %v1770 = vpop.permute.xlu0 %1769
        %1771 = vrot.lane.b32.xlu0 %v1745, 96
        %v1772 = vpop.permute.xlu0 %1771
        %1773 = vrot.lane.b32.xlu0 %v1746, 96
        %v1774 = vpop.permute.xlu0 %1773
        %1775 = vrot.lane.b32.xlu0 %v1747, 96
        %v1776 = vpop.permute.xlu0 %1775
        %1777 = vrot.lane.b32.xlu0 %v1748, 96
        %v1778 = vpop.permute.xlu0 %1777
        %1779 = vrot.lane.b32.xlu0 %v1749, 96
        %v1780 = vpop.permute.xlu0 %1779
        %1781 = vrot.lane.b32.xlu0 %v1750, 96
        %v1782 = vpop.permute.xlu0 %1781
        %v1783 = vand.u32 %v1335, 32
        %v1784 = vand.u32 %v1336, 32
        %v1785 = vand.u32 %v1337, 32
        %v1786 = vand.u32 %v1338, 32
        %v1787 = vand.u32 %v1339, 32
        %v1788 = vand.u32 %v1340, 32
        %v1789 = vand.u32 %v1341, 32
        %v1790 = vand.u32 %v1342, 32
        %v1791 = vand.u32 %v1343, 32
        %v1792 = vand.u32 %v1344, 32
        %v1793 = vand.u32 %v1345, 32
        %v1794 = vand.u32 %v1346, 32
        %v1795 = vand.u32 %v1347, 32
        %v1796 = vand.u32 %v1348, 32
        %v1797 = vand.u32 %v1349, 32
        %v1798 = vand.u32 %v1350, 32
        %vm1799 = vcmp.ne.s32.totalorder %v1783, 0
        %vm1800 = vcmp.ne.s32.totalorder %v1784, 0
        %vm1801 = vcmp.ne.s32.totalorder %v1785, 0
        %vm1802 = vcmp.ne.s32.totalorder %v1786, 0
        %vm1803 = vcmp.ne.s32.totalorder %v1787, 0
        %vm1804 = vcmp.ne.s32.totalorder %v1788, 0
        %vm1805 = vcmp.ne.s32.totalorder %v1789, 0
        %vm1806 = vcmp.ne.s32.totalorder %v1790, 0
        %vm1807 = vcmp.ne.s32.totalorder %v1791, 0
        %vm1808 = vcmp.ne.s32.totalorder %v1792, 0
        %vm1809 = vcmp.ne.s32.totalorder %v1793, 0
        %vm1810 = vcmp.ne.s32.totalorder %v1794, 0
        %vm1811 = vcmp.ne.s32.totalorder %v1795, 0
        %vm1812 = vcmp.ne.s32.totalorder %v1796, 0
        %vm1813 = vcmp.ne.s32.totalorder %v1797, 0
        %vm1814 = vcmp.ne.s32.totalorder %v1798, 0
        %v1815 = vsel %vm1799, %v1752, %v1735
        %v1816 = vsel %vm1800, %v1754, %v1736
        %v1817 = vsel %vm1801, %v1756, %v1737
        %v1818 = vsel %vm1802, %v1758, %v1738
        %v1819 = vsel %vm1803, %v1760, %v1739
        %v1820 = vsel %vm1804, %v1762, %v1740
        %v1821 = vsel %vm1805, %v1764, %v1741
        %v1822 = vsel %vm1806, %v1766, %v1742
        %v1823 = vsel %vm1807, %v1768, %v1743
        %v1824 = vsel %vm1808, %v1770, %v1744
        %v1825 = vsel %vm1809, %v1772, %v1745
        %v1826 = vsel %vm1810, %v1774, %v1746
        %v1827 = vsel %vm1811, %v1776, %v1747
        %v1828 = vsel %vm1812, %v1778, %v1748
        %v1829 = vsel %vm1813, %v1780, %v1749
        %v1830 = vsel %vm1814, %v1782, %v1750
        %1831 = vrot.lane.b32.xlu0 %v1815, 64
        %v1832 = vpop.permute.xlu0 %1831
        %1833 = vrot.lane.b32.xlu0 %v1816, 64
        %v1834 = vpop.permute.xlu0 %1833
        %1835 = vrot.lane.b32.xlu0 %v1817, 64
        %v1836 = vpop.permute.xlu0 %1835
        %1837 = vrot.lane.b32.xlu0 %v1818, 64
        %v1838 = vpop.permute.xlu0 %1837
        %1839 = vrot.lane.b32.xlu0 %v1819, 64
        %v1840 = vpop.permute.xlu0 %1839
        %1841 = vrot.lane.b32.xlu0 %v1820, 64
        %v1842 = vpop.permute.xlu0 %1841
        %1843 = vrot.lane.b32.xlu0 %v1821, 64
        %v1844 = vpop.permute.xlu0 %1843
        %1845 = vrot.lane.b32.xlu0 %v1822, 64
        %v1846 = vpop.permute.xlu0 %1845
        %1847 = vrot.lane.b32.xlu0 %v1823, 64
        %v1848 = vpop.permute.xlu0 %1847
        %1849 = vrot.lane.b32.xlu0 %v1824, 64
        %v1850 = vpop.permute.xlu0 %1849
        %1851 = vrot.lane.b32.xlu0 %v1825, 64
        %v1852 = vpop.permute.xlu0 %1851
        %1853 = vrot.lane.b32.xlu0 %v1826, 64
        %v1854 = vpop.permute.xlu0 %1853
        %1855 = vrot.lane.b32.xlu0 %v1827, 64
        %v1856 = vpop.permute.xlu0 %1855
        %1857 = vrot.lane.b32.xlu0 %v1828, 64
        %v1858 = vpop.permute.xlu0 %1857
        %1859 = vrot.lane.b32.xlu0 %v1829, 64
        %v1860 = vpop.permute.xlu0 %1859
        %1861 = vrot.lane.b32.xlu0 %v1830, 64
        %v1862 = vpop.permute.xlu0 %1861
        %v1863 = vand.u32 %v1335, 64
        %v1864 = vand.u32 %v1336, 64
        %v1865 = vand.u32 %v1337, 64
        %v1866 = vand.u32 %v1338, 64
        %v1867 = vand.u32 %v1339, 64
        %v1868 = vand.u32 %v1340, 64
        %v1869 = vand.u32 %v1341, 64
        %v1870 = vand.u32 %v1342, 64
        %v1871 = vand.u32 %v1343, 64
        %v1872 = vand.u32 %v1344, 64
        %v1873 = vand.u32 %v1345, 64
        %v1874 = vand.u32 %v1346, 64
        %v1875 = vand.u32 %v1347, 64
        %v1876 = vand.u32 %v1348, 64
        %v1877 = vand.u32 %v1349, 64
        %v1878 = vand.u32 %v1350, 64
        %vm1879 = vcmp.ne.s32.totalorder %v1863, 0
        %vm1880 = vcmp.ne.s32.totalorder %v1864, 0
        %vm1881 = vcmp.ne.s32.totalorder %v1865, 0
        %vm1882 = vcmp.ne.s32.totalorder %v1866, 0
        %vm1883 = vcmp.ne.s32.totalorder %v1867, 0
        %vm1884 = vcmp.ne.s32.totalorder %v1868, 0
        %vm1885 = vcmp.ne.s32.totalorder %v1869, 0
        %vm1886 = vcmp.ne.s32.totalorder %v1870, 0
        %vm1887 = vcmp.ne.s32.totalorder %v1871, 0
        %vm1888 = vcmp.ne.s32.totalorder %v1872, 0
        %vm1889 = vcmp.ne.s32.totalorder %v1873, 0
        %vm1890 = vcmp.ne.s32.totalorder %v1874, 0
        %vm1891 = vcmp.ne.s32.totalorder %v1875, 0
        %vm1892 = vcmp.ne.s32.totalorder %v1876, 0
        %vm1893 = vcmp.ne.s32.totalorder %v1877, 0
        %vm1894 = vcmp.ne.s32.totalorder %v1878, 0
        %v1895 = vsel %vm1879, %v1832, %v1815
        %v1896 = vsel %vm1880, %v1834, %v1816
        %v1897 = vsel %vm1881, %v1836, %v1817
        %v1898 = vsel %vm1882, %v1838, %v1818
        %v1899 = vsel %vm1883, %v1840, %v1819
        %v1900 = vsel %vm1884, %v1842, %v1820
        %v1901 = vsel %vm1885, %v1844, %v1821
        %v1902 = vsel %vm1886, %v1846, %v1822
        %v1903 = vsel %vm1887, %v1848, %v1823
        %v1904 = vsel %vm1888, %v1850, %v1824
        %v1905 = vsel %vm1889, %v1852, %v1825
        %v1906 = vsel %vm1890, %v1854, %v1826
        %v1907 = vsel %vm1891, %v1856, %v1827
        %v1908 = vsel %vm1892, %v1858, %v1828
        %v1909 = vsel %vm1893, %v1860, %v1829
        %v1910 = vsel %vm1894, %v1862, %v1830
        %v1912 = vsel %vm1076, %v1005, 0
        %v1915 = vsel %vm1076, %v1006, 0
        %v1918 = vsel %vm1076, %v1007, 0
        %v1921 = vsel %vm1076, %v1008, 0
        %v1924 = vsel %vm1076, %v1009, 0
        %v1927 = vsel %vm1076, %v1010, 0
        %v1930 = vsel %vm1076, %v1011, 0
        %v1933 = vsel %vm1076, %v1012, 0
        %v1936 = vsel %vm1076, %v1013, 0
        %v1939 = vsel %vm1076, %v1014, 0
        %v1942 = vsel %vm1076, %v1015, 0
        %v1945 = vsel %vm1076, %v1016, 0
        %v1948 = vsel %vm1076, %v1017, 0
        %v1951 = vsel %vm1076, %v1018, 0
        %v1954 = vsel %vm1076, %v1019, 0
        %v1957 = vsel %vm1076, %v1020, 0
        %v1960 = vsel %vm1076, %v600, 0
        %v1963 = vsel %vm1076, %v606, 0
        %v1966 = vsel %vm1076, %v612, 0
        %v1969 = vsel %vm1076, %v618, 0
        %v1972 = vsel %vm1076, %v624, 0
        %v1975 = vsel %vm1076, %v630, 0
        %v1978 = vsel %vm1076, %v636, 0
        %v1981 = vsel %vm1076, %v642, 0
        %v1984 = vsel %vm1076, %v648, 0
        %v1987 = vsel %vm1076, %v654, 0
        %v1990 = vsel %vm1076, %v660, 0
        %v1993 = vsel %vm1076, %v666, 0
        %v1996 = vsel %vm1076, %v672, 0
        %v1999 = vsel %vm1076, %v678, 0
        %v2002 = vsel %vm1076, %v684, 0
        %v2005 = vsel %vm1076, %v690, 0
        %2007 = vmatprep.subr.mxu0 0.0
        %2008 = vmatpush1.xpose.msra.mxu0 %v1960
        %2009 = vmatprep.subr.mxu0 0.0
        %2010 = vmatpush1.xpose.msra.mxu0 %v1963
        %2011 = vmatprep.subr.mxu0 0.0
        %2012 = vmatpush1.xpose.msra.mxu0 %v1966
        %2013 = vmatprep.subr.mxu0 0.0
        %2014 = vmatpush1.xpose.msra.mxu0 %v1969
        %2015 = vmatprep.subr.mxu0 0.0
        %2016 = vmatpush1.xpose.msra.mxu0 %v1972
        %2017 = vmatprep.subr.mxu0 0.0
        %2018 = vmatpush1.xpose.msra.mxu0 %v1975
        %2019 = vmatprep.subr.mxu0 0.0
        %2020 = vmatpush1.xpose.msra.mxu0 %v1978
        %2021 = vmatprep.subr.mxu0 0.0
        %2022 = vmatpush1.xpose.msra.mxu0 %v1981
        %2023 = vmatprep.subr.mxu0 0.0
        %2024 = vmatpush1.xpose.msra.mxu0 %v1984
        %2025 = vmatprep.subr.mxu0 0.0
        %2026 = vmatpush1.xpose.msra.mxu0 %v1987
        %2027 = vmatprep.subr.mxu0 0.0
        %2028 = vmatpush1.xpose.msra.mxu0 %v1990
        %2029 = vmatprep.subr.mxu0 0.0
        %2030 = vmatpush1.xpose.msra.mxu0 %v1993
        %2031 = vmatprep.subr.mxu0 0.0
        %2032 = vmatpush1.xpose.msra.mxu0 %v1996
        %2033 = vmatprep.subr.mxu0 0.0
        %2034 = vmatpush1.xpose.msra.mxu0 %v1999
        %2035 = vmatprep.subr.mxu0 0.0
        %2036 = vmatpush1.xpose.msra.mxu0 %v2002
        %2037 = vmatprep.subr.mxu0 0.0
        %2038 = vmatpush1.xpose.msra.mxu0 %v2005
        %2039 = vmatprep.subr.mxu0 0.0
        %2040 = vmatpush1.xpose.msra.mxu0 0.0
        %2041 = vmatprep.subr.mxu0 0.0
        %2042 = vmatpush1.xpose.msra.mxu0 0.0
        %2043 = vmatprep.subr.mxu0 0.0
        %2044 = vmatpush1.xpose.msra.mxu0 0.0
        %2045 = vmatprep.subr.mxu0 0.0
        %2046 = vmatpush1.xpose.msra.mxu0 0.0
        %2047 = vmatprep.subr.mxu0 0.0
        %2048 = vmatpush1.xpose.msra.mxu0 0.0
        %2049 = vmatprep.subr.mxu0 0.0
        %2050 = vmatpush1.xpose.msra.mxu0 0.0
        %2051 = vmatprep.subr.mxu0 0.0
        %2052 = vmatpush1.xpose.msra.mxu0 0.0
        %2053 = vmatprep.subr.mxu0 0.0
        %2054 = vmatpush1.xpose.msra.mxu0 0.0
        %2055 = vmatprep.subr.mxu0 0.0
        %2056 = vmatpush1.xpose.msra.mxu0 0.0
        %2057 = vmatprep.subr.mxu0 0.0
        %2058 = vmatpush1.xpose.msra.mxu0 0.0
        %2059 = vmatprep.subr.mxu0 0.0
        %2060 = vmatpush1.xpose.msra.mxu0 0.0
        %2061 = vmatprep.subr.mxu0 0.0
        %2062 = vmatpush1.xpose.msra.mxu0 0.0
        %2063 = vmatprep.subr.mxu0 0.0
        %2064 = vmatpush1.xpose.msra.mxu0 0.0
        %2065 = vmatprep.subr.mxu0 0.0
        %2066 = vmatpush1.xpose.msra.mxu0 0.0
        %2067 = vmatprep.subr.mxu0 0.0
        %2068 = vmatpush1.xpose.msra.mxu0 0.0
        %2069 = vmatprep.subr.mxu0 0.0
        %2070 = vmatpush1.xpose.msra.mxu0 0.0
        %2071 = vmatprep.mubr.f32.mxu0 0.0
        %2072 = vmatmul.mubr.f32.gmra.mrb[0].mxu0 %v1912
        %v2073 = vpop.f32.mrb[0].mxu0
        %v2074 = vadd.f32 %v1895, %v2073
        %v2075 = vpop.f32.mrb[0].mxu0
        %2076 = vmatprep.mubr.f32.mxu0 0.0
        %2077 = vmatmul.mubr.f32.gmra.mrb[0].mxu0 %v1915
        %v2078 = vpop.f32.mrb[0].mxu0
        %v2079 = vadd.f32 %v1896, %v2078
        %v2080 = vpop.f32.mrb[0].mxu0
        %2081 = vmatprep.mubr.f32.mxu0 0.0
        %2082 = vmatmul.mubr.f32.gmra.mrb[0].mxu0 %v1918
        %v2083 = vpop.f32.mrb[0].mxu0
        %v2084 = vadd.f32 %v1897, %v2083
        %v2085 = vpop.f32.mrb[0].mxu0
        %2086 = vmatprep.mubr.f32.mxu0 0.0
        %2087 = vmatmul.mubr.f32.gmra.mrb[0].mxu0 %v1921
        %v2088 = vpop.f32.mrb[0].mxu0
        %v2089 = vadd.f32 %v1898, %v2088
        %v2090 = vpop.f32.mrb[0].mxu0
        %2091 = vmatprep.mubr.f32.mxu0 0.0
        %2092 = vmatmul.mubr.f32.gmra.mrb[0].mxu0 %v1924
        %v2093 = vpop.f32.mrb[0].mxu0
        %v2094 = vadd.f32 %v1899, %v2093
        %v2095 = vpop.f32.mrb[0].mxu0
        %2096 = vmatprep.mubr.f32.mxu0 0.0
        %2097 = vmatmul.mubr.f32.gmra.mrb[0].mxu0 %v1927
        %v2098 = vpop.f32.mrb[0].mxu0
        %v2099 = vadd.f32 %v1900, %v2098
        %v2100 = vpop.f32.mrb[0].mxu0
        %2101 = vmatprep.mubr.f32.mxu0 0.0
        %2102 = vmatmul.mubr.f32.gmra.mrb[0].mxu0 %v1930
        %v2103 = vpop.f32.mrb[0].mxu0
        %v2104 = vadd.f32 %v1901, %v2103
        %v2105 = vpop.f32.mrb[0].mxu0
        %2106 = vmatprep.mubr.f32.mxu0 0.0
        %2107 = vmatmul.mubr.f32.gmra.mrb[0].mxu0 %v1933
        %v2108 = vpop.f32.mrb[0].mxu0
        %v2109 = vadd.f32 %v1902, %v2108
        %v2110 = vpop.f32.mrb[0].mxu0
        %2111 = vmatprep.mubr.f32.mxu0 0.0
        %2112 = vmatmul.mubr.f32.gmra.mrb[0].mxu0 %v1936
        %v2113 = vpop.f32.mrb[0].mxu0
        %v2114 = vadd.f32 %v1903, %v2113
        %v2115 = vpop.f32.mrb[0].mxu0
        %2116 = vmatprep.mubr.f32.mxu0 0.0
        %2117 = vmatmul.mubr.f32.gmra.mrb[0].mxu0 %v1939
        %v2118 = vpop.f32.mrb[0].mxu0
        %v2119 = vadd.f32 %v1904, %v2118
        %v2120 = vpop.f32.mrb[0].mxu0
        %2121 = vmatprep.mubr.f32.mxu0 0.0
        %2122 = vmatmul.mubr.f32.gmra.mrb[0].mxu0 %v1942
        %v2123 = vpop.f32.mrb[0].mxu0
        %v2124 = vadd.f32 %v1905, %v2123
        %v2125 = vpop.f32.mrb[0].mxu0
        %2126 = vmatprep.mubr.f32.mxu0 0.0
        %2127 = vmatmul.mubr.f32.gmra.mrb[0].mxu0 %v1945
        %v2128 = vpop.f32.mrb[0].mxu0
        %v2129 = vadd.f32 %v1906, %v2128
        %v2130 = vpop.f32.mrb[0].mxu0
        %2131 = vmatprep.mubr.f32.mxu0 0.0
        %2132 = vmatmul.mubr.f32.gmra.mrb[0].mxu0 %v1948
        %v2133 = vpop.f32.mrb[0].mxu0
        %v2134 = vadd.f32 %v1907, %v2133
        %v2135 = vpop.f32.mrb[0].mxu0
        %2136 = vmatprep.mubr.f32.mxu0 0.0
        %2137 = vmatmul.mubr.f32.gmra.mrb[0].mxu0 %v1951
        %v2138 = vpop.f32.mrb[0].mxu0
        %v2139 = vadd.f32 %v1908, %v2138
        %v2140 = vpop.f32.mrb[0].mxu0
        %2141 = vmatprep.mubr.f32.mxu0 0.0
        %2142 = vmatmul.mubr.f32.gmra.mrb[0].mxu0 %v1954
        %v2143 = vpop.f32.mrb[0].mxu0
        %v2144 = vadd.f32 %v1909, %v2143
        %v2145 = vpop.f32.mrb[0].mxu0
        %2146 = vmatprep.mubr.f32.mxu0 0.0
        %2147 = vmatmul.mubr.f32.gmra.mrb[0].mxu0 %v1957
        %v2148 = vpop.f32.mrb[0].mxu0
        %v2149 = vadd.f32 %v1910, %v2148
        %v2150 = vpop.f32.mrb[0].mxu0
        %2151 = vdwg.mxu0
        %v2152 = vmul.f32 %v2074, 0.125
        %v2153 = vmul.f32 %v2079, 0.125
        %v2154 = vmul.f32 %v2084, 0.125
        %v2155 = vmul.f32 %v2089, 0.125
        %v2156 = vmul.f32 %v2094, 0.125
        %v2157 = vmul.f32 %v2099, 0.125
        %v2158 = vmul.f32 %v2104, 0.125
        %v2159 = vmul.f32 %v2109, 0.125
        %v2160 = vmul.f32 %v2114, 0.125
        %v2161 = vmul.f32 %v2119, 0.125
        %v2162 = vmul.f32 %v2124, 0.125
        %v2163 = vmul.f32 %v2129, 0.125
        %v2164 = vmul.f32 %v2134, 0.125
        %v2165 = vmul.f32 %v2139, 0.125
        %v2166 = vmul.f32 %v2144, 0.125
        %v2167 = vmul.f32 %v2149, 0.125
        %v2168 = vsel %vm1060, -inf, %v2152
        %v2169 = vsel %vm1061, -inf, %v2153
        %v2170 = vsel %vm1062, -inf, %v2154
        %v2171 = vsel %vm1063, -inf, %v2155
        %v2172 = vsel %vm1064, -inf, %v2156
        %v2173 = vsel %vm1065, -inf, %v2157
        %v2174 = vsel %vm1066, -inf, %v2158
        %v2175 = vsel %vm1067, -inf, %v2159
        %v2176 = vsel %vm1068, -inf, %v2160
        %v2177 = vsel %vm1069, -inf, %v2161
        %v2178 = vsel %vm1070, -inf, %v2162
        %v2179 = vsel %vm1071, -inf, %v2163
        %v2180 = vsel %vm1072, -inf, %v2164
        %v2181 = vsel %vm1073, -inf, %v2165
        %v2182 = vsel %vm1074, -inf, %v2166
        %v2183 = vsel %vm1075, -inf, %v2167
        %2184 = vmax.xlane.f32.xlu0 %v2168
        %v2185 = vpop.xlane.xlu0 %2184
        %2186 = vmax.xlane.f32.xlu0 %v2169
        %v2187 = vpop.xlane.xlu0 %2186
        %2188 = vmax.xlane.f32.xlu0 %v2170
        %v2189 = vpop.xlane.xlu0 %2188
        %2190 = vmax.xlane.f32.xlu0 %v2171
        %v2191 = vpop.xlane.xlu0 %2190
        %2192 = vmax.xlane.f32.xlu0 %v2172
        %v2193 = vpop.xlane.xlu0 %2192
        %2194 = vmax.xlane.f32.xlu0 %v2173
        %v2195 = vpop.xlane.xlu0 %2194
        %2196 = vmax.xlane.f32.xlu0 %v2174
        %v2197 = vpop.xlane.xlu0 %2196
        %2198 = vmax.xlane.f32.xlu0 %v2175
        %v2199 = vpop.xlane.xlu0 %2198
        %2200 = vmax.xlane.f32.xlu0 %v2176
        %v2201 = vpop.xlane.xlu0 %2200
        %2202 = vmax.xlane.f32.xlu0 %v2177
        %v2203 = vpop.xlane.xlu0 %2202
        %2204 = vmax.xlane.f32.xlu0 %v2178
        %v2205 = vpop.xlane.xlu0 %2204
        %2206 = vmax.xlane.f32.xlu0 %v2179
        %v2207 = vpop.xlane.xlu0 %2206
        %2208 = vmax.xlane.f32.xlu0 %v2180
        %v2209 = vpop.xlane.xlu0 %2208
        %2210 = vmax.xlane.f32.xlu0 %v2181
        %v2211 = vpop.xlane.xlu0 %2210
        %2212 = vmax.xlane.f32.xlu0 %v2182
        %v2213 = vpop.xlane.xlu0 %2212
        %2214 = vmax.xlane.f32.xlu0 %v2183
        %v2215 = vpop.xlane.xlu0 %2214
        %v2216 = vsub.f32 %v2168, %v2185
        %v2217 = vsub.f32 %v2169, %v2187
        %v2218 = vsub.f32 %v2170, %v2189
        %v2219 = vsub.f32 %v2171, %v2191
        %v2220 = vsub.f32 %v2172, %v2193
        %v2221 = vsub.f32 %v2173, %v2195
        %v2222 = vsub.f32 %v2174, %v2197
        %v2223 = vsub.f32 %v2175, %v2199
        %v2224 = vsub.f32 %v2176, %v2201
        %v2225 = vsub.f32 %v2177, %v2203
        %v2226 = vsub.f32 %v2178, %v2205
        %v2227 = vsub.f32 %v2179, %v2207
        %v2228 = vsub.f32 %v2180, %v2209
        %v2229 = vsub.f32 %v2181, %v2211
        %v2230 = vsub.f32 %v2182, %v2213
        %v2231 = vsub.f32 %v2183, %v2215
        %v2232 = vmul.f32 %v2216, 1.442695
        %v2233 = vpow.pop %v2232
        %v2234 = vmul.f32 %v2217, 1.442695
        %v2235 = vpow.pop %v2234
        %v2236 = vmul.f32 %v2218, 1.442695
        %v2237 = vpow.pop %v2236
        %v2238 = vmul.f32 %v2219, 1.442695
        %v2239 = vpow.pop %v2238
        %v2240 = vmul.f32 %v2220, 1.442695
        %v2241 = vpow.pop %v2240
        %v2242 = vmul.f32 %v2221, 1.442695
        %v2243 = vpow.pop %v2242
        %v2244 = vmul.f32 %v2222, 1.442695
        %v2245 = vpow.pop %v2244
        %v2246 = vmul.f32 %v2223, 1.442695
        %v2247 = vpow.pop %v2246
        %v2248 = vmul.f32 %v2224, 1.442695
        %v2249 = vpow.pop %v2248
        %v2250 = vmul.f32 %v2225, 1.442695
        %v2251 = vpow.pop %v2250
        %v2252 = vmul.f32 %v2226, 1.442695
        %v2253 = vpow.pop %v2252
        %v2254 = vmul.f32 %v2227, 1.442695
        %v2255 = vpow.pop %v2254
        %v2256 = vmul.f32 %v2228, 1.442695
        %v2257 = vpow.pop %v2256
        %v2258 = vmul.f32 %v2229, 1.442695
        %v2259 = vpow.pop %v2258
        %v2260 = vmul.f32 %v2230, 1.442695
        %v2261 = vpow.pop %v2260
        %v2262 = vmul.f32 %v2231, 1.442695
        %v2263 = vpow.pop %v2262
        %2264 = vadd.xlane.f32.xlu0 %v2233
        %v2265 = vpop.xlane.xlu0 %2264
        %2266 = vadd.xlane.f32.xlu0 %v2235
        %v2267 = vpop.xlane.xlu0 %2266
        %2268 = vadd.xlane.f32.xlu0 %v2237
        %v2269 = vpop.xlane.xlu0 %2268
        %2270 = vadd.xlane.f32.xlu0 %v2239
        %v2271 = vpop.xlane.xlu0 %2270
        %2272 = vadd.xlane.f32.xlu0 %v2241
        %v2273 = vpop.xlane.xlu0 %2272
        %2274 = vadd.xlane.f32.xlu0 %v2243
        %v2275 = vpop.xlane.xlu0 %2274
        %2276 = vadd.xlane.f32.xlu0 %v2245
        %v2277 = vpop.xlane.xlu0 %2276
        %2278 = vadd.xlane.f32.xlu0 %v2247
        %v2279 = vpop.xlane.xlu0 %2278
        %2280 = vadd.xlane.f32.xlu0 %v2249
        %v2281 = vpop.xlane.xlu0 %2280
        %2282 = vadd.xlane.f32.xlu0 %v2251
        %v2283 = vpop.xlane.xlu0 %2282
        %2284 = vadd.xlane.f32.xlu0 %v2253
        %v2285 = vpop.xlane.xlu0 %2284
        %2286 = vadd.xlane.f32.xlu0 %v2255
        %v2287 = vpop.xlane.xlu0 %2286
        %2288 = vadd.xlane.f32.xlu0 %v2257
        %v2289 = vpop.xlane.xlu0 %2288
        %2290 = vadd.xlane.f32.xlu0 %v2259
        %v2291 = vpop.xlane.xlu0 %2290
        %2292 = vadd.xlane.f32.xlu0 %v2261
        %v2293 = vpop.xlane.xlu0 %2292
        %2294 = vadd.xlane.f32.xlu0 %v2263
        %v2295 = vpop.xlane.xlu0 %2294
        %v2296 = vrcp.pop %v2265
        %v2297 = vmul.f32 %v2233, %v2296
        %v2298 = vrcp.pop %v2267
        %v2299 = vmul.f32 %v2235, %v2298
        %v2300 = vrcp.pop %v2269
        %v2301 = vmul.f32 %v2237, %v2300
        %v2302 = vrcp.pop %v2271
        %v2303 = vmul.f32 %v2239, %v2302
        %v2304 = vrcp.pop %v2273
        %v2305 = vmul.f32 %v2241, %v2304
        %v2306 = vrcp.pop %v2275
        %v2307 = vmul.f32 %v2243, %v2306
        %v2308 = vrcp.pop %v2277
        %v2309 = vmul.f32 %v2245, %v2308
        %v2310 = vrcp.pop %v2279
        %v2311 = vmul.f32 %v2247, %v2310
        %v2312 = vrcp.pop %v2281
        %v2313 = vmul.f32 %v2249, %v2312
        %v2314 = vrcp.pop %v2283
        %v2315 = vmul.f32 %v2251, %v2314
        %v2316 = vrcp.pop %v2285
        %v2317 = vmul.f32 %v2253, %v2316
        %v2318 = vrcp.pop %v2287
        %v2319 = vmul.f32 %v2255, %v2318
        %v2320 = vrcp.pop %v2289
        %v2321 = vmul.f32 %v2257, %v2320
        %v2322 = vrcp.pop %v2291
        %v2323 = vmul.f32 %v2259, %v2322
        %v2324 = vrcp.pop %v2293
        %v2325 = vmul.f32 %v2261, %v2324
        %v2326 = vrcp.pop %v2295
        %v2327 = vmul.f32 %v2263, %v2326
        %2328 = vmatprep.subr.mxu0 0.0
        %2329 = vmatpush1.msra.mxu0 %v759
        %2330 = vmatprep.subr.mxu0 0.0
        %2331 = vmatpush1.msra.mxu0 %v764
        %2332 = vmatprep.subr.mxu0 0.0
        %2333 = vmatpush1.msra.mxu0 %v769
        %2334 = vmatprep.subr.mxu0 0.0
        %2335 = vmatpush1.msra.mxu0 %v774
        %2336 = vmatprep.subr.mxu0 0.0
        %2337 = vmatpush1.msra.mxu0 %v779
        %2338 = vmatprep.subr.mxu0 0.0
        %2339 = vmatpush1.msra.mxu0 %v784
        %2340 = vmatprep.subr.mxu0 0.0
        %2341 = vmatpush1.msra.mxu0 %v789
        %2342 = vmatprep.subr.mxu0 0.0
        %2343 = vmatpush1.msra.mxu0 %v794
        %2344 = vmatprep.subr.mxu0 0.0
        %2345 = vmatpush1.msra.mxu0 %v799
        %2346 = vmatprep.subr.mxu0 0.0
        %2347 = vmatpush1.msra.mxu0 %v804
        %2348 = vmatprep.subr.mxu0 0.0
        %2349 = vmatpush1.msra.mxu0 %v809
        %2350 = vmatprep.subr.mxu0 0.0
        %2351 = vmatpush1.msra.mxu0 %v814
        %2352 = vmatprep.subr.mxu0 0.0
        %2353 = vmatpush1.msra.mxu0 %v819
        %2354 = vmatprep.subr.mxu0 0.0
        %2355 = vmatpush1.msra.mxu0 %v824
        %2356 = vmatprep.subr.mxu0 0.0
        %2357 = vmatpush1.msra.mxu0 %v829
        %2358 = vmatprep.subr.mxu0 0.0
        %2359 = vmatpush1.msra.mxu0 %v834
        %2360 = vmatprep.subr.mxu0 0.0
        %2361 = vmatpush1.msra.mxu0 0.0
        %2362 = vmatprep.subr.mxu0 0.0
        %2363 = vmatpush1.msra.mxu0 0.0
        %2364 = vmatprep.subr.mxu0 0.0
        %2365 = vmatpush1.msra.mxu0 0.0
        %2366 = vmatprep.subr.mxu0 0.0
        %2367 = vmatpush1.msra.mxu0 0.0
        %2368 = vmatprep.subr.mxu0 0.0
        %2369 = vmatpush1.msra.mxu0 0.0
        %2370 = vmatprep.subr.mxu0 0.0
        %2371 = vmatpush1.msra.mxu0 0.0
        %2372 = vmatprep.subr.mxu0 0.0
        %2373 = vmatpush1.msra.mxu0 0.0
        %2374 = vmatprep.subr.mxu0 0.0
        %2375 = vmatpush1.msra.mxu0 0.0
        %2376 = vmatprep.subr.mxu0 0.0
        %2377 = vmatpush1.msra.mxu0 0.0
        %2378 = vmatprep.subr.mxu0 0.0
        %2379 = vmatpush1.msra.mxu0 0.0
        %2380 = vmatprep.subr.mxu0 0.0
        %2381 = vmatpush1.msra.mxu0 0.0
        %2382 = vmatprep.subr.mxu0 0.0
        %2383 = vmatpush1.msra.mxu0 0.0
        %2384 = vmatprep.subr.mxu0 0.0
        %2385 = vmatpush1.msra.mxu0 0.0
        %2386 = vmatprep.subr.mxu0 0.0
        %2387 = vmatpush1.msra.mxu0 0.0
        %2388 = vmatprep.subr.mxu0 0.0
        %2389 = vmatpush1.msra.mxu0 0.0
        %2390 = vmatprep.subr.mxu0 0.0
        %2391 = vmatpush1.msra.mxu0 0.0
        %2392 = vmatprep.mubr.f32.mxu0 0.0
        %2393 = vmatmul.mubr.f32.gmra.mrb[0].mxu0 %v2297
        %v2394 = vpop.f32.mrb[0].mxu0
        %v2395 = vadd.f32 0.0, %v2394
        %v2396 = vpop.f32.mrb[0].mxu0
        %2397 = vmatprep.mubr.f32.mxu0 0.0
        %2398 = vmatmul.mubr.f32.gmra.mrb[0].mxu0 %v2299
        %v2399 = vpop.f32.mrb[0].mxu0
        %v2400 = vadd.f32 0.0, %v2399
        %v2401 = vpop.f32.mrb[0].mxu0
        %2402 = vmatprep.mubr.f32.mxu0 0.0
        %2403 = vmatmul.mubr.f32.gmra.mrb[0].mxu0 %v2301
        %v2404 = vpop.f32.mrb[0].mxu0
        %v2405 = vadd.f32 0.0, %v2404
        %v2406 = vpop.f32.mrb[0].mxu0
        %2407 = vmatprep.mubr.f32.mxu0 0.0
        %2408 = vmatmul.mubr.f32.gmra.mrb[0].mxu0 %v2303
        %v2409 = vpop.f32.mrb[0].mxu0
        %v2410 = vadd.f32 0.0, %v2409
        %v2411 = vpop.f32.mrb[0].mxu0
        %2412 = vmatprep.mubr.f32.mxu0 0.0
        %2413 = vmatmul.mubr.f32.gmra.mrb[0].mxu0 %v2305
        %v2414 = vpop.f32.mrb[0].mxu0
        %v2415 = vadd.f32 0.0, %v2414
        %v2416 = vpop.f32.mrb[0].mxu0
        %2417 = vmatprep.mubr.f32.mxu0 0.0
        %2418 = vmatmul.mubr.f32.gmra.mrb[0].mxu0 %v2307
        %v2419 = vpop.f32.mrb[0].mxu0
        %v2420 = vadd.f32 0.0, %v2419
        %v2421 = vpop.f32.mrb[0].mxu0
        %2422 = vmatprep.mubr.f32.mxu0 0.0
        %2423 = vmatmul.mubr.f32.gmra.mrb[0].mxu0 %v2309
        %v2424 = vpop.f32.mrb[0].mxu0
        %v2425 = vadd.f32 0.0, %v2424
        %v2426 = vpop.f32.mrb[0].mxu0
        %2427 = vmatprep.mubr.f32.mxu0 0.0
        %2428 = vmatmul.mubr.f32.gmra.mrb[0].mxu0 %v2311
        %v2429 = vpop.f32.mrb[0].mxu0
        %v2430 = vadd.f32 0.0, %v2429
        %v2431 = vpop.f32.mrb[0].mxu0
        %2432 = vmatprep.mubr.f32.mxu0 0.0
        %2433 = vmatmul.mubr.f32.gmra.mrb[0].mxu0 %v2313
        %v2434 = vpop.f32.mrb[0].mxu0
        %v2435 = vadd.f32 0.0, %v2434
        %v2436 = vpop.f32.mrb[0].mxu0
        %2437 = vmatprep.mubr.f32.mxu0 0.0
        %2438 = vmatmul.mubr.f32.gmra.mrb[0].mxu0 %v2315
        %v2439 = vpop.f32.mrb[0].mxu0
        %v2440 = vadd.f32 0.0, %v2439
        %v2441 = vpop.f32.mrb[0].mxu0
        %2442 = vmatprep.mubr.f32.mxu0 0.0
        %2443 = vmatmul.mubr.f32.gmra.mrb[0].mxu0 %v2317
        %v2444 = vpop.f32.mrb[0].mxu0
        %v2445 = vadd.f32 0.0, %v2444
        %v2446 = vpop.f32.mrb[0].mxu0
        %2447 = vmatprep.mubr.f32.mxu0 0.0
        %2448 = vmatmul.mubr.f32.gmra.mrb[0].mxu0 %v2319
        %v2449 = vpop.f32.mrb[0].mxu0
        %v2450 = vadd.f32 0.0, %v2449
        %v2451 = vpop.f32.mrb[0].mxu0
        %2452 = vmatprep.mubr.f32.mxu0 0.0
        %2453 = vmatmul.mubr.f32.gmra.mrb[0].mxu0 %v2321
        %v2454 = vpop.f32.mrb[0].mxu0
        %v2455 = vadd.f32 0.0, %v2454
        %v2456 = vpop.f32.mrb[0].mxu0
        %2457 = vmatprep.mubr.f32.mxu0 0.0
        %2458 = vmatmul.mubr.f32.gmra.mrb[0].mxu0 %v2323
        %v2459 = vpop.f32.mrb[0].mxu0
        %v2460 = vadd.f32 0.0, %v2459
        %v2461 = vpop.f32.mrb[0].mxu0
        %2462 = vmatprep.mubr.f32.mxu0 0.0
        %2463 = vmatmul.mubr.f32.gmra.mrb[0].mxu0 %v2325
        %v2464 = vpop.f32.mrb[0].mxu0
        %v2465 = vadd.f32 0.0, %v2464
        %v2466 = vpop.f32.mrb[0].mxu0
        %2467 = vmatprep.mubr.f32.mxu0 0.0
        %2468 = vmatmul.mubr.f32.gmra.mrb[0].mxu0 %v2327
        %v2469 = vpop.f32.mrb[0].mxu0
        %v2470 = vadd.f32 0.0, %v2469
        %v2471 = vpop.f32.mrb[0].mxu0
        %2472 = vdwg.mxu0
        %2473 = vrot.lane.b32.xlu0 %v1028, 64
        %v2474 = vpop.permute.xlu0 %2473
        %2475 = vrot.lane.b32.xlu0 %v1029, 64
        %v2476 = vpop.permute.xlu0 %2475
        %2477 = vrot.lane.b32.xlu0 %v1030, 64
        %v2478 = vpop.permute.xlu0 %2477
        %2479 = vrot.lane.b32.xlu0 %v1031, 64
        %v2480 = vpop.permute.xlu0 %2479
        %2481 = vrot.lane.b32.xlu0 %v1032, 64
        %v2482 = vpop.permute.xlu0 %2481
        %2483 = vrot.lane.b32.xlu0 %v1033, 64
        %v2484 = vpop.permute.xlu0 %2483
        %2485 = vrot.lane.b32.xlu0 %v1034, 64
        %v2486 = vpop.permute.xlu0 %2485
        %2487 = vrot.lane.b32.xlu0 %v1035, 64
        %v2488 = vpop.permute.xlu0 %2487
        %2489 = vrot.lane.b32.xlu0 %v1036, 64
        %v2490 = vpop.permute.xlu0 %2489
        %2491 = vrot.lane.b32.xlu0 %v1037, 64
        %v2492 = vpop.permute.xlu0 %2491
        %2493 = vrot.lane.b32.xlu0 %v1038, 64
        %v2494 = vpop.permute.xlu0 %2493
        %2495 = vrot.lane.b32.xlu0 %v1039, 64
        %v2496 = vpop.permute.xlu0 %2495
        %2497 = vrot.lane.b32.xlu0 %v1040, 64
        %v2498 = vpop.permute.xlu0 %2497
        %2499 = vrot.lane.b32.xlu0 %v1041, 64
        %v2500 = vpop.permute.xlu0 %2499
        %2501 = vrot.lane.b32.xlu0 %v1042, 64
        %v2502 = vpop.permute.xlu0 %2501
        %2503 = vrot.lane.b32.xlu0 %v1043, 64
        %v2504 = vpop.permute.xlu0 %2503
        %2505 = vrot.lane.b32.xlu0 %v920, 64
        %v2506 = vpop.permute.xlu0 %2505
        %2507 = vrot.lane.b32.xlu0 %v925, 64
        %v2508 = vpop.permute.xlu0 %2507
        %2509 = vrot.lane.b32.xlu0 %v930, 64
        %v2510 = vpop.permute.xlu0 %2509
        %2511 = vrot.lane.b32.xlu0 %v935, 64
        %v2512 = vpop.permute.xlu0 %2511
        %2513 = vrot.lane.b32.xlu0 %v940, 64
        %v2514 = vpop.permute.xlu0 %2513
        %2515 = vrot.lane.b32.xlu0 %v945, 64
        %v2516 = vpop.permute.xlu0 %2515
        %2517 = vrot.lane.b32.xlu0 %v950, 64
        %v2518 = vpop.permute.xlu0 %2517
        %2519 = vrot.lane.b32.xlu0 %v955, 64
        %v2520 = vpop.permute.xlu0 %2519
        %2521 = vrot.lane.b32.xlu0 %v960, 64
        %v2522 = vpop.permute.xlu0 %2521
        %2523 = vrot.lane.b32.xlu0 %v965, 64
        %v2524 = vpop.permute.xlu0 %2523
        %2525 = vrot.lane.b32.xlu0 %v970, 64
        %v2526 = vpop.permute.xlu0 %2525
        %2527 = vrot.lane.b32.xlu0 %v975, 64
        %v2528 = vpop.permute.xlu0 %2527
        %2529 = vrot.lane.b32.xlu0 %v980, 64
        %v2530 = vpop.permute.xlu0 %2529
        %2531 = vrot.lane.b32.xlu0 %v985, 64
        %v2532 = vpop.permute.xlu0 %2531
        %2533 = vrot.lane.b32.xlu0 %v990, 64
        %v2534 = vpop.permute.xlu0 %2533
        %2535 = vrot.lane.b32.xlu0 %v995, 64
        %v2536 = vpop.permute.xlu0 %2535
        %v2537 = vsel %vm1076, %v2474, 0
        %v2539 = vsel %vm1076, %v2476, 0
        %v2541 = vsel %vm1076, %v2478, 0
        %v2543 = vsel %vm1076, %v2480, 0
        %v2545 = vsel %vm1076, %v2482, 0
        %v2547 = vsel %vm1076, %v2484, 0
        %v2549 = vsel %vm1076, %v2486, 0
        %v2551 = vsel %vm1076, %v2488, 0
        %v2553 = vsel %vm1076, %v2490, 0
        %v2555 = vsel %vm1076, %v2492, 0
        %v2557 = vsel %vm1076, %v2494, 0
        %v2559 = vsel %vm1076, %v2496, 0
        %v2561 = vsel %vm1076, %v2498, 0
        %v2563 = vsel %vm1076, %v2500, 0
        %v2565 = vsel %vm1076, %v2502, 0
        %v2567 = vsel %vm1076, %v2504, 0
        %v2569 = vsel %vm1076, %v2506, 0
        %v2571 = vsel %vm1076, %v2508, 0
        %v2573 = vsel %vm1076, %v2510, 0
        %v2575 = vsel %vm1076, %v2512, 0
        %v2577 = vsel %vm1076, %v2514, 0
        %v2579 = vsel %vm1076, %v2516, 0
        %v2581 = vsel %vm1076, %v2518, 0
        %v2583 = vsel %vm1076, %v2520, 0
        %v2585 = vsel %vm1076, %v2522, 0
        %v2587 = vsel %vm1076, %v2524, 0
        %v2589 = vsel %vm1076, %v2526, 0
        %v2591 = vsel %vm1076, %v2528, 0
        %v2593 = vsel %vm1076, %v2530, 0
        %v2595 = vsel %vm1076, %v2532, 0
        %v2597 = vsel %vm1076, %v2534, 0
        %v2599 = vsel %vm1076, %v2536, 0
        %2601 = vmatprep.subr.mxu0 0.0
        %2602 = vmatpush1.xpose.msra.mxu0 %v2569
        %2603 = vmatprep.subr.mxu0 0.0
        %2604 = vmatpush1.xpose.msra.mxu0 %v2571
        %2605 = vmatprep.subr.mxu0 0.0
        %2606 = vmatpush1.xpose.msra.mxu0 %v2573
        %2607 = vmatprep.subr.mxu0 0.0
        %2608 = vmatpush1.xpose.msra.mxu0 %v2575
        %2609 = vmatprep.subr.mxu0 0.0
        %2610 = vmatpush1.xpose.msra.mxu0 %v2577
        %2611 = vmatprep.subr.mxu0 0.0
        %2612 = vmatpush1.xpose.msra.mxu0 %v2579
        %2613 = vmatprep.subr.mxu0 0.0
        %2614 = vmatpush1.xpose.msra.mxu0 %v2581
        %2615 = vmatprep.subr.mxu0 0.0
        %2616 = vmatpush1.xpose.msra.mxu0 %v2583
        %2617 = vmatprep.subr.mxu0 0.0
        %2618 = vmatpush1.xpose.msra.mxu0 %v2585
        %2619 = vmatprep.subr.mxu0 0.0
        %2620 = vmatpush1.xpose.msra.mxu0 %v2587
        %2621 = vmatprep.subr.mxu0 0.0
        %2622 = vmatpush1.xpose.msra.mxu0 %v2589
        %2623 = vmatprep.subr.mxu0 0.0
        %2624 = vmatpush1.xpose.msra.mxu0 %v2591
        %2625 = vmatprep.subr.mxu0 0.0
        %2626 = vmatpush1.xpose.msra.mxu0 %v2593
        %2627 = vmatprep.subr.mxu0 0.0
        %2628 = vmatpush1.xpose.msra.mxu0 %v2595
        %2629 = vmatprep.subr.mxu0 0.0
        %2630 = vmatpush1.xpose.msra.mxu0 %v2597
        %2631 = vmatprep.subr.mxu0 0.0
        %2632 = vmatpush1.xpose.msra.mxu0 %v2599
        %2633 = vmatprep.subr.mxu0 0.0
        %2634 = vmatpush1.xpose.msra.mxu0 0.0
        %2635 = vmatprep.subr.mxu0 0.0
        %2636 = vmatpush1.xpose.msra.mxu0 0.0
        %2637 = vmatprep.subr.mxu0 0.0
        %2638 = vmatpush1.xpose.msra.mxu0 0.0
        %2639 = vmatprep.subr.mxu0 0.0
        %2640 = vmatpush1.xpose.msra.mxu0 0.0
        %2641 = vmatprep.subr.mxu0 0.0
        %2642 = vmatpush1.xpose.msra.mxu0 0.0
        %2643 = vmatprep.subr.mxu0 0.0
        %2644 = vmatpush1.xpose.msra.mxu0 0.0
        %2645 = vmatprep.subr.mxu0 0.0
        %2646 = vmatpush1.xpose.msra.mxu0 0.0
        %2647 = vmatprep.subr.mxu0 0.0
        %2648 = vmatpush1.xpose.msra.mxu0 0.0
        %2649 = vmatprep.subr.mxu0 0.0
        %2650 = vmatpush1.xpose.msra.mxu0 0.0
        %2651 = vmatprep.subr.mxu0 0.0
        %2652 = vmatpush1.xpose.msra.mxu0 0.0
        %2653 = vmatprep.subr.mxu0 0.0
        %2654 = vmatpush1.xpose.msra.mxu0 0.0
        %2655 = vmatprep.subr.mxu0 0.0
        %2656 = vmatpush1.xpose.msra.mxu0 0.0
        %2657 = vmatprep.subr.mxu0 0.0
        %2658 = vmatpush1.xpose.msra.mxu0 0.0
        %2659 = vmatprep.subr.mxu0 0.0
        %2660 = vmatpush1.xpose.msra.mxu0 0.0
        %2661 = vmatprep.subr.mxu0 0.0
        %2662 = vmatpush1.xpose.msra.mxu0 0.0
        %2663 = vmatprep.subr.mxu0 0.0
        %2664 = vmatpush1.xpose.msra.mxu0 0.0
        %2665 = vmatprep.mubr.f32.mxu0 0.0
        %2666 = vmatmul.mubr.f32.gmra.mrb[0].mxu0 %v2537
        %v2667 = vpop.f32.mrb[0].mxu0
        %v2668 = vadd.f32 0.0, %v2667
        %v2669 = vpop.f32.mrb[0].mxu0
        %2670 = vmatprep.mubr.f32.mxu0 0.0
        %2671 = vmatmul.mubr.f32.gmra.mrb[0].mxu0 %v2539
        %v2672 = vpop.f32.mrb[0].mxu0
        %v2673 = vadd.f32 0.0, %v2672
        %v2674 = vpop.f32.mrb[0].mxu0
        %2675 = vmatprep.mubr.f32.mxu0 0.0
        %2676 = vmatmul.mubr.f32.gmra.mrb[0].mxu0 %v2541
        %v2677 = vpop.f32.mrb[0].mxu0
        %v2678 = vadd.f32 0.0, %v2677
        %v2679 = vpop.f32.mrb[0].mxu0
        %2680 = vmatprep.mubr.f32.mxu0 0.0
        %2681 = vmatmul.mubr.f32.gmra.mrb[0].mxu0 %v2543
        %v2682 = vpop.f32.mrb[0].mxu0
        %v2683 = vadd.f32 0.0, %v2682
        %v2684 = vpop.f32.mrb[0].mxu0
        %2685 = vmatprep.mubr.f32.mxu0 0.0
        %2686 = vmatmul.mubr.f32.gmra.mrb[0].mxu0 %v2545
        %v2687 = vpop.f32.mrb[0].mxu0
        %v2688 = vadd.f32 0.0, %v2687
        %v2689 = vpop.f32.mrb[0].mxu0
        %2690 = vmatprep.mubr.f32.mxu0 0.0
        %2691 = vmatmul.mubr.f32.gmra.mrb[0].mxu0 %v2547
        %v2692 = vpop.f32.mrb[0].mxu0
        %v2693 = vadd.f32 0.0, %v2692
        %v2694 = vpop.f32.mrb[0].mxu0
        %2695 = vmatprep.mubr.f32.mxu0 0.0
        %2696 = vmatmul.mubr.f32.gmra.mrb[0].mxu0 %v2549
        %v2697 = vpop.f32.mrb[0].mxu0
        %v2698 = vadd.f32 0.0, %v2697
        %v2699 = vpop.f32.mrb[0].mxu0
        %2700 = vmatprep.mubr.f32.mxu0 0.0
        %2701 = vmatmul.mubr.f32.gmra.mrb[0].mxu0 %v2551
        %v2702 = vpop.f32.mrb[0].mxu0
        %v2703 = vadd.f32 0.0, %v2702
        %v2704 = vpop.f32.mrb[0].mxu0
        %2705 = vmatprep.mubr.f32.mxu0 0.0
        %2706 = vmatmul.mubr.f32.gmra.mrb[0].mxu0 %v2553
        %v2707 = vpop.f32.mrb[0].mxu0
        %v2708 = vadd.f32 0.0, %v2707
        %v2709 = vpop.f32.mrb[0].mxu0
        %2710 = vmatprep.mubr.f32.mxu0 0.0
        %2711 = vmatmul.mubr.f32.gmra.mrb[0].mxu0 %v2555
        %v2712 = vpop.f32.mrb[0].mxu0
        %v2713 = vadd.f32 0.0, %v2712
        %v2714 = vpop.f32.mrb[0].mxu0
        %2715 = vmatprep.mubr.f32.mxu0 0.0
        %2716 = vmatmul.mubr.f32.gmra.mrb[0].mxu0 %v2557
        %v2717 = vpop.f32.mrb[0].mxu0
        %v2718 = vadd.f32 0.0, %v2717
        %v2719 = vpop.f32.mrb[0].mxu0
        %2720 = vmatprep.mubr.f32.mxu0 0.0
        %2721 = vmatmul.mubr.f32.gmra.mrb[0].mxu0 %v2559
        %v2722 = vpop.f32.mrb[0].mxu0
        %v2723 = vadd.f32 0.0, %v2722
        %v2724 = vpop.f32.mrb[0].mxu0
        %2725 = vmatprep.mubr.f32.mxu0 0.0
        %2726 = vmatmul.mubr.f32.gmra.mrb[0].mxu0 %v2561
        %v2727 = vpop.f32.mrb[0].mxu0
        %v2728 = vadd.f32 0.0, %v2727
        %v2729 = vpop.f32.mrb[0].mxu0
        %2730 = vmatprep.mubr.f32.mxu0 0.0
        %2731 = vmatmul.mubr.f32.gmra.mrb[0].mxu0 %v2563
        %v2732 = vpop.f32.mrb[0].mxu0
        %v2733 = vadd.f32 0.0, %v2732
        %v2734 = vpop.f32.mrb[0].mxu0
        %2735 = vmatprep.mubr.f32.mxu0 0.0
        %2736 = vmatmul.mubr.f32.gmra.mrb[0].mxu0 %v2565
        %v2737 = vpop.f32.mrb[0].mxu0
        %v2738 = vadd.f32 0.0, %v2737
        %v2739 = vpop.f32.mrb[0].mxu0
        %2740 = vmatprep.mubr.f32.mxu0 0.0
        %2741 = vmatmul.mubr.f32.gmra.mrb[0].mxu0 %v2567
        %v2742 = vpop.f32.mrb[0].mxu0
        %v2743 = vadd.f32 0.0, %v2742
        %v2744 = vpop.f32.mrb[0].mxu0
        %2745 = vdwg.mxu0
        %2746 = vrot.lane.b32.xlu0 %v2668, 127
        %v2747 = vpop.permute.xlu0 %2746
        %2748 = vrot.lane.b32.xlu0 %v2673, 127
        %v2749 = vpop.permute.xlu0 %2748
        %2750 = vrot.lane.b32.xlu0 %v2678, 127
        %v2751 = vpop.permute.xlu0 %2750
        %2752 = vrot.lane.b32.xlu0 %v2683, 127
        %v2753 = vpop.permute.xlu0 %2752
        %2754 = vrot.lane.b32.xlu0 %v2688, 127
        %v2755 = vpop.permute.xlu0 %2754
        %2756 = vrot.lane.b32.xlu0 %v2693, 127
        %v2757 = vpop.permute.xlu0 %2756
        %2758 = vrot.lane.b32.xlu0 %v2698, 127
        %v2759 = vpop.permute.xlu0 %2758
        %2760 = vrot.lane.b32.xlu0 %v2703, 127
        %v2761 = vpop.permute.xlu0 %2760
        %2762 = vrot.lane.b32.xlu0 %v2708, 127
        %v2763 = vpop.permute.xlu0 %2762
        %2764 = vrot.lane.b32.xlu0 %v2713, 127
        %v2765 = vpop.permute.xlu0 %2764
        %2766 = vrot.lane.b32.xlu0 %v2718, 127
        %v2767 = vpop.permute.xlu0 %2766
        %2768 = vrot.lane.b32.xlu0 %v2723, 127
        %v2769 = vpop.permute.xlu0 %2768
        %2770 = vrot.lane.b32.xlu0 %v2728, 127
        %v2771 = vpop.permute.xlu0 %2770
        %2772 = vrot.lane.b32.xlu0 %v2733, 127
        %v2773 = vpop.permute.xlu0 %2772
        %2774 = vrot.lane.b32.xlu0 %v2738, 127
        %v2775 = vpop.permute.xlu0 %2774
        %2776 = vrot.lane.b32.xlu0 %v2743, 127
        %v2777 = vpop.permute.xlu0 %2776
        %v2778 = vsel %vm1399, %v2747, %v2668
        %v2779 = vsel %vm1400, %v2749, %v2673
        %v2780 = vsel %vm1401, %v2751, %v2678
        %v2781 = vsel %vm1402, %v2753, %v2683
        %v2782 = vsel %vm1403, %v2755, %v2688
        %v2783 = vsel %vm1404, %v2757, %v2693
        %v2784 = vsel %vm1405, %v2759, %v2698
        %v2785 = vsel %vm1406, %v2761, %v2703
        %v2786 = vsel %vm1407, %v2763, %v2708
        %v2787 = vsel %vm1408, %v2765, %v2713
        %v2788 = vsel %vm1409, %v2767, %v2718
        %v2789 = vsel %vm1410, %v2769, %v2723
        %v2790 = vsel %vm1411, %v2771, %v2728
        %v2791 = vsel %vm1412, %v2773, %v2733
        %v2792 = vsel %vm1413, %v2775, %v2738
        %v2793 = vsel %vm1414, %v2777, %v2743
        %2794 = vrot.lane.b32.xlu0 %v2778, 126
        %v2795 = vpop.permute.xlu0 %2794
        %2796 = vrot.lane.b32.xlu0 %v2779, 126
        %v2797 = vpop.permute.xlu0 %2796
        %2798 = vrot.lane.b32.xlu0 %v2780, 126
        %v2799 = vpop.permute.xlu0 %2798
        %2800 = vrot.lane.b32.xlu0 %v2781, 126
        %v2801 = vpop.permute.xlu0 %2800
        %2802 = vrot.lane.b32.xlu0 %v2782, 126
        %v2803 = vpop.permute.xlu0 %2802
        %2804 = vrot.lane.b32.xlu0 %v2783, 126
        %v2805 = vpop.permute.xlu0 %2804
        %2806 = vrot.lane.b32.xlu0 %v2784, 126
        %v2807 = vpop.permute.xlu0 %2806
        %2808 = vrot.lane.b32.xlu0 %v2785, 126
        %v2809 = vpop.permute.xlu0 %2808
        %2810 = vrot.lane.b32.xlu0 %v2786, 126
        %v2811 = vpop.permute.xlu0 %2810
        %2812 = vrot.lane.b32.xlu0 %v2787, 126
        %v2813 = vpop.permute.xlu0 %2812
        %2814 = vrot.lane.b32.xlu0 %v2788, 126
        %v2815 = vpop.permute.xlu0 %2814
        %2816 = vrot.lane.b32.xlu0 %v2789, 126
        %v2817 = vpop.permute.xlu0 %2816
        %2818 = vrot.lane.b32.xlu0 %v2790, 126
        %v2819 = vpop.permute.xlu0 %2818
        %2820 = vrot.lane.b32.xlu0 %v2791, 126
        %v2821 = vpop.permute.xlu0 %2820
        %2822 = vrot.lane.b32.xlu0 %v2792, 126
        %v2823 = vpop.permute.xlu0 %2822
        %2824 = vrot.lane.b32.xlu0 %v2793, 126
        %v2825 = vpop.permute.xlu0 %2824
        %v2826 = vsel %vm1479, %v2795, %v2778
        %v2827 = vsel %vm1480, %v2797, %v2779
        %v2828 = vsel %vm1481, %v2799, %v2780
        %v2829 = vsel %vm1482, %v2801, %v2781
        %v2830 = vsel %vm1483, %v2803, %v2782
        %v2831 = vsel %vm1484, %v2805, %v2783
        %v2832 = vsel %vm1485, %v2807, %v2784
        %v2833 = vsel %vm1486, %v2809, %v2785
        %v2834 = vsel %vm1487, %v2811, %v2786
        %v2835 = vsel %vm1488, %v2813, %v2787
        %v2836 = vsel %vm1489, %v2815, %v2788
        %v2837 = vsel %vm1490, %v2817, %v2789
        %v2838 = vsel %vm1491, %v2819, %v2790
        %v2839 = vsel %vm1492, %v2821, %v2791
        %v2840 = vsel %vm1493, %v2823, %v2792
        %v2841 = vsel %vm1494, %v2825, %v2793
        %2842 = vrot.lane.b32.xlu0 %v2826, 124
        %v2843 = vpop.permute.xlu0 %2842
        %2844 = vrot.lane.b32.xlu0 %v2827, 124
        %v2845 = vpop.permute.xlu0 %2844
        %2846 = vrot.lane.b32.xlu0 %v2828, 124
        %v2847 = vpop.permute.xlu0 %2846
        %2848 = vrot.lane.b32.xlu0 %v2829, 124
        %v2849 = vpop.permute.xlu0 %2848
        %2850 = vrot.lane.b32.xlu0 %v2830, 124
        %v2851 = vpop.permute.xlu0 %2850
        %2852 = vrot.lane.b32.xlu0 %v2831, 124
        %v2853 = vpop.permute.xlu0 %2852
        %2854 = vrot.lane.b32.xlu0 %v2832, 124
        %v2855 = vpop.permute.xlu0 %2854
        %2856 = vrot.lane.b32.xlu0 %v2833, 124
        %v2857 = vpop.permute.xlu0 %2856
        %2858 = vrot.lane.b32.xlu0 %v2834, 124
        %v2859 = vpop.permute.xlu0 %2858
        %2860 = vrot.lane.b32.xlu0 %v2835, 124
        %v2861 = vpop.permute.xlu0 %2860
        %2862 = vrot.lane.b32.xlu0 %v2836, 124
        %v2863 = vpop.permute.xlu0 %2862
        %2864 = vrot.lane.b32.xlu0 %v2837, 124
        %v2865 = vpop.permute.xlu0 %2864
        %2866 = vrot.lane.b32.xlu0 %v2838, 124
        %v2867 = vpop.permute.xlu0 %2866
        %2868 = vrot.lane.b32.xlu0 %v2839, 124
        %v2869 = vpop.permute.xlu0 %2868
        %2870 = vrot.lane.b32.xlu0 %v2840, 124
        %v2871 = vpop.permute.xlu0 %2870
        %2872 = vrot.lane.b32.xlu0 %v2841, 124
        %v2873 = vpop.permute.xlu0 %2872
        %v2874 = vsel %vm1559, %v2843, %v2826
        %v2875 = vsel %vm1560, %v2845, %v2827
        %v2876 = vsel %vm1561, %v2847, %v2828
        %v2877 = vsel %vm1562, %v2849, %v2829
        %v2878 = vsel %vm1563, %v2851, %v2830
        %v2879 = vsel %vm1564, %v2853, %v2831
        %v2880 = vsel %vm1565, %v2855, %v2832
        %v2881 = vsel %vm1566, %v2857, %v2833
        %v2882 = vsel %vm1567, %v2859, %v2834
        %v2883 = vsel %vm1568, %v2861, %v2835
        %v2884 = vsel %vm1569, %v2863, %v2836
        %v2885 = vsel %vm1570, %v2865, %v2837
        %v2886 = vsel %vm1571, %v2867, %v2838
        %v2887 = vsel %vm1572, %v2869, %v2839
        %v2888 = vsel %vm1573, %v2871, %v2840
        %v2889 = vsel %vm1574, %v2873, %v2841
        %2890 = vrot.lane.b32.xlu0 %v2874, 120
        %v2891 = vpop.permute.xlu0 %2890
        %2892 = vrot.lane.b32.xlu0 %v2875, 120
        %v2893 = vpop.permute.xlu0 %2892
        %2894 = vrot.lane.b32.xlu0 %v2876, 120
        %v2895 = vpop.permute.xlu0 %2894
        %2896 = vrot.lane.b32.xlu0 %v2877, 120
        %v2897 = vpop.permute.xlu0 %2896
        %2898 = vrot.lane.b32.xlu0 %v2878, 120
        %v2899 = vpop.permute.xlu0 %2898
        %2900 = vrot.lane.b32.xlu0 %v2879, 120
        %v2901 = vpop.permute.xlu0 %2900
        %2902 = vrot.lane.b32.xlu0 %v2880, 120
        %v2903 = vpop.permute.xlu0 %2902
        %2904 = vrot.lane.b32.xlu0 %v2881, 120
        %v2905 = vpop.permute.xlu0 %2904
        %2906 = vrot.lane.b32.xlu0 %v2882, 120
        %v2907 = vpop.permute.xlu0 %2906
        %2908 = vrot.lane.b32.xlu0 %v2883, 120
        %v2909 = vpop.permute.xlu0 %2908
        %2910 = vrot.lane.b32.xlu0 %v2884, 120
        %v2911 = vpop.permute.xlu0 %2910
        %2912 = vrot.lane.b32.xlu0 %v2885, 120
        %v2913 = vpop.permute.xlu0 %2912
        %2914 = vrot.lane.b32.xlu0 %v2886, 120
        %v2915 = vpop.permute.xlu0 %2914
        %2916 = vrot.lane.b32.xlu0 %v2887, 120
        %v2917 = vpop.permute.xlu0 %2916
        %2918 = vrot.lane.b32.xlu0 %v2888, 120
        %v2919 = vpop.permute.xlu0 %2918
        %2920 = vrot.lane.b32.xlu0 %v2889, 120
        %v2921 = vpop.permute.xlu0 %2920
        %v2922 = vsel %vm1639, %v2891, %v2874
        %v2923 = vsel %vm1640, %v2893, %v2875
        %v2924 = vsel %vm1641, %v2895, %v2876
        %v2925 = vsel %vm1642, %v2897, %v2877
        %v2926 = vsel %vm1643, %v2899, %v2878
        %v2927 = vsel %vm1644, %v2901, %v2879
        %v2928 = vsel %vm1645, %v2903, %v2880
        %v2929 = vsel %vm1646, %v2905, %v2881
        %v2930 = vsel %vm1647, %v2907, %v2882
        %v2931 = vsel %vm1648, %v2909, %v2883
        %v2932 = vsel %vm1649, %v2911, %v2884
        %v2933 = vsel %vm1650, %v2913, %v2885
        %v2934 = vsel %vm1651, %v2915, %v2886
        %v2935 = vsel %vm1652, %v2917, %v2887
        %v2936 = vsel %vm1653, %v2919, %v2888
        %v2937 = vsel %vm1654, %v2921, %v2889
        %2938 = vrot.lane.b32.xlu0 %v2922, 112
        %v2939 = vpop.permute.xlu0 %2938
        %2940 = vrot.lane.b32.xlu0 %v2923, 112
        %v2941 = vpop.permute.xlu0 %2940
        %2942 = vrot.lane.b32.xlu0 %v2924, 112
        %v2943 = vpop.permute.xlu0 %2942
        %2944 = vrot.lane.b32.xlu0 %v2925, 112
        %v2945 = vpop.permute.xlu0 %2944
        %2946 = vrot.lane.b32.xlu0 %v2926, 112
        %v2947 = vpop.permute.xlu0 %2946
        %2948 = vrot.lane.b32.xlu0 %v2927, 112
        %v2949 = vpop.permute.xlu0 %2948
        %2950 = vrot.lane.b32.xlu0 %v2928, 112
        %v2951 = vpop.permute.xlu0 %2950
        %2952 = vrot.lane.b32.xlu0 %v2929, 112
        %v2953 = vpop.permute.xlu0 %2952
        %2954 = vrot.lane.b32.xlu0 %v2930, 112
        %v2955 = vpop.permute.xlu0 %2954
        %2956 = vrot.lane.b32.xlu0 %v2931, 112
        %v2957 = vpop.permute.xlu0 %2956
        %2958 = vrot.lane.b32.xlu0 %v2932, 112
        %v2959 = vpop.permute.xlu0 %2958
        %2960 = vrot.lane.b32.xlu0 %v2933, 112
        %v2961 = vpop.permute.xlu0 %2960
        %2962 = vrot.lane.b32.xlu0 %v2934, 112
        %v2963 = vpop.permute.xlu0 %2962
        %2964 = vrot.lane.b32.xlu0 %v2935, 112
        %v2965 = vpop.permute.xlu0 %2964
        %2966 = vrot.lane.b32.xlu0 %v2936, 112
        %v2967 = vpop.permute.xlu0 %2966
        %2968 = vrot.lane.b32.xlu0 %v2937, 112
        %v2969 = vpop.permute.xlu0 %2968
        %v2970 = vsel %vm1719, %v2939, %v2922
        %v2971 = vsel %vm1720, %v2941, %v2923
        %v2972 = vsel %vm1721, %v2943, %v2924
        %v2973 = vsel %vm1722, %v2945, %v2925
        %v2974 = vsel %vm1723, %v2947, %v2926
        %v2975 = vsel %vm1724, %v2949, %v2927
        %v2976 = vsel %vm1725, %v2951, %v2928
        %v2977 = vsel %vm1726, %v2953, %v2929
        %v2978 = vsel %vm1727, %v2955, %v2930
        %v2979 = vsel %vm1728, %v2957, %v2931
        %v2980 = vsel %vm1729, %v2959, %v2932
        %v2981 = vsel %vm1730, %v2961, %v2933
        %v2982 = vsel %vm1731, %v2963, %v2934
        %v2983 = vsel %vm1732, %v2965, %v2935
        %v2984 = vsel %vm1733, %v2967, %v2936
        %v2985 = vsel %vm1734, %v2969, %v2937
        %2986 = vrot.lane.b32.xlu0 %v2970, 96
        %v2987 = vpop.permute.xlu0 %2986
        %2988 = vrot.lane.b32.xlu0 %v2971, 96
        %v2989 = vpop.permute.xlu0 %2988
        %2990 = vrot.lane.b32.xlu0 %v2972, 96
        %v2991 = vpop.permute.xlu0 %2990
        %2992 = vrot.lane.b32.xlu0 %v2973, 96
        %v2993 = vpop.permute.xlu0 %2992
        %2994 = vrot.lane.b32.xlu0 %v2974, 96
        %v2995 = vpop.permute.xlu0 %2994
        %2996 = vrot.lane.b32.xlu0 %v2975, 96
        %v2997 = vpop.permute.xlu0 %2996
        %2998 = vrot.lane.b32.xlu0 %v2976, 96
        %v2999 = vpop.permute.xlu0 %2998
        %3000 = vrot.lane.b32.xlu0 %v2977, 96
        %v3001 = vpop.permute.xlu0 %3000
        %3002 = vrot.lane.b32.xlu0 %v2978, 96
        %v3003 = vpop.permute.xlu0 %3002
        %3004 = vrot.lane.b32.xlu0 %v2979, 96
        %v3005 = vpop.permute.xlu0 %3004
        %3006 = vrot.lane.b32.xlu0 %v2980, 96
        %v3007 = vpop.permute.xlu0 %3006
        %3008 = vrot.lane.b32.xlu0 %v2981, 96
        %v3009 = vpop.permute.xlu0 %3008
        %3010 = vrot.lane.b32.xlu0 %v2982, 96
        %v3011 = vpop.permute.xlu0 %3010
        %3012 = vrot.lane.b32.xlu0 %v2983, 96
        %v3013 = vpop.permute.xlu0 %3012
        %3014 = vrot.lane.b32.xlu0 %v2984, 96
        %v3015 = vpop.permute.xlu0 %3014
        %3016 = vrot.lane.b32.xlu0 %v2985, 96
        %v3017 = vpop.permute.xlu0 %3016
        %v3018 = vsel %vm1799, %v2987, %v2970
        %v3019 = vsel %vm1800, %v2989, %v2971
        %v3020 = vsel %vm1801, %v2991, %v2972
        %v3021 = vsel %vm1802, %v2993, %v2973
        %v3022 = vsel %vm1803, %v2995, %v2974
        %v3023 = vsel %vm1804, %v2997, %v2975
        %v3024 = vsel %vm1805, %v2999, %v2976
        %v3025 = vsel %vm1806, %v3001, %v2977
        %v3026 = vsel %vm1807, %v3003, %v2978
        %v3027 = vsel %vm1808, %v3005, %v2979
        %v3028 = vsel %vm1809, %v3007, %v2980
        %v3029 = vsel %vm1810, %v3009, %v2981
        %v3030 = vsel %vm1811, %v3011, %v2982
        %v3031 = vsel %vm1812, %v3013, %v2983
        %v3032 = vsel %vm1813, %v3015, %v2984
        %v3033 = vsel %vm1814, %v3017, %v2985
        %3034 = vrot.lane.b32.xlu0 %v3018, 64
        %v3035 = vpop.permute.xlu0 %3034
        %3036 = vrot.lane.b32.xlu0 %v3019, 64
        %v3037 = vpop.permute.xlu0 %3036
        %3038 = vrot.lane.b32.xlu0 %v3020, 64
        %v3039 = vpop.permute.xlu0 %3038
        %3040 = vrot.lane.b32.xlu0 %v3021, 64
        %v3041 = vpop.permute.xlu0 %3040
        %3042 = vrot.lane.b32.xlu0 %v3022, 64
        %v3043 = vpop.permute.xlu0 %3042
        %3044 = vrot.lane.b32.xlu0 %v3023, 64
        %v3045 = vpop.permute.xlu0 %3044
        %3046 = vrot.lane.b32.xlu0 %v3024, 64
        %v3047 = vpop.permute.xlu0 %3046
        %3048 = vrot.lane.b32.xlu0 %v3025, 64
        %v3049 = vpop.permute.xlu0 %3048
        %3050 = vrot.lane.b32.xlu0 %v3026, 64
        %v3051 = vpop.permute.xlu0 %3050
        %3052 = vrot.lane.b32.xlu0 %v3027, 64
        %v3053 = vpop.permute.xlu0 %3052
        %3054 = vrot.lane.b32.xlu0 %v3028, 64
        %v3055 = vpop.permute.xlu0 %3054
        %3056 = vrot.lane.b32.xlu0 %v3029, 64
        %v3057 = vpop.permute.xlu0 %3056
        %3058 = vrot.lane.b32.xlu0 %v3030, 64
        %v3059 = vpop.permute.xlu0 %3058
        %3060 = vrot.lane.b32.xlu0 %v3031, 64
        %v3061 = vpop.permute.xlu0 %3060
        %3062 = vrot.lane.b32.xlu0 %v3032, 64
        %v3063 = vpop.permute.xlu0 %3062
        %3064 = vrot.lane.b32.xlu0 %v3033, 64
        %v3065 = vpop.permute.xlu0 %3064
        %v3066 = vsel %vm1879, %v3035, %v3018
        %v3067 = vsel %vm1880, %v3037, %v3019
        %v3068 = vsel %vm1881, %v3039, %v3020
        %v3069 = vsel %vm1882, %v3041, %v3021
        %v3070 = vsel %vm1883, %v3043, %v3022
        %v3071 = vsel %vm1884, %v3045, %v3023
        %v3072 = vsel %vm1885, %v3047, %v3024
        %v3073 = vsel %vm1886, %v3049, %v3025
        %v3074 = vsel %vm1887, %v3051, %v3026
        %v3075 = vsel %vm1888, %v3053, %v3027
        %v3076 = vsel %vm1889, %v3055, %v3028
        %v3077 = vsel %vm1890, %v3057, %v3029
        %v3078 = vsel %vm1891, %v3059, %v3030
        %v3079 = vsel %vm1892, %v3061, %v3031
        %v3080 = vsel %vm1893, %v3063, %v3032
        %v3081 = vsel %vm1894, %v3065, %v3033
        %3082 = vrot.lane.b32.xlu0 %v1005, 64
        %v3083 = vpop.permute.xlu0 %3082
        %3084 = vrot.lane.b32.xlu0 %v1006, 64
        %v3085 = vpop.permute.xlu0 %3084
        %3086 = vrot.lane.b32.xlu0 %v1007, 64
        %v3087 = vpop.permute.xlu0 %3086
        %3088 = vrot.lane.b32.xlu0 %v1008, 64
        %v3089 = vpop.permute.xlu0 %3088
        %3090 = vrot.lane.b32.xlu0 %v1009, 64
        %v3091 = vpop.permute.xlu0 %3090
        %3092 = vrot.lane.b32.xlu0 %v1010, 64
        %v3093 = vpop.permute.xlu0 %3092
        %3094 = vrot.lane.b32.xlu0 %v1011, 64
        %v3095 = vpop.permute.xlu0 %3094
        %3096 = vrot.lane.b32.xlu0 %v1012, 64
        %v3097 = vpop.permute.xlu0 %3096
        %3098 = vrot.lane.b32.xlu0 %v1013, 64
        %v3099 = vpop.permute.xlu0 %3098
        %3100 = vrot.lane.b32.xlu0 %v1014, 64
        %v3101 = vpop.permute.xlu0 %3100
        %3102 = vrot.lane.b32.xlu0 %v1015, 64
        %v3103 = vpop.permute.xlu0 %3102
        %3104 = vrot.lane.b32.xlu0 %v1016, 64
        %v3105 = vpop.permute.xlu0 %3104
        %3106 = vrot.lane.b32.xlu0 %v1017, 64
        %v3107 = vpop.permute.xlu0 %3106
        %3108 = vrot.lane.b32.xlu0 %v1018, 64
        %v3109 = vpop.permute.xlu0 %3108
        %3110 = vrot.lane.b32.xlu0 %v1019, 64
        %v3111 = vpop.permute.xlu0 %3110
        %3112 = vrot.lane.b32.xlu0 %v1020, 64
        %v3113 = vpop.permute.xlu0 %3112
        %3114 = vrot.lane.b32.xlu0 %v600, 64
        %v3115 = vpop.permute.xlu0 %3114
        %3116 = vrot.lane.b32.xlu0 %v606, 64
        %v3117 = vpop.permute.xlu0 %3116
        %3118 = vrot.lane.b32.xlu0 %v612, 64
        %v3119 = vpop.permute.xlu0 %3118
        %3120 = vrot.lane.b32.xlu0 %v618, 64
        %v3121 = vpop.permute.xlu0 %3120
        %3122 = vrot.lane.b32.xlu0 %v624, 64
        %v3123 = vpop.permute.xlu0 %3122
        %3124 = vrot.lane.b32.xlu0 %v630, 64
        %v3125 = vpop.permute.xlu0 %3124
        %3126 = vrot.lane.b32.xlu0 %v636, 64
        %v3127 = vpop.permute.xlu0 %3126
        %3128 = vrot.lane.b32.xlu0 %v642, 64
        %v3129 = vpop.permute.xlu0 %3128
        %3130 = vrot.lane.b32.xlu0 %v648, 64
        %v3131 = vpop.permute.xlu0 %3130
        %3132 = vrot.lane.b32.xlu0 %v654, 64
        %v3133 = vpop.permute.xlu0 %3132
        %3134 = vrot.lane.b32.xlu0 %v660, 64
        %v3135 = vpop.permute.xlu0 %3134
        %3136 = vrot.lane.b32.xlu0 %v666, 64
        %v3137 = vpop.permute.xlu0 %3136
        %3138 = vrot.lane.b32.xlu0 %v672, 64
        %v3139 = vpop.permute.xlu0 %3138
        %3140 = vrot.lane.b32.xlu0 %v678, 64
        %v3141 = vpop.permute.xlu0 %3140
        %3142 = vrot.lane.b32.xlu0 %v684, 64
        %v3143 = vpop.permute.xlu0 %3142
        %3144 = vrot.lane.b32.xlu0 %v690, 64
        %v3145 = vpop.permute.xlu0 %3144
        %v3146 = vsel %vm1076, %v3083, 0
        %v3148 = vsel %vm1076, %v3085, 0
        %v3150 = vsel %vm1076, %v3087, 0
        %v3152 = vsel %vm1076, %v3089, 0
        %v3154 = vsel %vm1076, %v3091, 0
        %v3156 = vsel %vm1076, %v3093, 0
        %v3158 = vsel %vm1076, %v3095, 0
        %v3160 = vsel %vm1076, %v3097, 0
        %v3162 = vsel %vm1076, %v3099, 0
        %v3164 = vsel %vm1076, %v3101, 0
        %v3166 = vsel %vm1076, %v3103, 0
        %v3168 = vsel %vm1076, %v3105, 0
        %v3170 = vsel %vm1076, %v3107, 0
        %v3172 = vsel %vm1076, %v3109, 0
        %v3174 = vsel %vm1076, %v3111, 0
        %v3176 = vsel %vm1076, %v3113, 0
        %v3178 = vsel %vm1076, %v3115, 0
        %v3180 = vsel %vm1076, %v3117, 0
        %v3182 = vsel %vm1076, %v3119, 0
        %v3184 = vsel %vm1076, %v3121, 0
        %v3186 = vsel %vm1076, %v3123, 0
        %v3188 = vsel %vm1076, %v3125, 0
        %v3190 = vsel %vm1076, %v3127, 0
        %v3192 = vsel %vm1076, %v3129, 0
        %v3194 = vsel %vm1076, %v3131, 0
        %v3196 = vsel %vm1076, %v3133, 0
        %v3198 = vsel %vm1076, %v3135, 0
        %v3200 = vsel %vm1076, %v3137, 0
        %v3202 = vsel %vm1076, %v3139, 0
        %v3204 = vsel %vm1076, %v3141, 0
        %v3206 = vsel %vm1076, %v3143, 0
        %v3208 = vsel %vm1076, %v3145, 0
        %3210 = vmatprep.subr.mxu0 0.0
        %3211 = vmatpush1.xpose.msra.mxu0 %v3178
        %3212 = vmatprep.subr.mxu0 0.0
        %3213 = vmatpush1.xpose.msra.mxu0 %v3180
        %3214 = vmatprep.subr.mxu0 0.0
        %3215 = vmatpush1.xpose.msra.mxu0 %v3182
        %3216 = vmatprep.subr.mxu0 0.0
        %3217 = vmatpush1.xpose.msra.mxu0 %v3184
        %3218 = vmatprep.subr.mxu0 0.0
        %3219 = vmatpush1.xpose.msra.mxu0 %v3186
        %3220 = vmatprep.subr.mxu0 0.0
        %3221 = vmatpush1.xpose.msra.mxu0 %v3188
        %3222 = vmatprep.subr.mxu0 0.0
        %3223 = vmatpush1.xpose.msra.mxu0 %v3190
        %3224 = vmatprep.subr.mxu0 0.0
        %3225 = vmatpush1.xpose.msra.mxu0 %v3192
        %3226 = vmatprep.subr.mxu0 0.0
        %3227 = vmatpush1.xpose.msra.mxu0 %v3194
        %3228 = vmatprep.subr.mxu0 0.0
        %3229 = vmatpush1.xpose.msra.mxu0 %v3196
        %3230 = vmatprep.subr.mxu0 0.0
        %3231 = vmatpush1.xpose.msra.mxu0 %v3198
        %3232 = vmatprep.subr.mxu0 0.0
        %3233 = vmatpush1.xpose.msra.mxu0 %v3200
        %3234 = vmatprep.subr.mxu0 0.0
        %3235 = vmatpush1.xpose.msra.mxu0 %v3202
        %3236 = vmatprep.subr.mxu0 0.0
        %3237 = vmatpush1.xpose.msra.mxu0 %v3204
        %3238 = vmatprep.subr.mxu0 0.0
        %3239 = vmatpush1.xpose.msra.mxu0 %v3206
        %3240 = vmatprep.subr.mxu0 0.0
        %3241 = vmatpush1.xpose.msra.mxu0 %v3208
        %3242 = vmatprep.subr.mxu0 0.0
        %3243 = vmatpush1.xpose.msra.mxu0 0.0
        %3244 = vmatprep.subr.mxu0 0.0
        %3245 = vmatpush1.xpose.msra.mxu0 0.0
        %3246 = vmatprep.subr.mxu0 0.0
        %3247 = vmatpush1.xpose.msra.mxu0 0.0
        %3248 = vmatprep.subr.mxu0 0.0
        %3249 = vmatpush1.xpose.msra.mxu0 0.0
        %3250 = vmatprep.subr.mxu0 0.0
        %3251 = vmatpush1.xpose.msra.mxu0 0.0
        %3252 = vmatprep.subr.mxu0 0.0
        %3253 = vmatpush1.xpose.msra.mxu0 0.0
        %3254 = vmatprep.subr.mxu0 0.0
        %3255 = vmatpush1.xpose.msra.mxu0 0.0
        %3256 = vmatprep.subr.mxu0 0.0
        %3257 = vmatpush1.xpose.msra.mxu0 0.0
        %3258 = vmatprep.subr.mxu0 0.0
        %3259 = vmatpush1.xpose.msra.mxu0 0.0
        %3260 = vmatprep.subr.mxu0 0.0
        %3261 = vmatpush1.xpose.msra.mxu0 0.0
        %3262 = vmatprep.subr.mxu0 0.0
        %3263 = vmatpush1.xpose.msra.mxu0 0.0
        %3264 = vmatprep.subr.mxu0 0.0
        %3265 = vmatpush1.xpose.msra.mxu0 0.0
        %3266 = vmatprep.subr.mxu0 0.0
        %3267 = vmatpush1.xpose.msra.mxu0 0.0
        %3268 = vmatprep.subr.mxu0 0.0
        %3269 = vmatpush1.xpose.msra.mxu0 0.0
        %3270 = vmatprep.subr.mxu0 0.0
        %3271 = vmatpush1.xpose.msra.mxu0 0.0
        %3272 = vmatprep.subr.mxu0 0.0
        %3273 = vmatpush1.xpose.msra.mxu0 0.0
        %3274 = vmatprep.mubr.f32.mxu0 0.0
        %3275 = vmatmul.mubr.f32.gmra.mrb[0].mxu0 %v3146
        %v3276 = vpop.f32.mrb[0].mxu0
        %v3277 = vadd.f32 %v3066, %v3276
        %v3278 = vpop.f32.mrb[0].mxu0
        %3279 = vmatprep.mubr.f32.mxu0 0.0
        %3280 = vmatmul.mubr.f32.gmra.mrb[0].mxu0 %v3148
        %v3281 = vpop.f32.mrb[0].mxu0
        %v3282 = vadd.f32 %v3067, %v3281
        %v3283 = vpop.f32.mrb[0].mxu0
        %3284 = vmatprep.mubr.f32.mxu0 0.0
        %3285 = vmatmul.mubr.f32.gmra.mrb[0].mxu0 %v3150
        %v3286 = vpop.f32.mrb[0].mxu0
        %v3287 = vadd.f32 %v3068, %v3286
        %v3288 = vpop.f32.mrb[0].mxu0
        %3289 = vmatprep.mubr.f32.mxu0 0.0
        %3290 = vmatmul.mubr.f32.gmra.mrb[0].mxu0 %v3152
        %v3291 = vpop.f32.mrb[0].mxu0
        %v3292 = vadd.f32 %v3069, %v3291
        %v3293 = vpop.f32.mrb[0].mxu0
        %3294 = vmatprep.mubr.f32.mxu0 0.0
        %3295 = vmatmul.mubr.f32.gmra.mrb[0].mxu0 %v3154
        %v3296 = vpop.f32.mrb[0].mxu0
        %v3297 = vadd.f32 %v3070, %v3296
        %v3298 = vpop.f32.mrb[0].mxu0
        %3299 = vmatprep.mubr.f32.mxu0 0.0
        %3300 = vmatmul.mubr.f32.gmra.mrb[0].mxu0 %v3156
        %v3301 = vpop.f32.mrb[0].mxu0
        %v3302 = vadd.f32 %v3071, %v3301
        %v3303 = vpop.f32.mrb[0].mxu0
        %3304 = vmatprep.mubr.f32.mxu0 0.0
        %3305 = vmatmul.mubr.f32.gmra.mrb[0].mxu0 %v3158
        %v3306 = vpop.f32.mrb[0].mxu0
        %v3307 = vadd.f32 %v3072, %v3306
        %v3308 = vpop.f32.mrb[0].mxu0
        %3309 = vmatprep.mubr.f32.mxu0 0.0
        %3310 = vmatmul.mubr.f32.gmra.mrb[0].mxu0 %v3160
        %v3311 = vpop.f32.mrb[0].mxu0
        %v3312 = vadd.f32 %v3073, %v3311
        %v3313 = vpop.f32.mrb[0].mxu0
        %3314 = vmatprep.mubr.f32.mxu0 0.0
        %3315 = vmatmul.mubr.f32.gmra.mrb[0].mxu0 %v3162
        %v3316 = vpop.f32.mrb[0].mxu0
        %v3317 = vadd.f32 %v3074, %v3316
        %v3318 = vpop.f32.mrb[0].mxu0
        %3319 = vmatprep.mubr.f32.mxu0 0.0
        %3320 = vmatmul.mubr.f32.gmra.mrb[0].mxu0 %v3164
        %v3321 = vpop.f32.mrb[0].mxu0
        %v3322 = vadd.f32 %v3075, %v3321
        %v3323 = vpop.f32.mrb[0].mxu0
        %3324 = vmatprep.mubr.f32.mxu0 0.0
        %3325 = vmatmul.mubr.f32.gmra.mrb[0].mxu0 %v3166
        %v3326 = vpop.f32.mrb[0].mxu0
        %v3327 = vadd.f32 %v3076, %v3326
        %v3328 = vpop.f32.mrb[0].mxu0
        %3329 = vmatprep.mubr.f32.mxu0 0.0
        %3330 = vmatmul.mubr.f32.gmra.mrb[0].mxu0 %v3168
        %v3331 = vpop.f32.mrb[0].mxu0
        %v3332 = vadd.f32 %v3077, %v3331
        %v3333 = vpop.f32.mrb[0].mxu0
        %3334 = vmatprep.mubr.f32.mxu0 0.0
        %3335 = vmatmul.mubr.f32.gmra.mrb[0].mxu0 %v3170
        %v3336 = vpop.f32.mrb[0].mxu0
        %v3337 = vadd.f32 %v3078, %v3336
        %v3338 = vpop.f32.mrb[0].mxu0
        %3339 = vmatprep.mubr.f32.mxu0 0.0
        %3340 = vmatmul.mubr.f32.gmra.mrb[0].mxu0 %v3172
        %v3341 = vpop.f32.mrb[0].mxu0
        %v3342 = vadd.f32 %v3079, %v3341
        %v3343 = vpop.f32.mrb[0].mxu0
        %3344 = vmatprep.mubr.f32.mxu0 0.0
        %3345 = vmatmul.mubr.f32.gmra.mrb[0].mxu0 %v3174
        %v3346 = vpop.f32.mrb[0].mxu0
        %v3347 = vadd.f32 %v3080, %v3346
        %v3348 = vpop.f32.mrb[0].mxu0
        %3349 = vmatprep.mubr.f32.mxu0 0.0
        %3350 = vmatmul.mubr.f32.gmra.mrb[0].mxu0 %v3176
        %v3351 = vpop.f32.mrb[0].mxu0
        %v3352 = vadd.f32 %v3081, %v3351
        %v3353 = vpop.f32.mrb[0].mxu0
        %3354 = vdwg.mxu0
        %v3355 = vmul.f32 %v3277, 0.125
        %v3356 = vmul.f32 %v3282, 0.125
        %v3357 = vmul.f32 %v3287, 0.125
        %v3358 = vmul.f32 %v3292, 0.125
        %v3359 = vmul.f32 %v3297, 0.125
        %v3360 = vmul.f32 %v3302, 0.125
        %v3361 = vmul.f32 %v3307, 0.125
        %v3362 = vmul.f32 %v3312, 0.125
        %v3363 = vmul.f32 %v3317, 0.125
        %v3364 = vmul.f32 %v3322, 0.125
        %v3365 = vmul.f32 %v3327, 0.125
        %v3366 = vmul.f32 %v3332, 0.125
        %v3367 = vmul.f32 %v3337, 0.125
        %v3368 = vmul.f32 %v3342, 0.125
        %v3369 = vmul.f32 %v3347, 0.125
        %v3370 = vmul.f32 %v3352, 0.125
        %v3371 = vsel %vm1060, -inf, %v3355
        %v3372 = vsel %vm1061, -inf, %v3356
        %v3373 = vsel %vm1062, -inf, %v3357
        %v3374 = vsel %vm1063, -inf, %v3358
        %v3375 = vsel %vm1064, -inf, %v3359
        %v3376 = vsel %vm1065, -inf, %v3360
        %v3377 = vsel %vm1066, -inf, %v3361
        %v3378 = vsel %vm1067, -inf, %v3362
        %v3379 = vsel %vm1068, -inf, %v3363
        %v3380 = vsel %vm1069, -inf, %v3364
        %v3381 = vsel %vm1070, -inf, %v3365
        %v3382 = vsel %vm1071, -inf, %v3366
        %v3383 = vsel %vm1072, -inf, %v3367
        %v3384 = vsel %vm1073, -inf, %v3368
        %v3385 = vsel %vm1074, -inf, %v3369
        %v3386 = vsel %vm1075, -inf, %v3370
        %3387 = vmax.xlane.f32.xlu0 %v3371
        %v3388 = vpop.xlane.xlu0 %3387
        %3389 = vmax.xlane.f32.xlu0 %v3372
        %v3390 = vpop.xlane.xlu0 %3389
        %3391 = vmax.xlane.f32.xlu0 %v3373
        %v3392 = vpop.xlane.xlu0 %3391
        %3393 = vmax.xlane.f32.xlu0 %v3374
        %v3394 = vpop.xlane.xlu0 %3393
        %3395 = vmax.xlane.f32.xlu0 %v3375
        %v3396 = vpop.xlane.xlu0 %3395
        %3397 = vmax.xlane.f32.xlu0 %v3376
        %v3398 = vpop.xlane.xlu0 %3397
        %3399 = vmax.xlane.f32.xlu0 %v3377
        %v3400 = vpop.xlane.xlu0 %3399
        %3401 = vmax.xlane.f32.xlu0 %v3378
        %v3402 = vpop.xlane.xlu0 %3401
        %3403 = vmax.xlane.f32.xlu0 %v3379
        %v3404 = vpop.xlane.xlu0 %3403
        %3405 = vmax.xlane.f32.xlu0 %v3380
        %v3406 = vpop.xlane.xlu0 %3405
        %3407 = vmax.xlane.f32.xlu0 %v3381
        %v3408 = vpop.xlane.xlu0 %3407
        %3409 = vmax.xlane.f32.xlu0 %v3382
        %v3410 = vpop.xlane.xlu0 %3409
        %3411 = vmax.xlane.f32.xlu0 %v3383
        %v3412 = vpop.xlane.xlu0 %3411
        %3413 = vmax.xlane.f32.xlu0 %v3384
        %v3414 = vpop.xlane.xlu0 %3413
        %3415 = vmax.xlane.f32.xlu0 %v3385
        %v3416 = vpop.xlane.xlu0 %3415
        %3417 = vmax.xlane.f32.xlu0 %v3386
        %v3418 = vpop.xlane.xlu0 %3417
        %v3419 = vsub.f32 %v3371, %v3388
        %v3420 = vsub.f32 %v3372, %v3390
        %v3421 = vsub.f32 %v3373, %v3392
        %v3422 = vsub.f32 %v3374, %v3394
        %v3423 = vsub.f32 %v3375, %v3396
        %v3424 = vsub.f32 %v3376, %v3398
        %v3425 = vsub.f32 %v3377, %v3400
        %v3426 = vsub.f32 %v3378, %v3402
        %v3427 = vsub.f32 %v3379, %v3404
        %v3428 = vsub.f32 %v3380, %v3406
        %v3429 = vsub.f32 %v3381, %v3408
        %v3430 = vsub.f32 %v3382, %v3410
        %v3431 = vsub.f32 %v3383, %v3412
        %v3432 = vsub.f32 %v3384, %v3414
        %v3433 = vsub.f32 %v3385, %v3416
        %v3434 = vsub.f32 %v3386, %v3418
        %v3435 = vmul.f32 %v3419, 1.442695
        %v3436 = vpow.pop %v3435
        %v3437 = vmul.f32 %v3420, 1.442695
        %v3438 = vpow.pop %v3437
        %v3439 = vmul.f32 %v3421, 1.442695
        %v3440 = vpow.pop %v3439
        %v3441 = vmul.f32 %v3422, 1.442695
        %v3442 = vpow.pop %v3441
        %v3443 = vmul.f32 %v3423, 1.442695
        %v3444 = vpow.pop %v3443
        %v3445 = vmul.f32 %v3424, 1.442695
        %v3446 = vpow.pop %v3445
        %v3447 = vmul.f32 %v3425, 1.442695
        %v3448 = vpow.pop %v3447
        %v3449 = vmul.f32 %v3426, 1.442695
        %v3450 = vpow.pop %v3449
        %v3451 = vmul.f32 %v3427, 1.442695
        %v3452 = vpow.pop %v3451
        %v3453 = vmul.f32 %v3428, 1.442695
        %v3454 = vpow.pop %v3453
        %v3455 = vmul.f32 %v3429, 1.442695
        %v3456 = vpow.pop %v3455
        %v3457 = vmul.f32 %v3430, 1.442695
        %v3458 = vpow.pop %v3457
        %v3459 = vmul.f32 %v3431, 1.442695
        %v3460 = vpow.pop %v3459
        %v3461 = vmul.f32 %v3432, 1.442695
        %v3462 = vpow.pop %v3461
        %v3463 = vmul.f32 %v3433, 1.442695
        %v3464 = vpow.pop %v3463
        %v3465 = vmul.f32 %v3434, 1.442695
        %v3466 = vpow.pop %v3465
        %3467 = vadd.xlane.f32.xlu0 %v3436
        %v3468 = vpop.xlane.xlu0 %3467
        %3469 = vadd.xlane.f32.xlu0 %v3438
        %v3470 = vpop.xlane.xlu0 %3469
        %3471 = vadd.xlane.f32.xlu0 %v3440
        %v3472 = vpop.xlane.xlu0 %3471
        %3473 = vadd.xlane.f32.xlu0 %v3442
        %v3474 = vpop.xlane.xlu0 %3473
        %3475 = vadd.xlane.f32.xlu0 %v3444
        %v3476 = vpop.xlane.xlu0 %3475
        %3477 = vadd.xlane.f32.xlu0 %v3446
        %v3478 = vpop.xlane.xlu0 %3477
        %3479 = vadd.xlane.f32.xlu0 %v3448
        %v3480 = vpop.xlane.xlu0 %3479
        %3481 = vadd.xlane.f32.xlu0 %v3450
        %v3482 = vpop.xlane.xlu0 %3481
        %3483 = vadd.xlane.f32.xlu0 %v3452
        %v3484 = vpop.xlane.xlu0 %3483
        %3485 = vadd.xlane.f32.xlu0 %v3454
        %v3486 = vpop.xlane.xlu0 %3485
        %3487 = vadd.xlane.f32.xlu0 %v3456
        %v3488 = vpop.xlane.xlu0 %3487
        %3489 = vadd.xlane.f32.xlu0 %v3458
        %v3490 = vpop.xlane.xlu0 %3489
        %3491 = vadd.xlane.f32.xlu0 %v3460
        %v3492 = vpop.xlane.xlu0 %3491
        %3493 = vadd.xlane.f32.xlu0 %v3462
        %v3494 = vpop.xlane.xlu0 %3493
        %3495 = vadd.xlane.f32.xlu0 %v3464
        %v3496 = vpop.xlane.xlu0 %3495
        %3497 = vadd.xlane.f32.xlu0 %v3466
        %v3498 = vpop.xlane.xlu0 %3497
        %v3499 = vrcp.pop %v3468
        %v3500 = vmul.f32 %v3436, %v3499
        %v3501 = vrcp.pop %v3470
        %v3502 = vmul.f32 %v3438, %v3501
        %v3503 = vrcp.pop %v3472
        %v3504 = vmul.f32 %v3440, %v3503
        %v3505 = vrcp.pop %v3474
        %v3506 = vmul.f32 %v3442, %v3505
        %v3507 = vrcp.pop %v3476
        %v3508 = vmul.f32 %v3444, %v3507
        %v3509 = vrcp.pop %v3478
        %v3510 = vmul.f32 %v3446, %v3509
        %v3511 = vrcp.pop %v3480
        %v3512 = vmul.f32 %v3448, %v3511
        %v3513 = vrcp.pop %v3482
        %v3514 = vmul.f32 %v3450, %v3513
        %v3515 = vrcp.pop %v3484
        %v3516 = vmul.f32 %v3452, %v3515
        %v3517 = vrcp.pop %v3486
        %v3518 = vmul.f32 %v3454, %v3517
        %v3519 = vrcp.pop %v3488
        %v3520 = vmul.f32 %v3456, %v3519
        %v3521 = vrcp.pop %v3490
        %v3522 = vmul.f32 %v3458, %v3521
        %v3523 = vrcp.pop %v3492
        %v3524 = vmul.f32 %v3460, %v3523
        %v3525 = vrcp.pop %v3494
        %v3526 = vmul.f32 %v3462, %v3525
        %v3527 = vrcp.pop %v3496
        %v3528 = vmul.f32 %v3464, %v3527
        %v3529 = vrcp.pop %v3498
        %v3530 = vmul.f32 %v3466, %v3529
        %3547 = vrot.lane.b32.xlu0 %v759, 64
        %v3548 = vpop.permute.xlu0 %3547
        %3549 = vrot.lane.b32.xlu0 %v764, 64
        %v3550 = vpop.permute.xlu0 %3549
        %3551 = vrot.lane.b32.xlu0 %v769, 64
        %v3552 = vpop.permute.xlu0 %3551
        %3553 = vrot.lane.b32.xlu0 %v774, 64
        %v3554 = vpop.permute.xlu0 %3553
        %3555 = vrot.lane.b32.xlu0 %v779, 64
        %v3556 = vpop.permute.xlu0 %3555
        %3557 = vrot.lane.b32.xlu0 %v784, 64
        %v3558 = vpop.permute.xlu0 %3557
        %3559 = vrot.lane.b32.xlu0 %v789, 64
        %v3560 = vpop.permute.xlu0 %3559
        %3561 = vrot.lane.b32.xlu0 %v794, 64
        %v3562 = vpop.permute.xlu0 %3561
        %3563 = vrot.lane.b32.xlu0 %v799, 64
        %v3564 = vpop.permute.xlu0 %3563
        %3565 = vrot.lane.b32.xlu0 %v804, 64
        %v3566 = vpop.permute.xlu0 %3565
        %3567 = vrot.lane.b32.xlu0 %v809, 64
        %v3568 = vpop.permute.xlu0 %3567
        %3569 = vrot.lane.b32.xlu0 %v814, 64
        %v3570 = vpop.permute.xlu0 %3569
        %3571 = vrot.lane.b32.xlu0 %v819, 64
        %v3572 = vpop.permute.xlu0 %3571
        %3573 = vrot.lane.b32.xlu0 %v824, 64
        %v3574 = vpop.permute.xlu0 %3573
        %3575 = vrot.lane.b32.xlu0 %v829, 64
        %v3576 = vpop.permute.xlu0 %3575
        %3577 = vrot.lane.b32.xlu0 %v834, 64
        %v3578 = vpop.permute.xlu0 %3577
        %3595 = vmatprep.subr.mxu0 0.0
        %3596 = vmatpush1.msra.mxu0 %v3548
        %3597 = vmatprep.subr.mxu0 0.0
        %3598 = vmatpush1.msra.mxu0 %v3550
        %3599 = vmatprep.subr.mxu0 0.0
        %3600 = vmatpush1.msra.mxu0 %v3552
        %3601 = vmatprep.subr.mxu0 0.0
        %3602 = vmatpush1.msra.mxu0 %v3554
        %3603 = vmatprep.subr.mxu0 0.0
        %3604 = vmatpush1.msra.mxu0 %v3556
        %3605 = vmatprep.subr.mxu0 0.0
        %3606 = vmatpush1.msra.mxu0 %v3558
        %3607 = vmatprep.subr.mxu0 0.0
        %3608 = vmatpush1.msra.mxu0 %v3560
        %3609 = vmatprep.subr.mxu0 0.0
        %3610 = vmatpush1.msra.mxu0 %v3562
        %3611 = vmatprep.subr.mxu0 0.0
        %3612 = vmatpush1.msra.mxu0 %v3564
        %3613 = vmatprep.subr.mxu0 0.0
        %3614 = vmatpush1.msra.mxu0 %v3566
        %3615 = vmatprep.subr.mxu0 0.0
        %3616 = vmatpush1.msra.mxu0 %v3568
        %3617 = vmatprep.subr.mxu0 0.0
        %3618 = vmatpush1.msra.mxu0 %v3570
        %3619 = vmatprep.subr.mxu0 0.0
        %3620 = vmatpush1.msra.mxu0 %v3572
        %3621 = vmatprep.subr.mxu0 0.0
        %3622 = vmatpush1.msra.mxu0 %v3574
        %3623 = vmatprep.subr.mxu0 0.0
        %3624 = vmatpush1.msra.mxu0 %v3576
        %3625 = vmatprep.subr.mxu0 0.0
        %3626 = vmatpush1.msra.mxu0 %v3578
        %3627 = vmatprep.subr.mxu0 0.0
        %3628 = vmatpush1.msra.mxu0 0.0
        %3629 = vmatprep.subr.mxu0 0.0
        %3630 = vmatpush1.msra.mxu0 0.0
        %3631 = vmatprep.subr.mxu0 0.0
        %3632 = vmatpush1.msra.mxu0 0.0
        %3633 = vmatprep.subr.mxu0 0.0
        %3634 = vmatpush1.msra.mxu0 0.0
        %3635 = vmatprep.subr.mxu0 0.0
        %3636 = vmatpush1.msra.mxu0 0.0
        %3637 = vmatprep.subr.mxu0 0.0
        %3638 = vmatpush1.msra.mxu0 0.0
        %3639 = vmatprep.subr.mxu0 0.0
        %3640 = vmatpush1.msra.mxu0 0.0
        %3641 = vmatprep.subr.mxu0 0.0
        %3642 = vmatpush1.msra.mxu0 0.0
        %3643 = vmatprep.subr.mxu0 0.0
        %3644 = vmatpush1.msra.mxu0 0.0
        %3645 = vmatprep.subr.mxu0 0.0
        %3646 = vmatpush1.msra.mxu0 0.0
        %3647 = vmatprep.subr.mxu0 0.0
        %3648 = vmatpush1.msra.mxu0 0.0
        %3649 = vmatprep.subr.mxu0 0.0
        %3650 = vmatpush1.msra.mxu0 0.0
        %3651 = vmatprep.subr.mxu0 0.0
        %3652 = vmatpush1.msra.mxu0 0.0
        %3653 = vmatprep.subr.mxu0 0.0
        %3654 = vmatpush1.msra.mxu0 0.0
        %3655 = vmatprep.subr.mxu0 0.0
        %3656 = vmatpush1.msra.mxu0 0.0
        %3657 = vmatprep.subr.mxu0 0.0
        %3658 = vmatpush1.msra.mxu0 0.0
        %3659 = vmatprep.mubr.f32.mxu0 0.0
        %3660 = vmatmul.mubr.f32.gmra.mrb[0].mxu0 %v3500
        %v3661 = vpop.f32.mrb[0].mxu0
        %v3662 = vadd.f32 0.0, %v3661
        %v3663 = vpop.f32.mrb[0].mxu0
        %3664 = vmatprep.mubr.f32.mxu0 0.0
        %3665 = vmatmul.mubr.f32.gmra.mrb[0].mxu0 %v3502
        %v3666 = vpop.f32.mrb[0].mxu0
        %v3667 = vadd.f32 0.0, %v3666
        %v3668 = vpop.f32.mrb[0].mxu0
        %3669 = vmatprep.mubr.f32.mxu0 0.0
        %3670 = vmatmul.mubr.f32.gmra.mrb[0].mxu0 %v3504
        %v3671 = vpop.f32.mrb[0].mxu0
        %v3672 = vadd.f32 0.0, %v3671
        %v3673 = vpop.f32.mrb[0].mxu0
        %3674 = vmatprep.mubr.f32.mxu0 0.0
        %3675 = vmatmul.mubr.f32.gmra.mrb[0].mxu0 %v3506
        %v3676 = vpop.f32.mrb[0].mxu0
        %v3677 = vadd.f32 0.0, %v3676
        %v3678 = vpop.f32.mrb[0].mxu0
        %3679 = vmatprep.mubr.f32.mxu0 0.0
        %3680 = vmatmul.mubr.f32.gmra.mrb[0].mxu0 %v3508
        %v3681 = vpop.f32.mrb[0].mxu0
        %v3682 = vadd.f32 0.0, %v3681
        %v3683 = vpop.f32.mrb[0].mxu0
        %3684 = vmatprep.mubr.f32.mxu0 0.0
        %3685 = vmatmul.mubr.f32.gmra.mrb[0].mxu0 %v3510
        %v3686 = vpop.f32.mrb[0].mxu0
        %v3687 = vadd.f32 0.0, %v3686
        %v3688 = vpop.f32.mrb[0].mxu0
        %3689 = vmatprep.mubr.f32.mxu0 0.0
        %3690 = vmatmul.mubr.f32.gmra.mrb[0].mxu0 %v3512
        %v3691 = vpop.f32.mrb[0].mxu0
        %v3692 = vadd.f32 0.0, %v3691
        %v3693 = vpop.f32.mrb[0].mxu0
        %3694 = vmatprep.mubr.f32.mxu0 0.0
        %3695 = vmatmul.mubr.f32.gmra.mrb[0].mxu0 %v3514
        %v3696 = vpop.f32.mrb[0].mxu0
        %v3697 = vadd.f32 0.0, %v3696
        %v3698 = vpop.f32.mrb[0].mxu0
        %3699 = vmatprep.mubr.f32.mxu0 0.0
        %3700 = vmatmul.mubr.f32.gmra.mrb[0].mxu0 %v3516
        %v3701 = vpop.f32.mrb[0].mxu0
        %v3702 = vadd.f32 0.0, %v3701
        %v3703 = vpop.f32.mrb[0].mxu0
        %3704 = vmatprep.mubr.f32.mxu0 0.0
        %3705 = vmatmul.mubr.f32.gmra.mrb[0].mxu0 %v3518
        %v3706 = vpop.f32.mrb[0].mxu0
        %v3707 = vadd.f32 0.0, %v3706
        %v3708 = vpop.f32.mrb[0].mxu0
        %3709 = vmatprep.mubr.f32.mxu0 0.0
        %3710 = vmatmul.mubr.f32.gmra.mrb[0].mxu0 %v3520
        %v3711 = vpop.f32.mrb[0].mxu0
        %v3712 = vadd.f32 0.0, %v3711
        %v3713 = vpop.f32.mrb[0].mxu0
        %3714 = vmatprep.mubr.f32.mxu0 0.0
        %3715 = vmatmul.mubr.f32.gmra.mrb[0].mxu0 %v3522
        %v3716 = vpop.f32.mrb[0].mxu0
        %v3717 = vadd.f32 0.0, %v3716
        %v3718 = vpop.f32.mrb[0].mxu0
        %3719 = vmatprep.mubr.f32.mxu0 0.0
        %3720 = vmatmul.mubr.f32.gmra.mrb[0].mxu0 %v3524
        %v3721 = vpop.f32.mrb[0].mxu0
        %v3722 = vadd.f32 0.0, %v3721
        %v3723 = vpop.f32.mrb[0].mxu0
        %3724 = vmatprep.mubr.f32.mxu0 0.0
        %3725 = vmatmul.mubr.f32.gmra.mrb[0].mxu0 %v3526
        %v3726 = vpop.f32.mrb[0].mxu0
        %v3727 = vadd.f32 0.0, %v3726
        %v3728 = vpop.f32.mrb[0].mxu0
        %3729 = vmatprep.mubr.f32.mxu0 0.0
        %3730 = vmatmul.mubr.f32.gmra.mrb[0].mxu0 %v3528
        %v3731 = vpop.f32.mrb[0].mxu0
        %v3732 = vadd.f32 0.0, %v3731
        %v3733 = vpop.f32.mrb[0].mxu0
        %3734 = vmatprep.mubr.f32.mxu0 0.0
        %3735 = vmatmul.mubr.f32.gmra.mrb[0].mxu0 %v3530
        %v3736 = vpop.f32.mrb[0].mxu0
        %v3737 = vadd.f32 0.0, %v3736
        %v3738 = vpop.f32.mrb[0].mxu0
        %3739 = vdwg.mxu0
        %3756 = vrot.lane.b32.xlu0 %v3662, 64
        %v3757 = vpop.permute.xlu0 %3756
        %3758 = vrot.lane.b32.xlu0 %v3667, 64
        %v3759 = vpop.permute.xlu0 %3758
        %3760 = vrot.lane.b32.xlu0 %v3672, 64
        %v3761 = vpop.permute.xlu0 %3760
        %3762 = vrot.lane.b32.xlu0 %v3677, 64
        %v3763 = vpop.permute.xlu0 %3762
        %3764 = vrot.lane.b32.xlu0 %v3682, 64
        %v3765 = vpop.permute.xlu0 %3764
        %3766 = vrot.lane.b32.xlu0 %v3687, 64
        %v3767 = vpop.permute.xlu0 %3766
        %3768 = vrot.lane.b32.xlu0 %v3692, 64
        %v3769 = vpop.permute.xlu0 %3768
        %3770 = vrot.lane.b32.xlu0 %v3697, 64
        %v3771 = vpop.permute.xlu0 %3770
        %3772 = vrot.lane.b32.xlu0 %v3702, 64
        %v3773 = vpop.permute.xlu0 %3772
        %3774 = vrot.lane.b32.xlu0 %v3707, 64
        %v3775 = vpop.permute.xlu0 %3774
        %3776 = vrot.lane.b32.xlu0 %v3712, 64
        %v3777 = vpop.permute.xlu0 %3776
        %3778 = vrot.lane.b32.xlu0 %v3717, 64
        %v3779 = vpop.permute.xlu0 %3778
        %3780 = vrot.lane.b32.xlu0 %v3722, 64
        %v3781 = vpop.permute.xlu0 %3780
        %3782 = vrot.lane.b32.xlu0 %v3727, 64
        %v3783 = vpop.permute.xlu0 %3782
        %3784 = vrot.lane.b32.xlu0 %v3732, 64
        %v3785 = vpop.permute.xlu0 %3784
        %3786 = vrot.lane.b32.xlu0 %v3737, 64
        %v3787 = vpop.permute.xlu0 %3786
        %v3804 = vsel %vm1076, %v2395, %v3757
        %v3805 = vsel %vm1076, %v2400, %v3759
        %v3806 = vsel %vm1076, %v2405, %v3761
        %v3807 = vsel %vm1076, %v2410, %v3763
        %v3808 = vsel %vm1076, %v2415, %v3765
        %v3809 = vsel %vm1076, %v2420, %v3767
        %v3810 = vsel %vm1076, %v2425, %v3769
        %v3811 = vsel %vm1076, %v2430, %v3771
        %v3812 = vsel %vm1076, %v2435, %v3773
        %v3813 = vsel %vm1076, %v2440, %v3775
        %v3814 = vsel %vm1076, %v2445, %v3777
        %v3815 = vsel %vm1076, %v2450, %v3779
        %v3816 = vsel %vm1076, %v2455, %v3781
        %v3817 = vsel %vm1076, %v2460, %v3783
        %v3818 = vsel %vm1076, %v2465, %v3785
        %v3819 = vsel %vm1076, %v2470, %v3787
        %v3820 = vld [vmem:[#allocation11] sm:$0xff]
        %v3821 = vld [vmem:[#allocation11 + $0x8] sm:$0xff]
        %v3822 = vld [vmem:[#allocation11 + $0x10] sm:$0xff]
        %v3823 = vld [vmem:[#allocation11 + $0x18] sm:$0xff]
        %v3824 = vld [vmem:[#allocation11 + $0x20] sm:$0xff]
        %v3825 = vld [vmem:[#allocation11 + $0x28] sm:$0xff]
        %v3826 = vld [vmem:[#allocation11 + $0x30] sm:$0xff]
        %v3827 = vld [vmem:[#allocation11 + $0x38] sm:$0xff]
        %v3828 = vld [vmem:[#allocation11 + $0x40] sm:$0xff]
        %v3829 = vld [vmem:[#allocation11 + $0x48] sm:$0xff]
        %v3830 = vld [vmem:[#allocation11 + $0x50] sm:$0xff]
        %v3831 = vld [vmem:[#allocation11 + $0x58] sm:$0xff]
        %v3832 = vld [vmem:[#allocation11 + $0x60] sm:$0xff]
        %v3833 = vld [vmem:[#allocation11 + $0x68] sm:$0xff]
        %v3834 = vld [vmem:[#allocation11 + $0x70] sm:$0xff]
        %v3835 = vld [vmem:[#allocation11 + $0x78] sm:$0xff]
        %3836 = vmatprep.subr.mxu0 0.0
        %3837 = vmatpush1.msra.mxu0 %v3820
        %3838 = vmatprep.subr.mxu0 0.0
        %3839 = vmatpush1.msra.mxu0 %v3821
        %3840 = vmatprep.subr.mxu0 0.0
        %3841 = vmatpush1.msra.mxu0 %v3822
        %3842 = vmatprep.subr.mxu0 0.0
        %3843 = vmatpush1.msra.mxu0 %v3823
        %3844 = vmatprep.subr.mxu0 0.0
        %3845 = vmatpush1.msra.mxu0 %v3824
        %3846 = vmatprep.subr.mxu0 0.0
        %3847 = vmatpush1.msra.mxu0 %v3825
        %3848 = vmatprep.subr.mxu0 0.0
        %3849 = vmatpush1.msra.mxu0 %v3826
        %3850 = vmatprep.subr.mxu0 0.0
        %3851 = vmatpush1.msra.mxu0 %v3827
        %3852 = vmatprep.subr.mxu0 0.0
        %3853 = vmatpush1.msra.mxu0 %v3828
        %3854 = vmatprep.subr.mxu0 0.0
        %3855 = vmatpush1.msra.mxu0 %v3829
        %3856 = vmatprep.subr.mxu0 0.0
        %3857 = vmatpush1.msra.mxu0 %v3830
        %3858 = vmatprep.subr.mxu0 0.0
        %3859 = vmatpush1.msra.mxu0 %v3831
        %3860 = vmatprep.subr.mxu0 0.0
        %3861 = vmatpush1.msra.mxu0 %v3832
        %3862 = vmatprep.subr.mxu0 0.0
        %3863 = vmatpush1.msra.mxu0 %v3833
        %3864 = vmatprep.subr.mxu0 0.0
        %3865 = vmatpush1.msra.mxu0 %v3834
        %3866 = vmatprep.subr.mxu0 0.0
        %3867 = vmatpush1.msra.mxu0 %v3835
        %3868 = vmatprep.subr.mxu0 0.0
        %3869 = vmatpush1.msra.mxu0 0.0
        %3870 = vmatprep.subr.mxu0 0.0
        %3871 = vmatpush1.msra.mxu0 0.0
        %3872 = vmatprep.subr.mxu0 0.0
        %3873 = vmatpush1.msra.mxu0 0.0
        %3874 = vmatprep.subr.mxu0 0.0
        %3875 = vmatpush1.msra.mxu0 0.0
        %3876 = vmatprep.subr.mxu0 0.0
        %3877 = vmatpush1.msra.mxu0 0.0
        %3878 = vmatprep.subr.mxu0 0.0
        %3879 = vmatpush1.msra.mxu0 0.0
        %3880 = vmatprep.subr.mxu0 0.0
        %3881 = vmatpush1.msra.mxu0 0.0
        %3882 = vmatprep.subr.mxu0 0.0
        %3883 = vmatpush1.msra.mxu0 0.0
        %3884 = vmatprep.subr.mxu0 0.0
        %3885 = vmatpush1.msra.mxu0 0.0
        %3886 = vmatprep.subr.mxu0 0.0
        %3887 = vmatpush1.msra.mxu0 0.0
        %3888 = vmatprep.subr.mxu0 0.0
        %3889 = vmatpush1.msra.mxu0 0.0
        %3890 = vmatprep.subr.mxu0 0.0
        %3891 = vmatpush1.msra.mxu0 0.0
        %3892 = vmatprep.subr.mxu0 0.0
        %3893 = vmatpush1.msra.mxu0 0.0
        %3894 = vmatprep.subr.mxu0 0.0
        %3895 = vmatpush1.msra.mxu0 0.0
        %3896 = vmatprep.subr.mxu0 0.0
        %3897 = vmatpush1.msra.mxu0 0.0
        %3898 = vmatprep.subr.mxu0 0.0
        %3899 = vmatpush1.msra.mxu0 0.0
        %3900 = vmatprep.mubr.f32.mxu0 0.0
        %3901 = vmatmul.mubr.f32.gmra.mrb[0].mxu0 %v3804
        %v3902 = vpop.f32.mrb[0].mxu0
        %v3903 = vadd.f32 0.0, %v3902
        %v3904 = vpop.f32.mrb[0].mxu0
        %3905 = vmatprep.mubr.f32.mxu0 0.0
        %3906 = vmatmul.mubr.f32.gmra.mrb[0].mxu0 %v3805
        %v3907 = vpop.f32.mrb[0].mxu0
        %v3908 = vadd.f32 0.0, %v3907
        %v3909 = vpop.f32.mrb[0].mxu0
        %3910 = vmatprep.mubr.f32.mxu0 0.0
        %3911 = vmatmul.mubr.f32.gmra.mrb[0].mxu0 %v3806
        %v3912 = vpop.f32.mrb[0].mxu0
        %v3913 = vadd.f32 0.0, %v3912
        %v3914 = vpop.f32.mrb[0].mxu0
        %3915 = vmatprep.mubr.f32.mxu0 0.0
        %3916 = vmatmul.mubr.f32.gmra.mrb[0].mxu0 %v3807
        %v3917 = vpop.f32.mrb[0].mxu0
        %v3918 = vadd.f32 0.0, %v3917
        %v3919 = vpop.f32.mrb[0].mxu0
        %3920 = vmatprep.mubr.f32.mxu0 0.0
        %3921 = vmatmul.mubr.f32.gmra.mrb[0].mxu0 %v3808
        %v3922 = vpop.f32.mrb[0].mxu0
        %v3923 = vadd.f32 0.0, %v3922
        %v3924 = vpop.f32.mrb[0].mxu0
        %3925 = vmatprep.mubr.f32.mxu0 0.0
        %3926 = vmatmul.mubr.f32.gmra.mrb[0].mxu0 %v3809
        %v3927 = vpop.f32.mrb[0].mxu0
        %v3928 = vadd.f32 0.0, %v3927
        %v3929 = vpop.f32.mrb[0].mxu0
        %3930 = vmatprep.mubr.f32.mxu0 0.0
        %3931 = vmatmul.mubr.f32.gmra.mrb[0].mxu0 %v3810
        %v3932 = vpop.f32.mrb[0].mxu0
        %v3933 = vadd.f32 0.0, %v3932
        %v3934 = vpop.f32.mrb[0].mxu0
        %3935 = vmatprep.mubr.f32.mxu0 0.0
        %3936 = vmatmul.mubr.f32.gmra.mrb[0].mxu0 %v3811
        %v3937 = vpop.f32.mrb[0].mxu0
        %v3938 = vadd.f32 0.0, %v3937
        %v3939 = vpop.f32.mrb[0].mxu0
        %3940 = vmatprep.mubr.f32.mxu0 0.0
        %3941 = vmatmul.mubr.f32.gmra.mrb[0].mxu0 %v3812
        %v3942 = vpop.f32.mrb[0].mxu0
        %v3943 = vadd.f32 0.0, %v3942
        %v3944 = vpop.f32.mrb[0].mxu0
        %3945 = vmatprep.mubr.f32.mxu0 0.0
        %3946 = vmatmul.mubr.f32.gmra.mrb[0].mxu0 %v3813
        %v3947 = vpop.f32.mrb[0].mxu0
        %v3948 = vadd.f32 0.0, %v3947
        %v3949 = vpop.f32.mrb[0].mxu0
        %3950 = vmatprep.mubr.f32.mxu0 0.0
        %3951 = vmatmul.mubr.f32.gmra.mrb[0].mxu0 %v3814
        %v3952 = vpop.f32.mrb[0].mxu0
        %v3953 = vadd.f32 0.0, %v3952
        %v3954 = vpop.f32.mrb[0].mxu0
        %3955 = vmatprep.mubr.f32.mxu0 0.0
        %3956 = vmatmul.mubr.f32.gmra.mrb[0].mxu0 %v3815
        %v3957 = vpop.f32.mrb[0].mxu0
        %v3958 = vadd.f32 0.0, %v3957
        %v3959 = vpop.f32.mrb[0].mxu0
        %3960 = vmatprep.mubr.f32.mxu0 0.0
        %3961 = vmatmul.mubr.f32.gmra.mrb[0].mxu0 %v3816
        %v3962 = vpop.f32.mrb[0].mxu0
        %v3963 = vadd.f32 0.0, %v3962
        %v3964 = vpop.f32.mrb[0].mxu0
        %3965 = vmatprep.mubr.f32.mxu0 0.0
        %3966 = vmatmul.mubr.f32.gmra.mrb[0].mxu0 %v3817
        %v3967 = vpop.f32.mrb[0].mxu0
        %v3968 = vadd.f32 0.0, %v3967
        %v3969 = vpop.f32.mrb[0].mxu0
        %3970 = vmatprep.mubr.f32.mxu0 0.0
        %3971 = vmatmul.mubr.f32.gmra.mrb[0].mxu0 %v3818
        %v3972 = vpop.f32.mrb[0].mxu0
        %v3973 = vadd.f32 0.0, %v3972
        %v3974 = vpop.f32.mrb[0].mxu0
        %3975 = vmatprep.mubr.f32.mxu0 0.0
        %3976 = vmatmul.mubr.f32.gmra.mrb[0].mxu0 %v3819
        %v3977 = vpop.f32.mrb[0].mxu0
        %v3978 = vadd.f32 0.0, %v3977
        %v3979 = vpop.f32.mrb[0].mxu0
        %3980 = vdwg.mxu0
        %v3981 = vadd.f32 %v451, %v3903
        %v3982 = vadd.f32 %v452, %v3908
        %v3983 = vadd.f32 %v453, %v3913
        %v3984 = vadd.f32 %v454, %v3918
        %v3985 = vadd.f32 %v455, %v3923
        %v3986 = vadd.f32 %v456, %v3928
        %v3987 = vadd.f32 %v457, %v3933
        %v3988 = vadd.f32 %v458, %v3938
        %v3989 = vadd.f32 %v459, %v3943
        %v3990 = vadd.f32 %v460, %v3948
        %v3991 = vadd.f32 %v461, %v3953
        %v3992 = vadd.f32 %v462, %v3958
        %v3993 = vadd.f32 %v463, %v3963
        %v3994 = vadd.f32 %v464, %v3968
        %v3995 = vadd.f32 %v465, %v3973
        %v3996 = vadd.f32 %v466, %v3978
        %3997 = vadd.xlane.f32.xlu0 %v3981
        %v3998 = vpop.xlane.xlu0 %3997
        %3999 = vadd.xlane.f32.xlu0 %v3982
        %v4000 = vpop.xlane.xlu0 %3999
        %4001 = vadd.xlane.f32.xlu0 %v3983
        %v4002 = vpop.xlane.xlu0 %4001
        %4003 = vadd.xlane.f32.xlu0 %v3984
        %v4004 = vpop.xlane.xlu0 %4003
        %4005 = vadd.xlane.f32.xlu0 %v3985
        %v4006 = vpop.xlane.xlu0 %4005
        %4007 = vadd.xlane.f32.xlu0 %v3986
        %v4008 = vpop.xlane.xlu0 %4007
        %4009 = vadd.xlane.f32.xlu0 %v3987
        %v4010 = vpop.xlane.xlu0 %4009
        %4011 = vadd.xlane.f32.xlu0 %v3988
        %v4012 = vpop.xlane.xlu0 %4011
        %4013 = vadd.xlane.f32.xlu0 %v3989
        %v4014 = vpop.xlane.xlu0 %4013
        %4015 = vadd.xlane.f32.xlu0 %v3990
        %v4016 = vpop.xlane.xlu0 %4015
        %4017 = vadd.xlane.f32.xlu0 %v3991
        %v4018 = vpop.xlane.xlu0 %4017
        %4019 = vadd.xlane.f32.xlu0 %v3992
        %v4020 = vpop.xlane.xlu0 %4019
        %4021 = vadd.xlane.f32.xlu0 %v3993
        %v4022 = vpop.xlane.xlu0 %4021
        %4023 = vadd.xlane.f32.xlu0 %v3994
        %v4024 = vpop.xlane.xlu0 %4023
        %4025 = vadd.xlane.f32.xlu0 %v3995
        %v4026 = vpop.xlane.xlu0 %4025
        %4027 = vadd.xlane.f32.xlu0 %v3996
        %v4028 = vpop.xlane.xlu0 %4027
        %v4029 = vrcp.pop 128.0
        %v4030 = vmul.f32 %v3998, %v4029
        %v4031 = vmul.f32 %v4000, %v4029
        %v4032 = vmul.f32 %v4002, %v4029
        %v4033 = vmul.f32 %v4004, %v4029
        %v4034 = vmul.f32 %v4006, %v4029
        %v4035 = vmul.f32 %v4008, %v4029
        %v4036 = vmul.f32 %v4010, %v4029
        %v4037 = vmul.f32 %v4012, %v4029
        %v4038 = vmul.f32 %v4014, %v4029
        %v4039 = vmul.f32 %v4016, %v4029
        %v4040 = vmul.f32 %v4018, %v4029
        %v4041 = vmul.f32 %v4020, %v4029
        %v4042 = vmul.f32 %v4022, %v4029
        %v4043 = vmul.f32 %v4024, %v4029
        %v4044 = vmul.f32 %v4026, %v4029
        %v4045 = vmul.f32 %v4028, %v4029
        %v4046 = vsub.f32 %v3981, %v4030
        %v4047 = vsub.f32 %v3982, %v4031
        %v4048 = vsub.f32 %v3983, %v4032
        %v4049 = vsub.f32 %v3984, %v4033
        %v4050 = vsub.f32 %v3985, %v4034
        %v4051 = vsub.f32 %v3986, %v4035
        %v4052 = vsub.f32 %v3987, %v4036
        %v4053 = vsub.f32 %v3988, %v4037
        %v4054 = vsub.f32 %v3989, %v4038
        %v4055 = vsub.f32 %v3990, %v4039
        %v4056 = vsub.f32 %v3991, %v4040
        %v4057 = vsub.f32 %v3992, %v4041
        %v4058 = vsub.f32 %v3993, %v4042
        %v4059 = vsub.f32 %v3994, %v4043
        %v4060 = vsub.f32 %v3995, %v4044
        %v4061 = vsub.f32 %v3996, %v4045
        %v4062 = vmul.f32 %v4046, %v4046
        %v4063 = vmul.f32 %v4047, %v4047
        %v4064 = vmul.f32 %v4048, %v4048
        %v4065 = vmul.f32 %v4049, %v4049
        %v4066 = vmul.f32 %v4050, %v4050
        %v4067 = vmul.f32 %v4051, %v4051
        %v4068 = vmul.f32 %v4052, %v4052
        %v4069 = vmul.f32 %v4053, %v4053
        %v4070 = vmul.f32 %v4054, %v4054
        %v4071 = vmul.f32 %v4055, %v4055
        %v4072 = vmul.f32 %v4056, %v4056
        %v4073 = vmul.f32 %v4057, %v4057
        %v4074 = vmul.f32 %v4058, %v4058
        %v4075 = vmul.f32 %v4059, %v4059
        %v4076 = vmul.f32 %v4060, %v4060
        %v4077 = vmul.f32 %v4061, %v4061
        %4078 = vadd.xlane.f32.xlu0 %v4062
        %v4079 = vpop.xlane.xlu0 %4078
        %4080 = vadd.xlane.f32.xlu0 %v4063
        %v4081 = vpop.xlane.xlu0 %4080
        %4082 = vadd.xlane.f32.xlu0 %v4064
        %v4083 = vpop.xlane.xlu0 %4082
        %4084 = vadd.xlane.f32.xlu0 %v4065
        %v4085 = vpop.xlane.xlu0 %4084
        %4086 = vadd.xlane.f32.xlu0 %v4066
        %v4087 = vpop.xlane.xlu0 %4086
        %4088 = vadd.xlane.f32.xlu0 %v4067
        %v4089 = vpop.xlane.xlu0 %4088
        %4090 = vadd.xlane.f32.xlu0 %v4068
        %v4091 = vpop.xlane.xlu0 %4090
        %4092 = vadd.xlane.f32.xlu0 %v4069
        %v4093 = vpop.xlane.xlu0 %4092
        %4094 = vadd.xlane.f32.xlu0 %v4070
        %v4095 = vpop.xlane.xlu0 %4094
        %4096 = vadd.xlane.f32.xlu0 %v4071
        %v4097 = vpop.xlane.xlu0 %4096
        %4098 = vadd.xlane.f32.xlu0 %v4072
        %v4099 = vpop.xlane.xlu0 %4098
        %4100 = vadd.xlane.f32.xlu0 %v4073
        %v4101 = vpop.xlane.xlu0 %4100
        %4102 = vadd.xlane.f32.xlu0 %v4074
        %v4103 = vpop.xlane.xlu0 %4102
        %4104 = vadd.xlane.f32.xlu0 %v4075
        %v4105 = vpop.xlane.xlu0 %4104
        %4106 = vadd.xlane.f32.xlu0 %v4076
        %v4107 = vpop.xlane.xlu0 %4106
        %4108 = vadd.xlane.f32.xlu0 %v4077
        %v4109 = vpop.xlane.xlu0 %4108
        %v4110 = vmul.f32 %v4079, %v4029
        %v4111 = vmul.f32 %v4081, %v4029
        %v4112 = vmul.f32 %v4083, %v4029
        %v4113 = vmul.f32 %v4085, %v4029
        %v4114 = vmul.f32 %v4087, %v4029
        %v4115 = vmul.f32 %v4089, %v4029
        %v4116 = vmul.f32 %v4091, %v4029
        %v4117 = vmul.f32 %v4093, %v4029
        %v4118 = vmul.f32 %v4095, %v4029
        %v4119 = vmul.f32 %v4097, %v4029
        %v4120 = vmul.f32 %v4099, %v4029
        %v4121 = vmul.f32 %v4101, %v4029
        %v4122 = vmul.f32 %v4103, %v4029
        %v4123 = vmul.f32 %v4105, %v4029
        %v4124 = vmul.f32 %v4107, %v4029
        %v4125 = vmul.f32 %v4109, %v4029
        %v4126 = vadd.f32 %v4110, 1e-05
        %v4127 = vadd.f32 %v4111, 1e-05
        %v4128 = vadd.f32 %v4112, 1e-05
        %v4129 = vadd.f32 %v4113, 1e-05
        %v4130 = vadd.f32 %v4114, 1e-05
        %v4131 = vadd.f32 %v4115, 1e-05
        %v4132 = vadd.f32 %v4116, 1e-05
        %v4133 = vadd.f32 %v4117, 1e-05
        %v4134 = vadd.f32 %v4118, 1e-05
        %v4135 = vadd.f32 %v4119, 1e-05
        %v4136 = vadd.f32 %v4120, 1e-05
        %v4137 = vadd.f32 %v4121, 1e-05
        %v4138 = vadd.f32 %v4122, 1e-05
        %v4139 = vadd.f32 %v4123, 1e-05
        %v4140 = vadd.f32 %v4124, 1e-05
        %v4141 = vadd.f32 %v4125, 1e-05
        %v4142 = vrsqrt.pop %v4126
        %v4143 = vrsqrt.pop %v4127
        %v4144 = vrsqrt.pop %v4128
        %v4145 = vrsqrt.pop %v4129
        %v4146 = vrsqrt.pop %v4130
        %v4147 = vrsqrt.pop %v4131
        %v4148 = vrsqrt.pop %v4132
        %v4149 = vrsqrt.pop %v4133
        %v4150 = vrsqrt.pop %v4134
        %v4151 = vrsqrt.pop %v4135
        %v4152 = vrsqrt.pop %v4136
        %v4153 = vrsqrt.pop %v4137
        %v4154 = vrsqrt.pop %v4138
        %v4155 = vrsqrt.pop %v4139
        %v4156 = vrsqrt.pop %v4140
        %v4157 = vrsqrt.pop %v4141
        %v4158 = vmul.f32 %v4046, %v4142
        %v4159 = vmul.f32 %v4047, %v4143
        %v4160 = vmul.f32 %v4048, %v4144
        %v4161 = vmul.f32 %v4049, %v4145
        %v4162 = vmul.f32 %v4050, %v4146
        %v4163 = vmul.f32 %v4051, %v4147
        %v4164 = vmul.f32 %v4052, %v4148
        %v4165 = vmul.f32 %v4053, %v4149
        %v4166 = vmul.f32 %v4054, %v4150
        %v4167 = vmul.f32 %v4055, %v4151
        %v4168 = vmul.f32 %v4056, %v4152
        %v4169 = vmul.f32 %v4057, %v4153
        %v4170 = vmul.f32 %v4058, %v4154
        %v4171 = vmul.f32 %v4059, %v4155
        %v4172 = vmul.f32 %v4060, %v4156
        %v4173 = vmul.f32 %v4061, %v4157
        %v4174 = vld [vmem:[%s8] sm:$0x1]
        %v4176 = vlaneseq
        %v4177 = vshrl.u32 %v4176, 7
        %v4178 = vsub.s32 0, %v4177
        %v4179 = vrot.slane %v4174, %v4178
        %v4181 = vmul.f32 %v4158, %v4179
        %v4182 = vmul.f32 %v4159, %v4179
        %v4183 = vmul.f32 %v4160, %v4179
        %v4184 = vmul.f32 %v4161, %v4179
        %v4185 = vmul.f32 %v4162, %v4179
        %v4186 = vmul.f32 %v4163, %v4179
        %v4187 = vmul.f32 %v4164, %v4179
        %v4188 = vmul.f32 %v4165, %v4179
        %v4189 = vmul.f32 %v4166, %v4179
        %v4190 = vmul.f32 %v4167, %v4179
        %v4191 = vmul.f32 %v4168, %v4179
        %v4192 = vmul.f32 %v4169, %v4179
        %v4193 = vmul.f32 %v4170, %v4179
        %v4194 = vmul.f32 %v4171, %v4179
        %v4195 = vmul.f32 %v4172, %v4179
        %v4196 = vmul.f32 %v4173, %v4179
        %v4197 = vld [vmem:[%s9] sm:$0x1]
        %v4199 = vlaneseq
        %v4200 = vshrl.u32 %v4199, 7
        %v4201 = vsub.s32 0, %v4200
        %v4202 = vrot.slane %v4197, %v4201
        %v4204 = vadd.f32 %v4181, %v4202
        %v4205 = vadd.f32 %v4182, %v4202
        %v4206 = vadd.f32 %v4183, %v4202
        %v4207 = vadd.f32 %v4184, %v4202
        %v4208 = vadd.f32 %v4185, %v4202
        %v4209 = vadd.f32 %v4186, %v4202
        %v4210 = vadd.f32 %v4187, %v4202
        %v4211 = vadd.f32 %v4188, %v4202
        %v4212 = vadd.f32 %v4189, %v4202
        %v4213 = vadd.f32 %v4190, %v4202
        %v4214 = vadd.f32 %v4191, %v4202
        %v4215 = vadd.f32 %v4192, %v4202
        %v4216 = vadd.f32 %v4193, %v4202
        %v4217 = vadd.f32 %v4194, %v4202
        %v4218 = vadd.f32 %v4195, %v4202
        %v4219 = vadd.f32 %v4196, %v4202
        %4220 = vst [vmem:[%s450] sm:$0xff] %v4204
        %4221 = vst [vmem:[%s450 + $0x8] sm:$0xff] %v4205
        %4222 = vst [vmem:[%s450 + $0x10] sm:$0xff] %v4206
        %4223 = vst [vmem:[%s450 + $0x18] sm:$0xff] %v4207
        %4224 = vst [vmem:[%s450 + $0x20] sm:$0xff] %v4208
        %4225 = vst [vmem:[%s450 + $0x28] sm:$0xff] %v4209
        %4226 = vst [vmem:[%s450 + $0x30] sm:$0xff] %v4210
        %4227 = vst [vmem:[%s450 + $0x38] sm:$0xff] %v4211
        %4228 = vst [vmem:[%s450 + $0x40] sm:$0xff] %v4212
        %4229 = vst [vmem:[%s450 + $0x48] sm:$0xff] %v4213
        %4230 = vst [vmem:[%s450 + $0x50] sm:$0xff] %v4214
        %4231 = vst [vmem:[%s450 + $0x58] sm:$0xff] %v4215
        %4232 = vst [vmem:[%s450 + $0x60] sm:$0xff] %v4216
        %4233 = vst [vmem:[%s450 + $0x68] sm:$0xff] %v4217
        %4234 = vst [vmem:[%s450 + $0x70] sm:$0xff] %v4218
        %4235 = vst [vmem:[%s450 + $0x78] sm:$0xff] %v4219
        %s4236 = sand.u32 %s253, 1
        %s4237 = scalar_lea.sflag [#allocation4], %s4236
        %s4238 = sand.u32 %s253, 1
        %s4239 = smul.addr %s4238, 128
        %s4240 = scalar_lea.vmem [#allocation13], %s4239
        // Predicated region
        $region85: #{tpu_custom_call.1} parent=59 // pred_check
          %p4241 = pneg %p263
        $region86: #{tpu_custom_call.1} parent=59 // pred_check_branch
          %4243 = sbr.rel (%p4241) target = $region88
        $region87: #{tpu_custom_call.1} parent=59 // pred_region
          %s4245 = ssub.s32 2048, 2048
          %4246 = vsyncadd %s4237, %s4245
          %s4247 = smul.addr %s30, 16
          %s4248 = smul.addr %s4247, 128
          %s4249 = scalar_lea.hbm %s10, %s4248
          %s4250 = sshll.u32 %s4240, 4
          %s4251 = int_to_ptr.vmem [resolvable:$true] %s4250
          %4256 = dma.vmem_to_hbm [thread:$0]  %s4251, 2048, %s4249, %s4237, 128, 128, 8
        $region88: #{tpu_custom_call.1} parent=59 // pred_fallthru
          _
      $region60: #{tpu_custom_call.1} parent=5 // pred_fallthru
        _
      %p4257 = scmp.le.s32.totalorder 2, %s25
      // Predicated region
      $region89: #{tpu_custom_call.1} parent=5 // pred_check
        %p4258 = pneg %p4257
      $region90: #{tpu_custom_call.1} parent=5 // pred_check_branch
        %4260 = sbr.rel (%p4258) target = $region92
      $region91: #{tpu_custom_call.1} parent=5 // pred_region
        %s4261 = ssub.s32 %s25, 2
        // Predicated region
        $region93: #{tpu_custom_call.1} parent=91 // pred_check
          %p4262 = pneg %p269
        $region94: #{tpu_custom_call.1} parent=91 // pred_check_branch
          %4264 = sbr.rel (%p4262) target = $region96
        $region95: #{tpu_custom_call.1} parent=91 // pred_region
          %s4265 = sand.u32 %s254, 1
          %s4266 = scalar_lea.sflag [#allocation4], %s4265
          %s4267 = sand.u32 %s254, 1
          %s4268 = smul.addr %s4267, 128
          %s4269 = scalar_lea.vmem [#allocation13], %s4268
          %4270 = dma.done %s4266, 2048
        $region96: #{tpu_custom_call.1} parent=91 // pred_fallthru
          _
      $region92: #{tpu_custom_call.1} parent=5 // pred_fallthru
        _
    $region6: #{tpu_custom_call.1} parent=1 // loop_footer
      %s29 = sadd.s32 1, %s25
    $region7: #{tpu_custom_call.1} parent=1 // loop_footer_branch
      %24 = sbr.rel target = $region3
    $region8: #{tpu_custom_call.1} parent=1 // loop_exit
      _
    %4271 = vsyncpa [#allocation3], 1
    %s4272 = scalar_lea.sflag [#allocation3], 1
    %4273 = vsyncpa %s4272, 1
    %4274 = vsyncpa [#allocation6], 1
    %4275 = vsyncpa [#allocation9], 1
    %4276 = vsyncpa [#allocation12], 1
    %4277 = vsyncpa [#allocation4], 1
    %s4278 = scalar_lea.sflag [#allocation4], 1
    %4279 = vsyncpa %s4278, 1

</llo_original>
